<compile_context>
chip_gen: v7x
topology: tpu7x:2x2x1
jax: 0.10.0
libtpu: 0.0.40
codegen_flags: <defaults>
</compile_context>

<pallas_src>
import functools

import jax
import jax.numpy as jnp
from jax import lax
from jax.experimental import pallas as pl
from jax.experimental.pallas import tpu as pltpu


# ----------------------------------------------------------------------------
# Small helpers
# ----------------------------------------------------------------------------

@functools.lru_cache(maxsize=None)
def _vmem_limit_bytes():
    """~80% of per-core physical VMEM (v5e/v6e: 128 MiB, v7x: 64 MiB)."""
    try:
        info = pltpu.get_tpu_info()
        for attr in ("vmem_capacity_bytes", "vmem_size_bytes", "vmem_bytes"):
            cap = getattr(info, attr, None)
            if cap:
                return int(int(cap) * 0.8)
    except Exception:
        pass
    return None  # fall back to the compiler's default scoped-VMEM limit


def _compiler_params(dim_sem):
    vl = _vmem_limit_bytes()
    if vl is None:
        return pltpu.CompilerParams(dimension_semantics=dim_sem)
    return pltpu.CompilerParams(dimension_semantics=dim_sem, vmem_limit_bytes=vl)


def _pick_tile(n, target, quantum):
    """Largest tile <= target dividing n, multiple of `quantum` (else full n)."""
    if n <= target:
        return n
    t = (target // quantum) * quantum
    while t >= quantum:
        if n % t == 0:
            return t
        t -= quantum
    return n


def _pick_row_tile(h, w, min_m=512):
    """Smallest even divisor tH of h with tH*w >= min_m (else full h)."""
    t = 2
    while t < h:
        if h % t == 0 and t * w >= min_m:
            return t
        t += 2
    return h


# ----------------------------------------------------------------------------
# Generic 3x3 conv kernel (SAME, stride 1) with fused bias / ReLU / residual add
# ----------------------------------------------------------------------------

def _conv3x3_kernel(*refs, tH, W, relu, has_res):
    if has_res:
        x_ref, halo_ref, w_ref, b_ref, res_ref, o_ref = refs
    else:
        x_ref, halo_ref, w_ref, b_ref, o_ref = refs
        res_ref = None

    # Halo'd window assembled in registers (no scratch write/readback).
    xw = jnp.concatenate([x_ref[0], halo_ref[0]], axis=0)   # (tH+2, W+2, Cin) bf16
    cin = xw.shape[-1]
    cols = [xw[:, kw:kw + W, :] for kw in range(3)]          # 3 lane-shifted views

    acc = None                                               # local f32 accumulator
    for kw in range(3):
        col = cols[kw]
        for kh in range(3):
            lhs = col[kh:kh + tH].reshape(tH * W, cin)       # bf16
            contrib = jnp.dot(lhs, w_ref[kh, kw],
                              preferred_element_type=jnp.float32)
            acc = contrib if acc is None else acc + contrib

    y = acc.reshape(tH, W, -1) + b_ref[...]                  # + bias (f32)
    if relu:
        y = jnp.maximum(y, 0.0)
    if has_res:
        y = y + res_ref[0].astype(jnp.float32)               # fused residual add
    o_ref[0] = y.astype(o_ref.dtype)


def conv3x3(x, w, b, *, relu=False, residual=None):
    """SAME, stride-1 3x3 conv (+bias [+ReLU] [+fused residual add]) on NHWC.

    x: (N,H,W,Cin) bf16; w: (3,3,Cin,Cout) bf16; b: (Cout,) f32;
    residual: optional (N,H,W,Cout) bf16 added (in f32) in the epilogue.
    Returns bf16 NHWC.
    """
    N, H, W, Cin = x.shape
    Cout = w.shape[-1]
    assert H % 2 == 0, "row-halo tiling assumes an even height"
    x_p = jnp.pad(x, ((0, 0), (1, 1), (1, 1), (0, 0)))
    Wp = W + 2
    tH = _pick_row_tile(H, W)
    tCo = _pick_tile(Cout, 256, 128)
    has_res = residual is not None

    in_specs = [
        # main rows of the padded input for this row tile (j-independent ->
        # stays resident in VMEM across all Cout tiles)
        pl.BlockSpec((1, tH, Wp, Cin), lambda n, i, j: (n, i, 0, 0)),
        # the 2 halo rows just below the tile (same padded array, second view)
        pl.BlockSpec((1, 2, Wp, Cin),
                     lambda n, i, j: (n, (i + 1) * (tH // 2), 0, 0)),
        pl.BlockSpec((3, 3, Cin, tCo), lambda n, i, j: (0, 0, 0, j)),
        pl.BlockSpec((1, tCo), lambda n, i, j: (0, j)),
    ]
    inputs = [x_p, x_p, w, b.reshape(1, Cout)]
    if has_res:
        in_specs.append(pl.BlockSpec((1, tH, W, tCo),
                                     lambda n, i, j: (n, i, 0, j)))
        inputs.append(residual)

    kern = functools.partial(_conv3x3_kernel, tH=tH, W=W, relu=relu,
                             has_res=has_res)
    return pl.pallas_call(
        kern,
        out_shape=jax.ShapeDtypeStruct((N, H, W, Cout), jnp.bfloat16),
        grid=(N, H // tH, Cout // tCo),
        in_specs=in_specs,
        out_specs=pl.BlockSpec((1, tH, W, tCo), lambda n, i, j: (n, i, 0, j)),
        compiler_params=_compiler_params(("parallel", "parallel", "arbitrary")),
    )(*inputs)


# ----------------------------------------------------------------------------
# Fused upsample stage:
#   InterpolateConvUpSample(x) + ChannelDuplicatingPixelUnshuffleUpSample(x)
# expressed as four phase-wise 2x2 convs over the low-res input; the shortcut
# is applied exactly via 0/1 selection matmuls on the centre patch.
# ----------------------------------------------------------------------------

def fuse_upsample_weights(w):
    """w: (3,3,Cin,Cout) f32 weight of the nearest-x2-upsample 3x3 conv.

    Returns (16, Cin, Cout) bf16 effective 2x2-tap weights indexed by
    ((p*2+q)*2+ih)*2+iw, where (p,q) is the output-pixel phase and (ih,iw) the
    effective tap on the (1-zero-padded) low-res input. Conv taps only; the
    channel-duplicating shortcut is kept separate (see shortcut_selection).
    """
    cin, cout = int(w.shape[2]), int(w.shape[3])
    tap_sets = (((0,), (1, 2)), ((0, 1), (2,)))    # [phase][eff-tap] -> 3x3 taps
    blocks = []
    for p in range(2):
        for q in range(2):
            for ih in range(2):
                for iw in range(2):
                    we = jnp.zeros((cin, cout), jnp.float32)
                    for kh in tap_sets[p][ih]:
                        for kw in tap_sets[q][iw]:
                            we = we + w[kh, kw]
                    blocks.append(we)
    return jnp.stack(blocks).astype(jnp.bfloat16)


def shortcut_selection(cin, cout):
    """(4, Cin, Cout) bf16 0/1 selection matrices for the channel-duplicating
    pixel-unshuffle shortcut: S[2p+q, ci, co] = [ci == (4*co+2p+q)//repeats].
    Exact in bf16 (entries are 0/1); applied with f32 accumulation."""
    assert (cout * 4) % cin == 0, "shortcut requires cin | cout*factor^2"
    r = cout * 4 // cin
    ci = jnp.arange(cin)[:, None]
    co = jnp.arange(cout)[None, :]
    mats = []
    for p in range(2):
        for q in range(2):
            src = (4 * co + 2 * p + q) // r
            mats.append((src == ci).astype(jnp.float32))
    return jnp.stack(mats).astype(jnp.bfloat16)


def _upconv_kernel(x_ref, halo_ref, w_ref, s_ref, b_ref, o_ref, *, tH, W):
    xw = jnp.concatenate([x_ref[0], halo_ref[0]], axis=0)    # (tH+2, W+2, Cin) bf16
    cin = xw.shape[-1]
    cols = [xw[:, dc:dc + W, :] for dc in range(3)]           # 3 lane-shifted views

    accs = [None, None, None, None]                           # local f32 per phase
    lhs_center = None
    for dc in range(3):
        for dr in range(3):
            lhs = cols[dc][dr:dr + tH].reshape(tH * W, cin)   # bf16
            if dr == 1 and dc == 1:
                lhs_center = lhs
            for p in range(2):
                ih = dr - p
                if ih not in (0, 1):
                    continue
                for q in range(2):
                    iw = dc - q
                    if iw not in (0, 1):
                        continue
                    widx = ((p * 2 + q) * 2 + ih) * 2 + iw
                    c = jnp.dot(lhs, w_ref[widx],
                                preferred_element_type=jnp.float32)
                    k = 2 * p + q
                    accs[k] = c if accs[k] is None else accs[k] + c

    bias = b_ref[...]                                         # (1, tCo) f32
    for p in range(2):
        for q in range(2):
            k = 2 * p + q
            # Exact channel-dup pixel-unshuffle shortcut: 0/1 selection matmul
            # over the already-resident centre patch (f32 accumulate).
            y = accs[k] + jnp.dot(lhs_center, s_ref[k],
                                  preferred_element_type=jnp.float32)
            y = (y + bias).reshape(tH, W, -1)
            o_ref[0, :, p, :, q, :] = y.astype(o_ref.dtype)


def upsample_block(x, weff, ssel, b):
    """Fused {nearest-x2 -> 3x3 conv + bias} + channel-dup pixel-unshuffle
    shortcut, computed entirely from the low-res input (the upsampled tensor
    never touches HBM).  x bf16 NHWC -> bf16 NHWC at 2x resolution."""
    N, Hlo, Wlo, Cin = x.shape
    Cout = weff.shape[-1]
    assert Hlo % 2 == 0, "row-halo tiling assumes an even height"
    x_p = jnp.pad(x, ((0, 0), (1, 1), (1, 1), (0, 0)))
    Wp = Wlo + 2
    tH = _pick_row_tile(Hlo, Wlo)
    tCo = _pick_tile(Cout, 256, 128)
    kern = functools.partial(_upconv_kernel, tH=tH, W=Wlo)
    out = pl.pallas_call(
        kern,
        out_shape=jax.ShapeDtypeStruct((N, Hlo, 2, Wlo, 2, Cout), jnp.bfloat16),
        grid=(N, Hlo // tH, Cout // tCo),
        in_specs=[
            pl.BlockSpec((1, tH, Wp, Cin), lambda n, i, j: (n, i, 0, 0)),
            pl.BlockSpec((1, 2, Wp, Cin),
                         lambda n, i, j: (n, (i + 1) * (tH // 2), 0, 0)),
            pl.BlockSpec((16, Cin, tCo), lambda n, i, j: (0, 0, j)),
            pl.BlockSpec((4, Cin, tCo), lambda n, i, j: (0, 0, j)),
            pl.BlockSpec((1, tCo), lambda n, i, j: (0, j)),
        ],
        out_specs=pl.BlockSpec((1, tH, 2, Wlo, 2, tCo),
                               lambda n, i, j: (n, i, 0, 0, 0, j)),
        compiler_params=_compiler_params(("parallel", "parallel", "arbitrary")),
    )(x_p, x_p, weff, ssel, b.reshape(1, Cout))
    # (N,Hlo,2,Wlo,2,Cout) -> (N,2Hlo,2Wlo,Cout) is a contiguous row-major
    # reinterpretation (free), no transpose.
    return out.reshape(N, 2 * Hlo, 2 * Wlo, Cout)


# ----------------------------------------------------------------------------
# Final 1x1 projection, emitting NCHW with a lane-dense H*W minor axis
# ----------------------------------------------------------------------------

def _proj_kernel(x_ref, w_ref, b_ref, o_ref):
    x = x_ref[0]                                              # (tS, Cin) bf16
    # (Cout, Cin) . (tS, Cin)^T -> (Cout, tS): lane-dense output.
    y = lax.dot_general(w_ref[...], x, (((1,), (1,)), ((), ())),
                        preferred_element_type=jnp.float32)
    o_ref[0] = (y + b_ref[...]).astype(o_ref.dtype)


def project_nchw(x, wt, b):
    """1x1 conv + bias; x bf16 NHWC, wt: (Cout, Cin) bf16; returns f32 NCHW."""
    N, H, W, Cin = x.shape
    Cout = wt.shape[0]
    S = H * W
    xs = x.reshape(N, S, Cin)
    tS = _pick_tile(S, 2048, 128)
    y = pl.pallas_call(
        _proj_kernel,
        out_shape=jax.ShapeDtypeStruct((N, Cout, S), jnp.float32),
        grid=(N, S // tS),
        in_specs=[pl.BlockSpec((1, tS, Cin), lambda n, s: (n, s, 0)),
                  pl.BlockSpec((Cout, Cin), lambda n, s: (0, 0)),
                  pl.BlockSpec((Cout, 1), lambda n, s: (0, 0))],
        out_specs=pl.BlockSpec((1, Cout, tS), lambda n, s: (n, 0, s)),
        compiler_params=_compiler_params(("parallel", "parallel")),
    )(xs, wt, b.reshape(Cout, 1))
    return y.reshape(N, Cout, H, W)


# ----------------------------------------------------------------------------
# Decoder forward (Pallas) and parameter handling
# ----------------------------------------------------------------------------

def decoder_forward(x_nchw, params):
    x = jnp.transpose(x_nchw, (0, 2, 3, 1)).astype(jnp.bfloat16)   # NCHW -> NHWC
    for st in params["stages"]:
        # BuildResidual(main=InterpolateConvUpSample, shortcut=ChannelDup...UpSample)
        x = upsample_block(x, st["up_weff"], st["up_sel"], st["up_b"])
        for blk in st["blocks"]:
            h = conv3x3(x, blk["w1"], blk["b1"], relu=True)
            x = conv3x3(h, blk["w2"], blk["b2"], residual=x)  # fused residual add
    # self.projet: 1x1 conv + bias, no norm/act -> NCHW directly (f32)
    return project_nchw(x, params["proj_wt"], params["proj_b"])


def init_raw_params(latent_dim, out_channels, depths, dims, seed=0):
    keys = iter(jax.random.split(jax.random.PRNGKey(seed), 1024))

    def nrm(shape, scale=0.05):
        return (scale * jax.random.normal(next(keys), shape)).astype(jnp.float32)

    stages = []
    in_c = latent_dim
    for stage, repeats in enumerate(depths):
        out_c = dims[stage]
        st = {"up_w": nrm((3, 3, in_c, out_c)), "up_b": nrm((out_c,)), "blocks": []}
        for _ in range(repeats):
            st["blocks"].append({"w1": nrm((3, 3, out_c, out_c)),
                                 "b1": nrm((out_c,)),
                                 "w2": nrm((3, 3, out_c, out_c)),
                                 "b2": nrm((out_c,))})
        stages.append(st)
        in_c = out_c
    return {"stages": stages,
            "proj_w": nrm((dims[-1], out_channels)),
            "proj_b": nrm((out_channels,))}


def prepare_params(raw):
    """Convert torch-style f32 weights into the fused / bf16 kernel layout."""
    stages = []
    for st in raw["stages"]:
        cin, cout = int(st["up_w"].shape[2]), int(st["up_w"].shape[3])
        ps = {"up_weff": fuse_upsample_weights(st["up_w"]),
              "up_sel": shortcut_selection(cin, cout),
              "up_b": st["up_b"],
              "blocks": [{"w1": b["w1"].astype(jnp.bfloat16), "b1": b["b1"],
                          "w2": b["w2"].astype(jnp.bfloat16), "b2": b["b2"]}
                         for b in st["blocks"]]}
        stages.append(ps)
    return {"stages": stages,
            "proj_wt": raw["proj_w"].T.astype(jnp.bfloat16),     # (Cout, Cin)
            "proj_b": raw["proj_b"]}


# ----------------------------------------------------------------------------
# Pure-JAX reference (for correctness checking only)
# ----------------------------------------------------------------------------

def _ref_conv3x3(x, w, b):
    y = lax.conv_general_dilated(x, w, (1, 1), "SAME",
                                 dimension_numbers=("NHWC", "HWIO", "NHWC"))
    return y + b[None, None, None, :]


def _ref_upsample_nearest(x):
    return jnp.repeat(jnp.repeat(x, 2, axis=1), 2, axis=2)


def _ref_channel_dup_shuffle(x, cout):
    n, h, w, cin = x.shape
    r = cout * 4 // cin
    xr = jnp.repeat(x, r, axis=-1)                            # repeat_interleave
    xr = xr.reshape(n, h, w, cout, 2, 2)                      # channel -> (c, i, j)
    xr = jnp.transpose(xr, (0, 1, 4, 2, 5, 3))                # (n, h, i, w, j, c)
    return xr.reshape(n, 2 * h, 2 * w, cout)


def decoder_reference(x_nchw, raw):
    x = jnp.transpose(x_nchw, (0, 2, 3, 1))
    for st in raw["stages"]:
        out_c = st["up_w"].shape[-1]
        main = _ref_conv3x3(_ref_upsample_nearest(x), st["up_w"], st["up_b"])
        x = main + _ref_channel_dup_shuffle(x, out_c)
        for blk in st["blocks"]:
            h = jnp.maximum(_ref_conv3x3(x, blk["w1"], blk["b1"]), 0.0)
            x = x + _ref_conv3x3(h, blk["w2"], blk["b2"])
    y = jnp.einsum("nhwi,io->nhwo", x, raw["proj_w"]) + raw["proj_b"]
    return jnp.transpose(y, (0, 3, 1, 2))


# ----------------------------------------------------------------------------
# Demo
# ----------------------------------------------------------------------------

if __name__ == "__main__":
    # Scaled-down config (reference defaults depths=[3,6,3,3], dims=[1024,...]
    # are too large for a demo). dims[1]=512 exercises Cout tiling (tCo=256,
    # two Cout tiles) and 2-way row tiling of conv3x3.
    latent_dim = 4
    out_channels = 3
    depths = [1, 1]
    dims = [16, 512]
    H = W = 8
    N = 2

    raw = init_raw_params(latent_dim, out_channels, depths, dims, seed=0)
    params = prepare_params(raw)
    x = jax.random.normal(jax.random.PRNGKey(0), (N, latent_dim, H, W),
                          dtype=jnp.float32)                   # NCHW, like PyTorch

    # --- per-stage check of the fused upsample (tap refold + exact shortcut) ---
    x_nhwc = jnp.transpose(x, (0, 2, 3, 1))
    st0, p0 = raw["stages"][0], params["stages"][0]
    up_ref = (_ref_conv3x3(_ref_upsample_nearest(x_nhwc), st0["up_w"], st0["up_b"])
              + _ref_channel_dup_shuffle(x_nhwc, dims[0]))
    up_ker = upsample_block(x_nhwc.astype(jnp.bfloat16), p0["up_weff"],
                            p0["up_sel"], p0["up_b"]).astype(jnp.float32)
    rel0 = float(jnp.linalg.norm(up_ker - up_ref) / jnp.linalg.norm(up_ref))
    assert rel0 < 2e-2, rel0

    # --- full forward ---
    y = jax.jit(decoder_forward)(x, params)
    jax.block_until_ready(y)

    scale = 2 ** len(depths)
    assert y.shape == (N, out_channels, H * scale, W * scale), y.shape
    assert y.dtype == jnp.float32

    # Correctness vs. a pure-JAX/XLA f32 reference of the same module (kernels
    # use bf16 weights/activations with f32 accumulation -> loose tolerances).
    y_ref = jax.jit(decoder_reference)(x, raw)
    err = float(jnp.max(jnp.abs(y - y_ref)))
    tol = 0.08 * float(jnp.max(jnp.abs(y_ref))) + 1e-2
    rel = float(jnp.linalg.norm(y - y_ref) / jnp.linalg.norm(y_ref))
    assert err <= tol, (err, tol)
    assert rel <= 4e-2, rel

    print("KERNEL_OK")
</pallas_src>

<mosaic_0001>
module attributes {stable_mosaic.version = 11 : i64} {
  func.func @_upconv_kernel(%arg0: i32, %arg1: i32, %arg2: i32, %arg3: memref<1x8x10x4xbf16, #tpu.memory_space<vmem>>, %arg4: memref<1x2x10x4xbf16, #tpu.memory_space<vmem>>, %arg5: memref<16x4x16xbf16, #tpu.memory_space<vmem>>, %arg6: memref<4x4x16xbf16, #tpu.memory_space<vmem>>, %arg7: memref<1x16xf32, #tpu.memory_space<vmem>>, %arg8: memref<1x8x2x8x2x16xbf16, #tpu.memory_space<vmem>>) attributes {dimension_semantics = [#tpu.dimension_semantics<parallel>, #tpu.dimension_semantics<parallel>, #tpu.dimension_semantics<arbitrary>], iteration_bounds = array<i64: 2, 1, 1>, scalar_prefetch = 0 : i64, scratch_operands = 0 : i64, tpu.core_type = #tpu.core_type<tc>, window_params = [{transform_indices = @transform_0, window_bounds = array<i64: 1, 8, 10, 4>}, {transform_indices = @transform_1, window_bounds = array<i64: 1, 2, 10, 4>}, {transform_indices = @transform_2, window_bounds = array<i64: 16, 4, 16>}, {transform_indices = @transform_3, window_bounds = array<i64: 4, 4, 16>}, {transform_indices = @transform_4, window_bounds = array<i64: 1, 16>}, {transform_indices = @transform_5, window_bounds = array<i64: 1, 8, 2, 8, 2, 16>}]} {
    %c0 = arith.constant 0 : index
    %c0_0 = arith.constant 0 : index
    %c0_1 = arith.constant 0 : index
    %c0_2 = arith.constant 0 : index
    %0 = vector.load %arg3[%c0, %c0_0, %c0_1, %c0_2] : memref<1x8x10x4xbf16, #tpu.memory_space<vmem>>, vector<1x8x10x4xbf16>
    %1 = vector.shape_cast %0 : vector<1x8x10x4xbf16> to vector<8x10x4xbf16>
    %c0_3 = arith.constant 0 : index
    %c0_4 = arith.constant 0 : index
    %c0_5 = arith.constant 0 : index
    %c0_6 = arith.constant 0 : index
    %2 = vector.load %arg4[%c0_3, %c0_4, %c0_5, %c0_6] : memref<1x2x10x4xbf16, #tpu.memory_space<vmem>>, vector<1x2x10x4xbf16>
    %3 = vector.shape_cast %2 : vector<1x2x10x4xbf16> to vector<2x10x4xbf16>
    %4 = tpu.concatenate %1, %3 in 0 : vector<8x10x4xbf16>, vector<2x10x4xbf16> -> vector<10x10x4xbf16>
    %5 = vector.extract_strided_slice %4 {offsets = [0, 0, 0], sizes = [10, 8, 4], strides = [1, 1, 1]} : vector<10x10x4xbf16> to vector<10x8x4xbf16>
    %6 = vector.extract_strided_slice %4 {offsets = [0, 1, 0], sizes = [10, 8, 4], strides = [1, 1, 1]} : vector<10x10x4xbf16> to vector<10x8x4xbf16>
    %7 = vector.extract_strided_slice %4 {offsets = [0, 2, 0], sizes = [10, 8, 4], strides = [1, 1, 1]} : vector<10x10x4xbf16> to vector<10x8x4xbf16>
    %8 = vector.extract_strided_slice %5 {offsets = [0, 0, 0], sizes = [8, 8, 4], strides = [1, 1, 1]} : vector<10x8x4xbf16> to vector<8x8x4xbf16>
    %9 = vector.shape_cast %8 : vector<8x8x4xbf16> to vector<64x4xbf16>
    %c0_7 = arith.constant 0 : index
    %c0_8 = arith.constant 0 : index
    %c0_9 = arith.constant 0 : index
    %10 = vector.load %arg5[%c0_7, %c0_8, %c0_9] : memref<16x4x16xbf16, #tpu.memory_space<vmem>>, vector<1x4x16xbf16>
    %11 = vector.shape_cast %10 : vector<1x4x16xbf16> to vector<4x16xbf16>
    %cst = arith.constant dense<0.000000e+00> : vector<64x16xf32>
    %12 = tpu.matmul %9, %11, %cst {dimension_numbers = #tpu.dot_dimension_numbers<[1], [0], [0], [1], [0, 0, 1, 1], [], []>} : vector<64x4xbf16>, vector<4x16xbf16>, vector<64x16xf32> -> vector<64x16xf32>
    %13 = vector.extract_strided_slice %5 {offsets = [1, 0, 0], sizes = [8, 8, 4], strides = [1, 1, 1]} : vector<10x8x4xbf16> to vector<8x8x4xbf16>
    %14 = vector.shape_cast %13 : vector<8x8x4xbf16> to vector<64x4xbf16>
    %c2 = arith.constant 2 : index
    %c0_10 = arith.constant 0 : index
    %c0_11 = arith.constant 0 : index
    %15 = vector.load %arg5[%c2, %c0_10, %c0_11] : memref<16x4x16xbf16, #tpu.memory_space<vmem>>, vector<1x4x16xbf16>
    %16 = vector.shape_cast %15 : vector<1x4x16xbf16> to vector<4x16xbf16>
    %cst_12 = arith.constant dense<0.000000e+00> : vector<64x16xf32>
    %17 = tpu.matmul %14, %16, %cst_12 {dimension_numbers = #tpu.dot_dimension_numbers<[1], [0], [0], [1], [0, 0, 1, 1], [], []>} : vector<64x4xbf16>, vector<4x16xbf16>, vector<64x16xf32> -> vector<64x16xf32>
    %18 = arith.addf %12, %17 : vector<64x16xf32>
    %c8 = arith.constant 8 : index
    %c0_13 = arith.constant 0 : index
    %c0_14 = arith.constant 0 : index
    %19 = vector.load %arg5[%c8, %c0_13, %c0_14] : memref<16x4x16xbf16, #tpu.memory_space<vmem>>, vector<1x4x16xbf16>
    %20 = vector.shape_cast %19 : vector<1x4x16xbf16> to vector<4x16xbf16>
    %cst_15 = arith.constant dense<0.000000e+00> : vector<64x16xf32>
    %21 = tpu.matmul %14, %20, %cst_15 {dimension_numbers = #tpu.dot_dimension_numbers<[1], [0], [0], [1], [0, 0, 1, 1], [], []>} : vector<64x4xbf16>, vector<4x16xbf16>, vector<64x16xf32> -> vector<64x16xf32>
    %22 = vector.extract_strided_slice %5 {offsets = [2, 0, 0], sizes = [8, 8, 4], strides = [1, 1, 1]} : vector<10x8x4xbf16> to vector<8x8x4xbf16>
    %23 = vector.shape_cast %22 : vector<8x8x4xbf16> to vector<64x4xbf16>
    %c10 = arith.constant 10 : index
    %c0_16 = arith.constant 0 : index
    %c0_17 = arith.constant 0 : index
    %24 = vector.load %arg5[%c10, %c0_16, %c0_17] : memref<16x4x16xbf16, #tpu.memory_space<vmem>>, vector<1x4x16xbf16>
    %25 = vector.shape_cast %24 : vector<1x4x16xbf16> to vector<4x16xbf16>
    %cst_18 = arith.constant dense<0.000000e+00> : vector<64x16xf32>
    %26 = tpu.matmul %23, %25, %cst_18 {dimension_numbers = #tpu.dot_dimension_numbers<[1], [0], [0], [1], [0, 0, 1, 1], [], []>} : vector<64x4xbf16>, vector<4x16xbf16>, vector<64x16xf32> -> vector<64x16xf32>
    %27 = arith.addf %21, %26 : vector<64x16xf32>
    %28 = vector.extract_strided_slice %6 {offsets = [0, 0, 0], sizes = [8, 8, 4], strides = [1, 1, 1]} : vector<10x8x4xbf16> to vector<8x8x4xbf16>
    %29 = vector.shape_cast %28 : vector<8x8x4xbf16> to vector<64x4xbf16>
    %c1 = arith.constant 1 : index
    %c0_19 = arith.constant 0 : index
    %c0_20 = arith.constant 0 : index
    %30 = vector.load %arg5[%c1, %c0_19, %c0_20] : memref<16x4x16xbf16, #tpu.memory_space<vmem>>, vector<1x4x16xbf16>
    %31 = vector.shape_cast %30 : vector<1x4x16xbf16> to vector<4x16xbf16>
    %cst_21 = arith.constant dense<0.000000e+00> : vector<64x16xf32>
    %32 = tpu.matmul %29, %31, %cst_21 {dimension_numbers = #tpu.dot_dimension_numbers<[1], [0], [0], [1], [0, 0, 1, 1], [], []>} : vector<64x4xbf16>, vector<4x16xbf16>, vector<64x16xf32> -> vector<64x16xf32>
    %33 = arith.addf %18, %32 : vector<64x16xf32>
    %c4 = arith.constant 4 : index
    %c0_22 = arith.constant 0 : index
    %c0_23 = arith.constant 0 : index
    %34 = vector.load %arg5[%c4, %c0_22, %c0_23] : memref<16x4x16xbf16, #tpu.memory_space<vmem>>, vector<1x4x16xbf16>
    %35 = vector.shape_cast %34 : vector<1x4x16xbf16> to vector<4x16xbf16>
    %cst_24 = arith.constant dense<0.000000e+00> : vector<64x16xf32>
    %36 = tpu.matmul %29, %35, %cst_24 {dimension_numbers = #tpu.dot_dimension_numbers<[1], [0], [0], [1], [0, 0, 1, 1], [], []>} : vector<64x4xbf16>, vector<4x16xbf16>, vector<64x16xf32> -> vector<64x16xf32>
    %37 = vector.extract_strided_slice %6 {offsets = [1, 0, 0], sizes = [8, 8, 4], strides = [1, 1, 1]} : vector<10x8x4xbf16> to vector<8x8x4xbf16>
    %38 = vector.shape_cast %37 : vector<8x8x4xbf16> to vector<64x4xbf16>
    %c3 = arith.constant 3 : index
    %c0_25 = arith.constant 0 : index
    %c0_26 = arith.constant 0 : index
    %39 = vector.load %arg5[%c3, %c0_25, %c0_26] : memref<16x4x16xbf16, #tpu.memory_space<vmem>>, vector<1x4x16xbf16>
    %40 = vector.shape_cast %39 : vector<1x4x16xbf16> to vector<4x16xbf16>
    %cst_27 = arith.constant dense<0.000000e+00> : vector<64x16xf32>
    %41 = tpu.matmul %38, %40, %cst_27 {dimension_numbers = #tpu.dot_dimension_numbers<[1], [0], [0], [1], [0, 0, 1, 1], [], []>} : vector<64x4xbf16>, vector<4x16xbf16>, vector<64x16xf32> -> vector<64x16xf32>
    %42 = arith.addf %33, %41 : vector<64x16xf32>
    %c6 = arith.constant 6 : index
    %c0_28 = arith.constant 0 : index
    %c0_29 = arith.constant 0 : index
    %43 = vector.load %arg5[%c6, %c0_28, %c0_29] : memref<16x4x16xbf16, #tpu.memory_space<vmem>>, vector<1x4x16xbf16>
    %44 = vector.shape_cast %43 : vector<1x4x16xbf16> to vector<4x16xbf16>
    %cst_30 = arith.constant dense<0.000000e+00> : vector<64x16xf32>
    %45 = tpu.matmul %38, %44, %cst_30 {dimension_numbers = #tpu.dot_dimension_numbers<[1], [0], [0], [1], [0, 0, 1, 1], [], []>} : vector<64x4xbf16>, vector<4x16xbf16>, vector<64x16xf32> -> vector<64x16xf32>
    %46 = arith.addf %36, %45 : vector<64x16xf32>
    %c9 = arith.constant 9 : index
    %c0_31 = arith.constant 0 : index
    %c0_32 = arith.constant 0 : index
    %47 = vector.load %arg5[%c9, %c0_31, %c0_32] : memref<16x4x16xbf16, #tpu.memory_space<vmem>>, vector<1x4x16xbf16>
    %48 = vector.shape_cast %47 : vector<1x4x16xbf16> to vector<4x16xbf16>
    %cst_33 = arith.constant dense<0.000000e+00> : vector<64x16xf32>
    %49 = tpu.matmul %38, %48, %cst_33 {dimension_numbers = #tpu.dot_dimension_numbers<[1], [0], [0], [1], [0, 0, 1, 1], [], []>} : vector<64x4xbf16>, vector<4x16xbf16>, vector<64x16xf32> -> vector<64x16xf32>
    %50 = arith.addf %27, %49 : vector<64x16xf32>
    %c12 = arith.constant 12 : index
    %c0_34 = arith.constant 0 : index
    %c0_35 = arith.constant 0 : index
    %51 = vector.load %arg5[%c12, %c0_34, %c0_35] : memref<16x4x16xbf16, #tpu.memory_space<vmem>>, vector<1x4x16xbf16>
    %52 = vector.shape_cast %51 : vector<1x4x16xbf16> to vector<4x16xbf16>
    %cst_36 = arith.constant dense<0.000000e+00> : vector<64x16xf32>
    %53 = tpu.matmul %38, %52, %cst_36 {dimension_numbers = #tpu.dot_dimension_numbers<[1], [0], [0], [1], [0, 0, 1, 1], [], []>} : vector<64x4xbf16>, vector<4x16xbf16>, vector<64x16xf32> -> vector<64x16xf32>
    %54 = vector.extract_strided_slice %6 {offsets = [2, 0, 0], sizes = [8, 8, 4], strides = [1, 1, 1]} : vector<10x8x4xbf16> to vector<8x8x4xbf16>
    %55 = vector.shape_cast %54 : vector<8x8x4xbf16> to vector<64x4xbf16>
    %c11 = arith.constant 11 : index
    %c0_37 = arith.constant 0 : index
    %c0_38 = arith.constant 0 : index
    %56 = vector.load %arg5[%c11, %c0_37, %c0_38] : memref<16x4x16xbf16, #tpu.memory_space<vmem>>, vector<1x4x16xbf16>
    %57 = vector.shape_cast %56 : vector<1x4x16xbf16> to vector<4x16xbf16>
    %cst_39 = arith.constant dense<0.000000e+00> : vector<64x16xf32>
    %58 = tpu.matmul %55, %57, %cst_39 {dimension_numbers = #tpu.dot_dimension_numbers<[1], [0], [0], [1], [0, 0, 1, 1], [], []>} : vector<64x4xbf16>, vector<4x16xbf16>, vector<64x16xf32> -> vector<64x16xf32>
    %59 = arith.addf %50, %58 : vector<64x16xf32>
    %c14 = arith.constant 14 : index
    %c0_40 = arith.constant 0 : index
    %c0_41 = arith.constant 0 : index
    %60 = vector.load %arg5[%c14, %c0_40, %c0_41] : memref<16x4x16xbf16, #tpu.memory_space<vmem>>, vector<1x4x16xbf16>
    %61 = vector.shape_cast %60 : vector<1x4x16xbf16> to vector<4x16xbf16>
    %cst_42 = arith.constant dense<0.000000e+00> : vector<64x16xf32>
    %62 = tpu.matmul %55, %61, %cst_42 {dimension_numbers = #tpu.dot_dimension_numbers<[1], [0], [0], [1], [0, 0, 1, 1], [], []>} : vector<64x4xbf16>, vector<4x16xbf16>, vector<64x16xf32> -> vector<64x16xf32>
    %63 = arith.addf %53, %62 : vector<64x16xf32>
    %64 = vector.extract_strided_slice %7 {offsets = [0, 0, 0], sizes = [8, 8, 4], strides = [1, 1, 1]} : vector<10x8x4xbf16> to vector<8x8x4xbf16>
    %65 = vector.shape_cast %64 : vector<8x8x4xbf16> to vector<64x4xbf16>
    %c5 = arith.constant 5 : index
    %c0_43 = arith.constant 0 : index
    %c0_44 = arith.constant 0 : index
    %66 = vector.load %arg5[%c5, %c0_43, %c0_44] : memref<16x4x16xbf16, #tpu.memory_space<vmem>>, vector<1x4x16xbf16>
    %67 = vector.shape_cast %66 : vector<1x4x16xbf16> to vector<4x16xbf16>
    %cst_45 = arith.constant dense<0.000000e+00> : vector<64x16xf32>
    %68 = tpu.matmul %65, %67, %cst_45 {dimension_numbers = #tpu.dot_dimension_numbers<[1], [0], [0], [1], [0, 0, 1, 1], [], []>} : vector<64x4xbf16>, vector<4x16xbf16>, vector<64x16xf32> -> vector<64x16xf32>
    %69 = arith.addf %46, %68 : vector<64x16xf32>
    %70 = vector.extract_strided_slice %7 {offsets = [1, 0, 0], sizes = [8, 8, 4], strides = [1, 1, 1]} : vector<10x8x4xbf16> to vector<8x8x4xbf16>
    %71 = vector.shape_cast %70 : vector<8x8x4xbf16> to vector<64x4xbf16>
    %c7 = arith.constant 7 : index
    %c0_46 = arith.constant 0 : index
    %c0_47 = arith.constant 0 : index
    %72 = vector.load %arg5[%c7, %c0_46, %c0_47] : memref<16x4x16xbf16, #tpu.memory_space<vmem>>, vector<1x4x16xbf16>
    %73 = vector.shape_cast %72 : vector<1x4x16xbf16> to vector<4x16xbf16>
    %cst_48 = arith.constant dense<0.000000e+00> : vector<64x16xf32>
    %74 = tpu.matmul %71, %73, %cst_48 {dimension_numbers = #tpu.dot_dimension_numbers<[1], [0], [0], [1], [0, 0, 1, 1], [], []>} : vector<64x4xbf16>, vector<4x16xbf16>, vector<64x16xf32> -> vector<64x16xf32>
    %75 = arith.addf %69, %74 : vector<64x16xf32>
    %c13 = arith.constant 13 : index
    %c0_49 = arith.constant 0 : index
    %c0_50 = arith.constant 0 : index
    %76 = vector.load %arg5[%c13, %c0_49, %c0_50] : memref<16x4x16xbf16, #tpu.memory_space<vmem>>, vector<1x4x16xbf16>
    %77 = vector.shape_cast %76 : vector<1x4x16xbf16> to vector<4x16xbf16>
    %cst_51 = arith.constant dense<0.000000e+00> : vector<64x16xf32>
    %78 = tpu.matmul %71, %77, %cst_51 {dimension_numbers = #tpu.dot_dimension_numbers<[1], [0], [0], [1], [0, 0, 1, 1], [], []>} : vector<64x4xbf16>, vector<4x16xbf16>, vector<64x16xf32> -> vector<64x16xf32>
    %79 = arith.addf %63, %78 : vector<64x16xf32>
    %80 = vector.extract_strided_slice %7 {offsets = [2, 0, 0], sizes = [8, 8, 4], strides = [1, 1, 1]} : vector<10x8x4xbf16> to vector<8x8x4xbf16>
    %81 = vector.shape_cast %80 : vector<8x8x4xbf16> to vector<64x4xbf16>
    %c15 = arith.constant 15 : index
    %c0_52 = arith.constant 0 : index
    %c0_53 = arith.constant 0 : index
    %82 = vector.load %arg5[%c15, %c0_52, %c0_53] : memref<16x4x16xbf16, #tpu.memory_space<vmem>>, vector<1x4x16xbf16>
    %83 = vector.shape_cast %82 : vector<1x4x16xbf16> to vector<4x16xbf16>
    %cst_54 = arith.constant dense<0.000000e+00> : vector<64x16xf32>
    %84 = tpu.matmul %81, %83, %cst_54 {dimension_numbers = #tpu.dot_dimension_numbers<[1], [0], [0], [1], [0, 0, 1, 1], [], []>} : vector<64x4xbf16>, vector<4x16xbf16>, vector<64x16xf32> -> vector<64x16xf32>
    %85 = arith.addf %79, %84 : vector<64x16xf32>
    %c0_55 = arith.constant 0 : index
    %c0_56 = arith.constant 0 : index
    %86 = vector.load %arg7[%c0_55, %c0_56] : memref<1x16xf32, #tpu.memory_space<vmem>>, vector<1x16xf32>
    %c0_57 = arith.constant 0 : index
    %c0_58 = arith.constant 0 : index
    %c0_59 = arith.constant 0 : index
    %87 = vector.load %arg6[%c0_57, %c0_58, %c0_59] : memref<4x4x16xbf16, #tpu.memory_space<vmem>>, vector<1x4x16xbf16>
    %88 = vector.shape_cast %87 : vector<1x4x16xbf16> to vector<4x16xbf16>
    %cst_60 = arith.constant dense<0.000000e+00> : vector<64x16xf32>
    %89 = tpu.matmul %38, %88, %cst_60 {dimension_numbers = #tpu.dot_dimension_numbers<[1], [0], [0], [1], [0, 0, 1, 1], [], []>} : vector<64x4xbf16>, vector<4x16xbf16>, vector<64x16xf32> -> vector<64x16xf32>
    %90 = arith.addf %42, %89 : vector<64x16xf32>
    %91 = vector.broadcast %86 : vector<1x16xf32> to vector<64x16xf32>
    %92 = arith.addf %90, %91 : vector<64x16xf32>
    %93 = vector.shape_cast %92 : vector<64x16xf32> to vector<8x8x16xf32>
    %94 = arith.truncf %93 : vector<8x8x16xf32> to vector<8x8x16xbf16>
    %c0_61 = arith.constant 0 : index
    %c0_62 = arith.constant 0 : index
    %c0_63 = arith.constant 0 : index
    %c0_64 = arith.constant 0 : index
    %c0_65 = arith.constant 0 : index
    %c0_66 = arith.constant 0 : index
    %95 = vector.load %arg8[%c0_61, %c0_62, %c0_63, %c0_64, %c0_65, %c0_66] : memref<1x8x2x8x2x16xbf16, #tpu.memory_space<vmem>>, vector<1x8x1x8x1x16xbf16>
    %96 = vector.shape_cast %95 : vector<1x8x1x8x1x16xbf16> to vector<8x8x16xbf16>
    %97 = vector.shape_cast %94 : vector<8x8x16xbf16> to vector<1x8x1x8x1x16xbf16>
    tpu.vector_store %arg8[%c0_61, %c0_62, %c0_63, %c0_64, %c0_65, %c0_66], %97 {strides = array<i32>} : memref<1x8x2x8x2x16xbf16, #tpu.memory_space<vmem>>, vector<1x8x1x8x1x16xbf16>,
    %c1_67 = arith.constant 1 : index
    %c0_68 = arith.constant 0 : index
    %c0_69 = arith.constant 0 : index
    %98 = vector.load %arg6[%c1_67, %c0_68, %c0_69] : memref<4x4x16xbf16, #tpu.memory_space<vmem>>, vector<1x4x16xbf16>
    %99 = vector.shape_cast %98 : vector<1x4x16xbf16> to vector<4x16xbf16>
    %cst_70 = arith.constant dense<0.000000e+00> : vector<64x16xf32>
    %100 = tpu.matmul %38, %99, %cst_70 {dimension_numbers = #tpu.dot_dimension_numbers<[1], [0], [0], [1], [0, 0, 1, 1], [], []>} : vector<64x4xbf16>, vector<4x16xbf16>, vector<64x16xf32> -> vector<64x16xf32>
    %101 = arith.addf %75, %100 : vector<64x16xf32>
    %102 = vector.broadcast %86 : vector<1x16xf32> to vector<64x16xf32>
    %103 = arith.addf %101, %102 : vector<64x16xf32>
    %104 = vector.shape_cast %103 : vector<64x16xf32> to vector<8x8x16xf32>
    %105 = arith.truncf %104 : vector<8x8x16xf32> to vector<8x8x16xbf16>
    %c0_71 = arith.constant 0 : index
    %c0_72 = arith.constant 0 : index
    %c0_73 = arith.constant 0 : index
    %c0_74 = arith.constant 0 : index
    %c1_75 = arith.constant 1 : index
    %c0_76 = arith.constant 0 : index
    %106 = vector.load %arg8[%c0_71, %c0_72, %c0_73, %c0_74, %c1_75, %c0_76] : memref<1x8x2x8x2x16xbf16, #tpu.memory_space<vmem>>, vector<1x8x1x8x1x16xbf16>
    %107 = vector.shape_cast %106 : vector<1x8x1x8x1x16xbf16> to vector<8x8x16xbf16>
    %108 = vector.shape_cast %105 : vector<8x8x16xbf16> to vector<1x8x1x8x1x16xbf16>
    tpu.vector_store %arg8[%c0_71, %c0_72, %c0_73, %c0_74, %c1_75, %c0_76], %108 {strides = array<i32>} : memref<1x8x2x8x2x16xbf16, #tpu.memory_space<vmem>>, vector<1x8x1x8x1x16xbf16>,
    %c2_77 = arith.constant 2 : index
    %c0_78 = arith.constant 0 : index
    %c0_79 = arith.constant 0 : index
    %109 = vector.load %arg6[%c2_77, %c0_78, %c0_79] : memref<4x4x16xbf16, #tpu.memory_space<vmem>>, vector<1x4x16xbf16>
    %110 = vector.shape_cast %109 : vector<1x4x16xbf16> to vector<4x16xbf16>
    %cst_80 = arith.constant dense<0.000000e+00> : vector<64x16xf32>
    %111 = tpu.matmul %38, %110, %cst_80 {dimension_numbers = #tpu.dot_dimension_numbers<[1], [0], [0], [1], [0, 0, 1, 1], [], []>} : vector<64x4xbf16>, vector<4x16xbf16>, vector<64x16xf32> -> vector<64x16xf32>
    %112 = arith.addf %59, %111 : vector<64x16xf32>
    %113 = vector.broadcast %86 : vector<1x16xf32> to vector<64x16xf32>
    %114 = arith.addf %112, %113 : vector<64x16xf32>
    %115 = vector.shape_cast %114 : vector<64x16xf32> to vector<8x8x16xf32>
    %116 = arith.truncf %115 : vector<8x8x16xf32> to vector<8x8x16xbf16>
    %c0_81 = arith.constant 0 : index
    %c0_82 = arith.constant 0 : index
    %c1_83 = arith.constant 1 : index
    %c0_84 = arith.constant 0 : index
    %c0_85 = arith.constant 0 : index
    %c0_86 = arith.constant 0 : index
    %117 = vector.load %arg8[%c0_81, %c0_82, %c1_83, %c0_84, %c0_85, %c0_86] : memref<1x8x2x8x2x16xbf16, #tpu.memory_space<vmem>>, vector<1x8x1x8x1x16xbf16>
    %118 = vector.shape_cast %117 : vector<1x8x1x8x1x16xbf16> to vector<8x8x16xbf16>
    %119 = vector.shape_cast %116 : vector<8x8x16xbf16> to vector<1x8x1x8x1x16xbf16>
    tpu.vector_store %arg8[%c0_81, %c0_82, %c1_83, %c0_84, %c0_85, %c0_86], %119 {strides = array<i32>} : memref<1x8x2x8x2x16xbf16, #tpu.memory_space<vmem>>, vector<1x8x1x8x1x16xbf16>,
    %c3_87 = arith.constant 3 : index
    %c0_88 = arith.constant 0 : index
    %c0_89 = arith.constant 0 : index
    %120 = vector.load %arg6[%c3_87, %c0_88, %c0_89] : memref<4x4x16xbf16, #tpu.memory_space<vmem>>, vector<1x4x16xbf16>
    %121 = vector.shape_cast %120 : vector<1x4x16xbf16> to vector<4x16xbf16>
    %cst_90 = arith.constant dense<0.000000e+00> : vector<64x16xf32>
    %122 = tpu.matmul %38, %121, %cst_90 {dimension_numbers = #tpu.dot_dimension_numbers<[1], [0], [0], [1], [0, 0, 1, 1], [], []>} : vector<64x4xbf16>, vector<4x16xbf16>, vector<64x16xf32> -> vector<64x16xf32>
    %123 = arith.addf %85, %122 : vector<64x16xf32>
    %124 = vector.broadcast %86 : vector<1x16xf32> to vector<64x16xf32>
    %125 = arith.addf %123, %124 : vector<64x16xf32>
    %126 = vector.shape_cast %125 : vector<64x16xf32> to vector<8x8x16xf32>
    %127 = arith.truncf %126 : vector<8x8x16xf32> to vector<8x8x16xbf16>
    %c0_91 = arith.constant 0 : index
    %c0_92 = arith.constant 0 : index
    %c1_93 = arith.constant 1 : index
    %c0_94 = arith.constant 0 : index
    %c1_95 = arith.constant 1 : index
    %c0_96 = arith.constant 0 : index
    %128 = vector.load %arg8[%c0_91, %c0_92, %c1_93, %c0_94, %c1_95, %c0_96] : memref<1x8x2x8x2x16xbf16, #tpu.memory_space<vmem>>, vector<1x8x1x8x1x16xbf16>
    %129 = vector.shape_cast %128 : vector<1x8x1x8x1x16xbf16> to vector<8x8x16xbf16>
    %130 = vector.shape_cast %127 : vector<8x8x16xbf16> to vector<1x8x1x8x1x16xbf16>
    tpu.vector_store %arg8[%c0_91, %c0_92, %c1_93, %c0_94, %c1_95, %c0_96], %130 {strides = array<i32>} : memref<1x8x2x8x2x16xbf16, #tpu.memory_space<vmem>>, vector<1x8x1x8x1x16xbf16>,
    return
  }
  func.func @transform_0(%arg0: i32, %arg1: i32, %arg2: i32) -> (i32, i32, i32, i32) {
    %c0_i32 = arith.constant 0 : i32
    %c0_i32_0 = arith.constant 0 : i32
    %c0_i32_1 = arith.constant 0 : i32
    return %arg0, %arg1, %c0_i32, %c0_i32_0 : i32, i32, i32, i32
  }
  func.func @transform_1(%arg0: i32, %arg1: i32, %arg2: i32) -> (i32, i32, i32, i32) {
    %c1_i32 = arith.constant 1 : i32
    %0 = arith.addi %arg1, %c1_i32 : i32
    %c4_i32 = arith.constant 4 : i32
    %1 = arith.muli %0, %c4_i32 : i32
    %c0_i32 = arith.constant 0 : i32
    %c0_i32_0 = arith.constant 0 : i32
    %c0_i32_1 = arith.constant 0 : i32
    return %arg0, %1, %c0_i32, %c0_i32_0 : i32, i32, i32, i32
  }
  func.func @transform_2(%arg0: i32, %arg1: i32, %arg2: i32) -> (i32, i32, i32) {
    %c0_i32 = arith.constant 0 : i32
    %c0_i32_0 = arith.constant 0 : i32
    %c0_i32_1 = arith.constant 0 : i32
    return %c0_i32, %c0_i32_0, %arg2 : i32, i32, i32
  }
  func.func @transform_3(%arg0: i32, %arg1: i32, %arg2: i32) -> (i32, i32, i32) {
    %c0_i32 = arith.constant 0 : i32
    %c0_i32_0 = arith.constant 0 : i32
    %c0_i32_1 = arith.constant 0 : i32
    return %c0_i32, %c0_i32_0, %arg2 : i32, i32, i32
  }
  func.func @transform_4(%arg0: i32, %arg1: i32, %arg2: i32) -> (i32, i32) {
    %c0_i32 = arith.constant 0 : i32
    %c0_i32_0 = arith.constant 0 : i32
    return %c0_i32, %arg2 : i32, i32
  }
  func.func @transform_5(%arg0: i32, %arg1: i32, %arg2: i32) -> (i32, i32, i32, i32, i32, i32) {
    %c0_i32 = arith.constant 0 : i32
    %c0_i32_0 = arith.constant 0 : i32
    %c0_i32_1 = arith.constant 0 : i32
    %c0_i32_2 = arith.constant 0 : i32
    return %arg0, %arg1, %c0_i32, %c0_i32_0, %c0_i32_1, %arg2 : i32, i32, i32, i32, i32, i32
  }
}

</mosaic_0001>

<llo_original>
// kernel: tpu_custom_call.1
$region0: #{tpu_custom_call.1}
  #allocation0 [shape = 'u32[]', space=smem, size = 0x4, offset = 0x4, fixed_abs, tag = 'smem constant byte address 0x4 - core index']
  #allocation1 [shape = 'u32[144,128]{1,0:T(1,128)}', space=vmem, size = 0x12000, scoped, tag = 'internal scratch']
  %s0 = inlined_call_operand.vmem [shape: bf16[2,10,10,4], index: 0, kind: input, shape index: {}]
  %s1 = inlined_call_operand.vmem [shape: bf16[2,10,10,4], index: 1, kind: input, shape index: {}]
  %s2 = inlined_call_operand.vmem [shape: bf16[16,4,16], index: 2, kind: input, shape index: {}]
  %s3 = inlined_call_operand.vmem [shape: bf16[4,4,16], index: 3, kind: input, shape index: {}]
  %s4 = inlined_call_operand.vmem [shape: f32[1,16], index: 4, kind: input, shape index: {}]
  %s5 = inlined_call_operand.hbm [shape: bf16[2,8,2,8,2,16], index: 5, kind: output, shape index: {}]
  %s6 = sld [smem:[#allocation0]]
  $region53: #{tpu_custom_call.1} parent=0
    _
  %s8 = ssub.s32 1, %s6
  %s9 = scalar_select 0, %s8, %s6
  $region1: #{tpu_custom_call.1} parent=0
    #allocation2 [shape = 'u8[131072]{0}', space=vmem, size = 0x20000, scoped, tag = 'output window, operand 0']
    #allocation3 [shape = 's32[2]{0}', space=sflag, size = 0x8, scoped, tag = 'scoped memory for tpu_custom_call.1']
    %10 = vsyncpa [#allocation3], 0
    %s11 = scalar_lea.sflag [#allocation3], 1
    %12 = vsyncpa %s11, 0
    loop: start=0, step=1, limit=4
    $region2: #{tpu_custom_call.1} parent=1 // loop_pre_header
      _
    $region3: #{tpu_custom_call.1} parent=1 // loop_header
      %s14 = sphi 0, %s18
      %p15 = scmp.ge.s32.totalorder %s14, 4
      %s21 = sphi 0, %s40
      %s22 = sphi 0, %s36
      %s23 = sphi 0, %s32
      %s24 = sphi 0, %s21
      %s25 = sphi 0, %s22
      %s26 = sphi 0, %s23
      %s27 = sphi 0, %s24
      %s28 = sphi 0, %s25
      %s29 = sphi 0, %s26
      %s45 = sphi 0, %s47
      %s48 = sphi 0, %s45
      %s49 = sphi 0, %s48
      %s65 = sphi 0, %s49
      %s77 = sphi 0, %s79
      %s80 = sphi 0, %s77
      %s81 = sphi 0, %s80
      %s97 = sphi 0, %s81
      %s103 = sphi 0, %s105
      %s106 = sphi 0, %s103
      %s107 = sphi 0, %s106
      %s123 = sphi 0, %s107
      %s129 = sphi 0, %s131
      %s132 = sphi 0, %s129
      %s133 = sphi 0, %s132
      %s149 = sphi 0, %s133
      %s155 = sphi 0, %s157
      %s158 = sphi 0, %s155
      %s159 = sphi 0, %s158
      %s175 = sphi 0, %s159
      %s185 = sphi 0, %s187
      %s188 = sphi 0, %s185
      %s189 = sphi 0, %s188
      %s205 = sphi 0, %s189
    $region4: #{tpu_custom_call.1} parent=1 // loop_header_branch
      %17 = sbr.rel (%p15) target = $region8
    $region5: #{tpu_custom_call.1} parent=1 // loop_body
      %s19 = ssub.s32 %s14, 1
      %s20 = ssub.s32 %s14, 2
      %s30 = sadd.s32 1, %s23
      %p31 = scmp.ge.s32.totalorder %s30, 1
      %s32 = scalar_select %p31, 0, %s30
      %s33 = sadd.s32 1, %s22
      %s34 = scalar_select %p31, %s33, %s22
      %p35 = scmp.ge.s32.totalorder %s34, 1
      %s36 = scalar_select %p35, 0, %s34
      %s37 = sadd.s32 1, %s21
      %s38 = scalar_select %p35, %s37, %s21
      %p39 = scmp.ge.s32.totalorder %s38, 2
      %s40 = scalar_select %p39, 0, %s38
      %s41 = ssub.s32 %s21, %s40
      %s42 = ssub.s32 %s22, %s36
      %s43 = sor.u32 %s41, %s42
      %p44 = scmp.eq.s32.totalorder %s43, 0
      %s46 = sadd.s32 %s45, 1
      %s47 = scalar_select %p44, %s45, %s46
      %p50 = pneg %p44
      %p51 = scmp.eq.s32.totalorder %s14, 1
      %p52 = por %p50, %p51
      %p53 = scmp.ne.s32.totalorder %s45, %s48
      %p54 = scmp.eq.s32.totalorder %s14, 0
      %p55 = por %p53, %p54
      %p56 = scmp.ne.s32.totalorder %s45, %s48
      %p57 = scmp.eq.s32.totalorder %s19, 1
      %p58 = por %p56, %p57
      %p59 = scmp.ne.s32.totalorder %s48, %s49
      %p60 = scmp.eq.s32.totalorder %s19, 0
      %p61 = por %p59, %p60
      %p62 = scmp.ne.s32.totalorder %s48, %s49
      %p63 = scmp.eq.s32.totalorder %s20, 1
      %p64 = por %p62, %p63
      %p66 = scmp.ne.s32.totalorder %s49, %s65
      %p67 = scmp.eq.s32.totalorder %s20, 0
      %p68 = por %p66, %p67
      %s69 = sadd.s32 %s22, 1
      %s70 = smul.u32 %s69, 4
      %s71 = sadd.s32 %s36, 1
      %s72 = smul.u32 %s71, 4
      %s73 = ssub.s32 %s21, %s40
      %s74 = ssub.s32 %s70, %s72
      %s75 = sor.u32 %s73, %s74
      %p76 = scmp.eq.s32.totalorder %s75, 0
      %s78 = sadd.s32 %s77, 1
      %s79 = scalar_select %p76, %s77, %s78
      %p82 = pneg %p76
      %p83 = scmp.eq.s32.totalorder %s14, 1
      %p84 = por %p82, %p83
      %p85 = scmp.ne.s32.totalorder %s77, %s80
      %p86 = scmp.eq.s32.totalorder %s14, 0
      %p87 = por %p85, %p86
      %p88 = scmp.ne.s32.totalorder %s77, %s80
      %p89 = scmp.eq.s32.totalorder %s19, 1
      %p90 = por %p88, %p89
      %p91 = scmp.ne.s32.totalorder %s80, %s81
      %p92 = scmp.eq.s32.totalorder %s19, 0
      %p93 = por %p91, %p92
      %p94 = scmp.ne.s32.totalorder %s80, %s81
      %p95 = scmp.eq.s32.totalorder %s20, 1
      %p96 = por %p94, %p95
      %p98 = scmp.ne.s32.totalorder %s81, %s97
      %p99 = scmp.eq.s32.totalorder %s20, 0
      %p100 = por %p98, %p99
      %s101 = ssub.s32 %s23, %s32
      %p102 = scmp.eq.s32.totalorder %s101, 0
      %s104 = sadd.s32 %s103, 1
      %s105 = scalar_select %p102, %s103, %s104
      %p108 = pneg %p102
      %p109 = scmp.eq.s32.totalorder %s14, 1
      %p110 = por %p108, %p109
      %p111 = scmp.ne.s32.totalorder %s103, %s106
      %p112 = scmp.eq.s32.totalorder %s14, 0
      %p113 = por %p111, %p112
      %p114 = scmp.ne.s32.totalorder %s103, %s106
      %p115 = scmp.eq.s32.totalorder %s19, 1
      %p116 = por %p114, %p115
      %p117 = scmp.ne.s32.totalorder %s106, %s107
      %p118 = scmp.eq.s32.totalorder %s19, 0
      %p119 = por %p117, %p118
      %p120 = scmp.ne.s32.totalorder %s106, %s107
      %p121 = scmp.eq.s32.totalorder %s20, 1
      %p122 = por %p120, %p121
      %p124 = scmp.ne.s32.totalorder %s107, %s123
      %p125 = scmp.eq.s32.totalorder %s20, 0
      %p126 = por %p124, %p125
      %s127 = ssub.s32 %s23, %s32
      %p128 = scmp.eq.s32.totalorder %s127, 0
      %s130 = sadd.s32 %s129, 1
      %s131 = scalar_select %p128, %s129, %s130
      %p134 = pneg %p128
      %p135 = scmp.eq.s32.totalorder %s14, 1
      %p136 = por %p134, %p135
      %p137 = scmp.ne.s32.totalorder %s129, %s132
      %p138 = scmp.eq.s32.totalorder %s14, 0
      %p139 = por %p137, %p138
      %p140 = scmp.ne.s32.totalorder %s129, %s132
      %p141 = scmp.eq.s32.totalorder %s19, 1
      %p142 = por %p140, %p141
      %p143 = scmp.ne.s32.totalorder %s132, %s133
      %p144 = scmp.eq.s32.totalorder %s19, 0
      %p145 = por %p143, %p144
      %p146 = scmp.ne.s32.totalorder %s132, %s133
      %p147 = scmp.eq.s32.totalorder %s20, 1
      %p148 = por %p146, %p147
      %p150 = scmp.ne.s32.totalorder %s133, %s149
      %p151 = scmp.eq.s32.totalorder %s20, 0
      %p152 = por %p150, %p151
      %s153 = ssub.s32 %s23, %s32
      %p154 = scmp.eq.s32.totalorder %s153, 0
      %s156 = sadd.s32 %s155, 1
      %s157 = scalar_select %p154, %s155, %s156
      %p160 = pneg %p154
      %p161 = scmp.eq.s32.totalorder %s14, 1
      %p162 = por %p160, %p161
      %p163 = scmp.ne.s32.totalorder %s155, %s158
      %p164 = scmp.eq.s32.totalorder %s14, 0
      %p165 = por %p163, %p164
      %p166 = scmp.ne.s32.totalorder %s155, %s158
      %p167 = scmp.eq.s32.totalorder %s19, 1
      %p168 = por %p166, %p167
      %p169 = scmp.ne.s32.totalorder %s158, %s159
      %p170 = scmp.eq.s32.totalorder %s19, 0
      %p171 = por %p169, %p170
      %p172 = scmp.ne.s32.totalorder %s158, %s159
      %p173 = scmp.eq.s32.totalorder %s20, 1
      %p174 = por %p172, %p173
      %p176 = scmp.ne.s32.totalorder %s159, %s175
      %p177 = scmp.eq.s32.totalorder %s20, 0
      %p178 = por %p176, %p177
      %s179 = ssub.s32 %s21, %s40
      %s180 = ssub.s32 %s22, %s36
      %s181 = sor.u32 %s179, %s180
      %s182 = ssub.s32 %s23, %s32
      %s183 = sor.u32 %s181, %s182
      %p184 = scmp.eq.s32.totalorder %s183, 0
      %s186 = sadd.s32 %s185, 1
      %s187 = scalar_select %p184, %s185, %s186
      %p190 = pneg %p184
      %p191 = scmp.eq.s32.totalorder %s14, 1
      %p192 = por %p190, %p191
      %p193 = scmp.ne.s32.totalorder %s185, %s188
      %p194 = scmp.eq.s32.totalorder %s14, 0
      %p195 = por %p193, %p194
      %p196 = scmp.ne.s32.totalorder %s185, %s188
      %p197 = scmp.eq.s32.totalorder %s19, 1
      %p198 = por %p196, %p197
      %p199 = scmp.ne.s32.totalorder %s188, %s189
      %p200 = scmp.eq.s32.totalorder %s19, 0
      %p201 = por %p199, %p200
      %p202 = scmp.ne.s32.totalorder %s188, %s189
      %p203 = scmp.eq.s32.totalorder %s20, 1
      %p204 = por %p202, %p203
      %p206 = scmp.ne.s32.totalorder %s189, %s205
      %p207 = scmp.eq.s32.totalorder %s20, 0
      %p208 = por %p206, %p207
      %p209 = scmp.le.s32.totalorder 1, %s14
      %p210 = scmp.lt.s32.totalorder %s14, 3
      %p211 = pnand %p209, %p210
      %p212 = pneg %p211
      // Predicated region
      $region9: #{tpu_custom_call.1} parent=5 // pred_check
        _
      $region10: #{tpu_custom_call.1} parent=5 // pred_check_branch
        %214 = sbr.rel (%p211) target = $region12
      $region11: #{tpu_custom_call.1} parent=5 // pred_region
        %s215 = ssub.s32 %s14, 1
        // Predicated region
        $region13: #{tpu_custom_call.1} parent=11 // pred_check
          %p216 = pneg %p119
        $region14: #{tpu_custom_call.1} parent=11 // pred_check_branch
          %218 = sbr.rel (%p216) target = $region16
        $region15: #{tpu_custom_call.1} parent=11 // pred_region
          %p219 = scmp.lt.s32.totalorder %s26, 0
          %s220 = scalar_select %p219, %s26, 0
          %s221 = smul.addr %s220, 2
          %s222 = scalar_lea.vmem %s2, %s221
        $region16: #{tpu_custom_call.1} parent=11 // pred_fallthru
          _
        // Predicated region
        $region17: #{tpu_custom_call.1} parent=11 // pred_check
          %p223 = pneg %p145
        $region18: #{tpu_custom_call.1} parent=11 // pred_check_branch
          %225 = sbr.rel (%p223) target = $region20
        $region19: #{tpu_custom_call.1} parent=11 // pred_region
          %p226 = scmp.lt.s32.totalorder %s26, 0
          %s227 = scalar_select %p226, %s26, 0
          %s228 = smul.addr %s227, 2
          %s229 = scalar_lea.vmem %s3, %s228
        $region20: #{tpu_custom_call.1} parent=11 // pred_fallthru
          _
        // Predicated region
        $region21: #{tpu_custom_call.1} parent=11 // pred_check
          %p230 = pneg %p171
        $region22: #{tpu_custom_call.1} parent=11 // pred_check_branch
          %232 = sbr.rel (%p230) target = $region24
        $region23: #{tpu_custom_call.1} parent=11 // pred_region
          %p233 = scmp.lt.s32.totalorder %s26, 0
          %s234 = scalar_select %p233, %s26, 0
          %s235 = scalar_lea.vmem %s4, %s234
        $region24: #{tpu_custom_call.1} parent=11 // pred_fallthru
          _
      $region12: #{tpu_custom_call.1} parent=5 // pred_fallthru
        _
      %p236 = scmp.lt.s32.totalorder %s14, 2
      // Predicated region
      $region25: #{tpu_custom_call.1} parent=5 // pred_check
        %p237 = pneg %p236
      $region26: #{tpu_custom_call.1} parent=5 // pred_check_branch
        %239 = sbr.rel (%p237) target = $region28
      $region27: #{tpu_custom_call.1} parent=5 // pred_region
        // Predicated region
        $region29: #{tpu_custom_call.1} parent=27 // pred_check
          %p240 = pneg %p55
        $region30: #{tpu_custom_call.1} parent=27 // pred_check_branch
          %242 = sbr.rel (%p240) target = $region32
        $region31: #{tpu_custom_call.1} parent=27 // pred_region
          %s243 = smul.u32 8, %s22
          %s244 = ssub.s32 10, %s243
          %p245 = scmp.lt.s32.totalorder %s244, 8
          %s246 = scalar_select %p245, %s244, 8
          %s247 = smul.u32 64, %s246
          %s248 = smul.u32 %s247, 2
          %p249 = scmp.lt.s32.totalorder %s21, 1
          %s250 = scalar_select %p249, %s21, 1
          %p251 = scmp.lt.s32.totalorder %s243, 9
          %s252 = scalar_select %p251, %s243, 9
          %s253 = smul.addr %s252, 2
          %s254 = smul.addr %s250, 20
          %s255 = sadd.s32 %s253, %s254
          %s256 = smul.addr %s255, 4
          %s257 = scalar_lea.vmem %s0, %s256
          %s258 = smul.u32 8, %s22
          %s259 = ssub.s32 10, %s258
          %p260 = scmp.lt.s32.totalorder %s259, 8
          %s261 = scalar_select %p260, %s259, 8
          %s262 = smul.u32 64, %s261
          %s263 = smul.u32 %s262, 2
        $region32: #{tpu_custom_call.1} parent=27 // pred_fallthru
          _
        // Predicated region
        $region33: #{tpu_custom_call.1} parent=27 // pred_check
          %p264 = pneg %p87
        $region34: #{tpu_custom_call.1} parent=27 // pred_check_branch
          %266 = sbr.rel (%p264) target = $region36
        $region35: #{tpu_custom_call.1} parent=27 // pred_region
          %s267 = sadd.s32 %s22, 1
          %s268 = smul.u32 %s267, 4
          %s269 = smul.u32 2, %s268
          %p270 = scmp.lt.s32.totalorder %s21, 1
          %s271 = scalar_select %p270, %s21, 1
          %p272 = scmp.lt.s32.totalorder %s269, 9
          %s273 = scalar_select %p272, %s269, 9
          %s274 = smul.addr %s273, 2
          %s275 = smul.addr %s271, 20
          %s276 = sadd.s32 %s274, %s275
          %s277 = smul.addr %s276, 4
          %s278 = scalar_lea.vmem %s1, %s277
          %s279 = sadd.s32 %s22, 1
          %s280 = smul.u32 %s279, 4
          %s281 = smul.u32 2, %s280
        $region36: #{tpu_custom_call.1} parent=27 // pred_fallthru
          _
      $region28: #{tpu_custom_call.1} parent=5 // pred_fallthru
        _
      %p282 = scmp.le.s32.totalorder 1, %s14
      %p283 = scmp.lt.s32.totalorder %s14, 3
      %p284 = pnand %p282, %p283
      %p285 = pneg %p284
      // Predicated region
      $region37: #{tpu_custom_call.1} parent=5 // pred_check
        _
      $region38: #{tpu_custom_call.1} parent=5 // pred_check_branch
        %287 = sbr.rel (%p284) target = $region40
      $region39: #{tpu_custom_call.1} parent=5 // pred_region
        %s288 = ssub.s32 %s14, 1
        %s289 = smul.u32 8, %s25
        %s290 = ssub.s32 10, %s289
        %p291 = scmp.lt.s32.totalorder %s290, 8
        %s292 = scalar_select %p291, %s290, 8
        %s293 = smul.u32 64, %s292
        %s294 = smul.u32 %s293, 2
        %p295 = scmp.lt.s32.totalorder %s24, 1
        %s296 = scalar_select %p295, %s24, 1
        %p297 = scmp.lt.s32.totalorder %s289, 9
        %s298 = scalar_select %p297, %s289, 9
        %s299 = smul.addr %s298, 2
        %s300 = smul.addr %s296, 20
        %s301 = sadd.s32 %s299, %s300
        %s302 = smul.addr %s301, 4
        %s303 = scalar_lea.vmem %s0, %s302
        %p304 = pneg %p61
        %p305 = pneg %p58
        %s306 = sadd.s32 %s25, 1
        %s307 = smul.u32 %s306, 4
        %s308 = smul.u32 2, %s307
        %p309 = scmp.lt.s32.totalorder %s24, 1
        %s310 = scalar_select %p309, %s24, 1
        %p311 = scmp.lt.s32.totalorder %s308, 9
        %s312 = scalar_select %p311, %s308, 9
        %s313 = smul.addr %s312, 2
        %s314 = smul.addr %s310, 20
        %s315 = sadd.s32 %s313, %s314
        %s316 = smul.addr %s315, 4
        %s317 = scalar_lea.vmem %s1, %s316
        %p318 = pneg %p93
        %p319 = pneg %p90
        %p320 = scmp.lt.s32.totalorder %s26, 0
        %s321 = scalar_select %p320, %s26, 0
        %s322 = smul.addr %s321, 2
        %s323 = scalar_lea.vmem %s2, %s322
        %p324 = pneg %p119
        %p325 = pneg %p116
        %p326 = scmp.lt.s32.totalorder %s26, 0
        %s327 = scalar_select %p326, %s26, 0
        %s328 = smul.addr %s327, 2
        %s329 = scalar_lea.vmem %s3, %s328
        %p330 = pneg %p145
        %p331 = pneg %p142
        %p332 = scmp.lt.s32.totalorder %s26, 0
        %s333 = scalar_select %p332, %s26, 0
        %s334 = scalar_lea.vmem %s4, %s333
        %p335 = pneg %p171
        %p336 = pneg %p168
        %p337 = pneg %p201
        %p338 = pneg %p198
        %s339 = sand.u32 %s188, 1
        %s340 = scalar_lea.sflag [#allocation3], %s339
        %s341 = sand.u32 %s188, 1
        %s342 = smul.addr %s341, 128
        %s343 = scalar_lea.vmem [#allocation2], %s342
        %s344 = smul.u32 8, %s25
        %s345 = ssub.s32 10, %s344
        %p346 = scmp.lt.s32.totalorder %s345, 8
        %s347 = scalar_select %p346, %s345, 8
        %s348 = smul.u32 64, %s347
        %s349 = smul.u32 %s348, 2
        %p350 = scmp.lt.s32.totalorder %s24, 1
        %s351 = scalar_select %p350, %s24, 1
        %p352 = scmp.lt.s32.totalorder %s344, 9
        %s353 = scalar_select %p352, %s344, 9
        %s354 = smul.addr %s353, 2
        %s355 = smul.addr %s351, 20
        %s356 = sadd.s32 %s354, %s355
        %s357 = smul.addr %s356, 4
        %s358 = scalar_lea.vmem %s0, %s357
        %s359 = smul.u32 8, %s25
        %s360 = ssub.s32 10, %s359
        %p361 = scmp.lt.s32.totalorder %s360, 8
        %s362 = scalar_select %p361, %s360, 8
        %s363 = smul.u32 64, %s362
        %s364 = smul.u32 %s363, 2
        %s365 = sadd.s32 %s25, 1
        %s366 = smul.u32 %s365, 4
        %s367 = smul.u32 2, %s366
        %p368 = scmp.lt.s32.totalorder %s24, 1
        %s369 = scalar_select %p368, %s24, 1
        %p370 = scmp.lt.s32.totalorder %s367, 9
        %s371 = scalar_select %p370, %s367, 9
        %s372 = smul.addr %s371, 2
        %s373 = smul.addr %s369, 20
        %s374 = sadd.s32 %s372, %s373
        %s375 = smul.addr %s374, 4
        %s376 = scalar_lea.vmem %s1, %s375
        %s377 = sadd.s32 %s25, 1
        %s378 = smul.u32 %s377, 4
        %s379 = smul.u32 2, %s378
        %p380 = scmp.lt.s32.totalorder %s26, 0
        %s381 = scalar_select %p380, %s26, 0
        %s382 = smul.addr %s381, 2
        %s383 = scalar_lea.vmem %s2, %s382
        %p384 = scmp.lt.s32.totalorder %s26, 0
        %s385 = scalar_select %p384, %s26, 0
        %s386 = smul.addr %s385, 2
        %s387 = scalar_lea.vmem %s3, %s386
        %p388 = scmp.lt.s32.totalorder %s26, 0
        %s389 = scalar_select %p388, %s26, 0
        %s390 = scalar_lea.vmem %s4, %s389
        %s391 = smul.u32 8, %s25
        %v393 = vld [vmem:[%s358] sm:$0xf]
        %v394 = vld [vmem:[%s358 + $0x4] sm:$0x1]
        %v395 = vld [vmem:[%s358 + $0x8] sm:$0xf]
        %v396 = vld [vmem:[%s358 + $0xc] sm:$0x1]
        %v397 = vld [vmem:[%s358 + $0x10] sm:$0xf]
        %v398 = vld [vmem:[%s358 + $0x14] sm:$0x1]
        %v399 = vld [vmem:[%s358 + $0x18] sm:$0xf]
        %v400 = vld [vmem:[%s358 + $0x1c] sm:$0x1]
        %v401 = vld [vmem:[%s358 + $0x20] sm:$0xf]
        %v402 = vld [vmem:[%s358 + $0x24] sm:$0x1]
        %v403 = vld [vmem:[%s358 + $0x28] sm:$0xf]
        %v404 = vld [vmem:[%s358 + $0x2c] sm:$0x1]
        %v405 = vld [vmem:[%s358 + $0x30] sm:$0xf]
        %v406 = vld [vmem:[%s358 + $0x34] sm:$0x1]
        %v407 = vld [vmem:[%s358 + $0x38] sm:$0xf]
        %v408 = vld [vmem:[%s358 + $0x3c] sm:$0x1]
        %v409 = vld [vmem:[%s376] sm:$0xf]
        %v410 = vld [vmem:[%s376 + $0x4] sm:$0x1]
        %v411 = vld [vmem:[%s376 + $0x8] sm:$0xf]
        %v412 = vld [vmem:[%s376 + $0xc] sm:$0x1]
        %v413 = vld [vmem:[%s383] sm:$0x3]
        %s414 = scalar_lea.vmem %s383, 4
        %v415 = vld [vmem:[%s414] sm:$0x3]
        %v424 = vunpack.c.l.b16 %v395
        %v425 = vunpack.c.l.b16 %v397
        %v426 = vunpack.c.l.b16 %v399
        %v427 = vunpack.c.l.b16 %v401
        %v428 = vunpack.c.l.b16 %v403
        %v429 = vunpack.c.l.b16 %v405
        %v430 = vunpack.c.l.b16 %v407
        %v431 = vunpack.c.l.b16 %v409
        %v432 = vpack.c.b16 %v425, %v424
        %v433 = vpack.c.b16 %v427, %v426
        %v434 = vpack.c.b16 %v429, %v428
        %v435 = vpack.c.b16 %v431, %v430
        %vm436 = vcmask 31744
        %v438 = vsel %vm436, %v432, 0
        %v441 = vsel %vm436, %v433, 0
        %v444 = vsel %vm436, %v434, 0
        %v447 = vsel %vm436, %v435, 0
        %vm449 = vcmask 1041408
        %v451 = vsel %vm449, %v415, 0
        %453 = vmatprep.subr.bf16.mxu0 0
        %454 = vmatpush1.bf16.msra.mxu0 %v451
        %455 = vmatprep.subr.bf16.mxu0 0
        %456 = vmatpush1.bf16.msra.mxu0 0
        %457 = vmatprep.subr.bf16.mxu0 0
        %458 = vmatpush1.bf16.msra.mxu0 0
        %459 = vmatprep.subr.bf16.mxu0 0
        %460 = vmatpush1.bf16.msra.mxu0 0
        %461 = vmatprep.subr.bf16.mxu0 0
        %462 = vmatpush1.bf16.msra.mxu0 0
        %463 = vmatprep.subr.bf16.mxu0 0
        %464 = vmatpush1.bf16.msra.mxu0 0
        %465 = vmatprep.subr.bf16.mxu0 0
        %466 = vmatpush1.bf16.msra.mxu0 0
        %467 = vmatprep.subr.bf16.mxu0 0
        %468 = vmatpush1.bf16.msra.mxu0 0
        %469 = vmatprep.subr.bf16.mxu0 0
        %470 = vmatpush1.bf16.msra.mxu0 0
        %471 = vmatprep.subr.bf16.mxu0 0
        %472 = vmatpush1.bf16.msra.mxu0 0
        %473 = vmatprep.subr.bf16.mxu0 0
        %474 = vmatpush1.bf16.msra.mxu0 0
        %475 = vmatprep.subr.bf16.mxu0 0
        %476 = vmatpush1.bf16.msra.mxu0 0
        %477 = vmatprep.subr.bf16.mxu0 0
        %478 = vmatpush1.bf16.msra.mxu0 0
        %479 = vmatprep.subr.bf16.mxu0 0
        %480 = vmatpush1.bf16.msra.mxu0 0
        %481 = vmatprep.subr.bf16.mxu0 0
        %482 = vmatpush1.bf16.msra.mxu0 0
        %483 = vmatprep.subr.bf16.mxu0 0
        %484 = vmatpush1.bf16.msra.mxu0 0
        %485 = vmatprep.mubr.bf16.mxu0 0
        %486 = vmatmul.mubr.bf16.gmra.mrb[0].mxu0 %v438
        %v487 = vpop.f32.mrb[0].mxu0
        %v488 = vadd.f32 0.0, %v487
        %v489 = vpop.f32.mrb[0].mxu0
        %v490 = vpop.f32.mrb[0].mxu0
        %v491 = vadd.f32 0.0, %v490
        %v492 = vpop.f32.mrb[0].mxu0
        %493 = vmatprep.mubr.bf16.mxu0 0
        %494 = vmatmul.mubr.bf16.gmra.mrb[0].mxu0 %v441
        %v495 = vpop.f32.mrb[0].mxu0
        %v496 = vadd.f32 0.0, %v495
        %v497 = vpop.f32.mrb[0].mxu0
        %v498 = vpop.f32.mrb[0].mxu0
        %v499 = vadd.f32 0.0, %v498
        %v500 = vpop.f32.mrb[0].mxu0
        %501 = vmatprep.mubr.bf16.mxu0 0
        %502 = vmatmul.mubr.bf16.gmra.mrb[0].mxu0 %v444
        %v503 = vpop.f32.mrb[0].mxu0
        %v504 = vadd.f32 0.0, %v503
        %v505 = vpop.f32.mrb[0].mxu0
        %v506 = vpop.f32.mrb[0].mxu0
        %v507 = vadd.f32 0.0, %v506
        %v508 = vpop.f32.mrb[0].mxu0
        %509 = vmatprep.mubr.bf16.mxu0 0
        %510 = vmatmul.mubr.bf16.gmra.mrb[0].mxu0 %v447
        %v511 = vpop.f32.mrb[0].mxu0
        %v512 = vadd.f32 0.0, %v511
        %v513 = vpop.f32.mrb[0].mxu0
        %v514 = vpop.f32.mrb[0].mxu0
        %v515 = vadd.f32 0.0, %v514
        %v516 = vpop.f32.mrb[0].mxu0
        %517 = vdwg.mxu0
        %v519 = vunpack.c.l.b16 %v393
        %v520 = vpack.c.b16 %v424, %v519
        %v521 = vpack.c.b16 %v426, %v425
        %v522 = vpack.c.b16 %v428, %v427
        %v523 = vpack.c.b16 %v430, %v429
        %v525 = vsel %vm436, %v520, 0
        %v528 = vsel %vm436, %v521, 0
        %v531 = vsel %vm436, %v522, 0
        %v534 = vsel %vm436, %v523, 0
        %v537 = vsel %vm449, %v413, 0
        %539 = vmatprep.subr.bf16.mxu0 0
        %540 = vmatpush1.bf16.msra.mxu0 %v537
        %541 = vmatprep.subr.bf16.mxu0 0
        %542 = vmatpush1.bf16.msra.mxu0 0
        %543 = vmatprep.subr.bf16.mxu0 0
        %544 = vmatpush1.bf16.msra.mxu0 0
        %545 = vmatprep.subr.bf16.mxu0 0
        %546 = vmatpush1.bf16.msra.mxu0 0
        %547 = vmatprep.subr.bf16.mxu0 0
        %548 = vmatpush1.bf16.msra.mxu0 0
        %549 = vmatprep.subr.bf16.mxu0 0
        %550 = vmatpush1.bf16.msra.mxu0 0
        %551 = vmatprep.subr.bf16.mxu0 0
        %552 = vmatpush1.bf16.msra.mxu0 0
        %553 = vmatprep.subr.bf16.mxu0 0
        %554 = vmatpush1.bf16.msra.mxu0 0
        %555 = vmatprep.subr.bf16.mxu0 0
        %556 = vmatpush1.bf16.msra.mxu0 0
        %557 = vmatprep.subr.bf16.mxu0 0
        %558 = vmatpush1.bf16.msra.mxu0 0
        %559 = vmatprep.subr.bf16.mxu0 0
        %560 = vmatpush1.bf16.msra.mxu0 0
        %561 = vmatprep.subr.bf16.mxu0 0
        %562 = vmatpush1.bf16.msra.mxu0 0
        %563 = vmatprep.subr.bf16.mxu0 0
        %564 = vmatpush1.bf16.msra.mxu0 0
        %565 = vmatprep.subr.bf16.mxu0 0
        %566 = vmatpush1.bf16.msra.mxu0 0
        %567 = vmatprep.subr.bf16.mxu0 0
        %568 = vmatpush1.bf16.msra.mxu0 0
        %569 = vmatprep.subr.bf16.mxu0 0
        %570 = vmatpush1.bf16.msra.mxu0 0
        %571 = vmatprep.mubr.bf16.mxu0 0
        %572 = vmatmul.mubr.bf16.gmra.mrb[0].mxu0 %v525
        %v573 = vpop.f32.mrb[0].mxu0
        %v574 = vadd.f32 %v488, %v573
        %v575 = vpop.f32.mrb[0].mxu0
        %v576 = vpop.f32.mrb[0].mxu0
        %v577 = vadd.f32 %v491, %v576
        %v578 = vpop.f32.mrb[0].mxu0
        %579 = vmatprep.mubr.bf16.mxu0 0
        %580 = vmatmul.mubr.bf16.gmra.mrb[0].mxu0 %v528
        %v581 = vpop.f32.mrb[0].mxu0
        %v582 = vadd.f32 %v496, %v581
        %v583 = vpop.f32.mrb[0].mxu0
        %v584 = vpop.f32.mrb[0].mxu0
        %v585 = vadd.f32 %v499, %v584
        %v586 = vpop.f32.mrb[0].mxu0
        %587 = vmatprep.mubr.bf16.mxu0 0
        %588 = vmatmul.mubr.bf16.gmra.mrb[0].mxu0 %v531
        %v589 = vpop.f32.mrb[0].mxu0
        %v590 = vadd.f32 %v504, %v589
        %v591 = vpop.f32.mrb[0].mxu0
        %v592 = vpop.f32.mrb[0].mxu0
        %v593 = vadd.f32 %v507, %v592
        %v594 = vpop.f32.mrb[0].mxu0
        %595 = vmatprep.mubr.bf16.mxu0 0
        %596 = vmatmul.mubr.bf16.gmra.mrb[0].mxu0 %v534
        %v597 = vpop.f32.mrb[0].mxu0
        %v598 = vadd.f32 %v512, %v597
        %v599 = vpop.f32.mrb[0].mxu0
        %v600 = vpop.f32.mrb[0].mxu0
        %v601 = vadd.f32 %v515, %v600
        %v602 = vpop.f32.mrb[0].mxu0
        %603 = vdwg.mxu0
        %s604 = scalar_lea.vmem %s383, 16
        %v605 = vld [vmem:[%s604] sm:$0x3]
        %s606 = scalar_lea.vmem %s383, 20
        %v607 = vld [vmem:[%s606] sm:$0x3]
        %v609 = vunpack.c.l.b16 %v411
        %v610 = vpack.c.b16 %v609, %v431
        %v612 = vsel %vm436, %v610, 0
        %v615 = vsel %vm449, %v607, 0
        %617 = vmatprep.subr.bf16.mxu0 0
        %618 = vmatpush1.bf16.msra.mxu0 %v615
        %619 = vmatprep.subr.bf16.mxu0 0
        %620 = vmatpush1.bf16.msra.mxu0 0
        %621 = vmatprep.subr.bf16.mxu0 0
        %622 = vmatpush1.bf16.msra.mxu0 0
        %623 = vmatprep.subr.bf16.mxu0 0
        %624 = vmatpush1.bf16.msra.mxu0 0
        %625 = vmatprep.subr.bf16.mxu0 0
        %626 = vmatpush1.bf16.msra.mxu0 0
        %627 = vmatprep.subr.bf16.mxu0 0
        %628 = vmatpush1.bf16.msra.mxu0 0
        %629 = vmatprep.subr.bf16.mxu0 0
        %630 = vmatpush1.bf16.msra.mxu0 0
        %631 = vmatprep.subr.bf16.mxu0 0
        %632 = vmatpush1.bf16.msra.mxu0 0
        %633 = vmatprep.subr.bf16.mxu0 0
        %634 = vmatpush1.bf16.msra.mxu0 0
        %635 = vmatprep.subr.bf16.mxu0 0
        %636 = vmatpush1.bf16.msra.mxu0 0
        %637 = vmatprep.subr.bf16.mxu0 0
        %638 = vmatpush1.bf16.msra.mxu0 0
        %639 = vmatprep.subr.bf16.mxu0 0
        %640 = vmatpush1.bf16.msra.mxu0 0
        %641 = vmatprep.subr.bf16.mxu0 0
        %642 = vmatpush1.bf16.msra.mxu0 0
        %643 = vmatprep.subr.bf16.mxu0 0
        %644 = vmatpush1.bf16.msra.mxu0 0
        %645 = vmatprep.subr.bf16.mxu0 0
        %646 = vmatpush1.bf16.msra.mxu0 0
        %647 = vmatprep.subr.bf16.mxu0 0
        %648 = vmatpush1.bf16.msra.mxu0 0
        %649 = vmatprep.mubr.bf16.mxu0 0
        %650 = vmatmul.mubr.bf16.gmra.mrb[0].mxu0 %v528
        %v651 = vpop.f32.mrb[0].mxu0
        %v652 = vadd.f32 0.0, %v651
        %v653 = vpop.f32.mrb[0].mxu0
        %v654 = vpop.f32.mrb[0].mxu0
        %v655 = vadd.f32 0.0, %v654
        %v656 = vpop.f32.mrb[0].mxu0
        %657 = vmatprep.mubr.bf16.mxu0 0
        %658 = vmatmul.mubr.bf16.gmra.mrb[0].mxu0 %v531
        %v659 = vpop.f32.mrb[0].mxu0
        %v660 = vadd.f32 0.0, %v659
        %v661 = vpop.f32.mrb[0].mxu0
        %v662 = vpop.f32.mrb[0].mxu0
        %v663 = vadd.f32 0.0, %v662
        %v664 = vpop.f32.mrb[0].mxu0
        %665 = vmatprep.mubr.bf16.mxu0 0
        %666 = vmatmul.mubr.bf16.gmra.mrb[0].mxu0 %v534
        %v667 = vpop.f32.mrb[0].mxu0
        %v668 = vadd.f32 0.0, %v667
        %v669 = vpop.f32.mrb[0].mxu0
        %v670 = vpop.f32.mrb[0].mxu0
        %v671 = vadd.f32 0.0, %v670
        %v672 = vpop.f32.mrb[0].mxu0
        %673 = vmatprep.mubr.bf16.mxu0 0
        %674 = vmatmul.mubr.bf16.gmra.mrb[0].mxu0 %v612
        %v675 = vpop.f32.mrb[0].mxu0
        %v676 = vadd.f32 0.0, %v675
        %v677 = vpop.f32.mrb[0].mxu0
        %v678 = vpop.f32.mrb[0].mxu0
        %v679 = vadd.f32 0.0, %v678
        %v680 = vpop.f32.mrb[0].mxu0
        %681 = vdwg.mxu0
        %v683 = vsel %vm449, %v605, 0
        %685 = vmatprep.subr.bf16.mxu0 0
        %686 = vmatpush1.bf16.msra.mxu0 %v683
        %687 = vmatprep.subr.bf16.mxu0 0
        %688 = vmatpush1.bf16.msra.mxu0 0
        %689 = vmatprep.subr.bf16.mxu0 0
        %690 = vmatpush1.bf16.msra.mxu0 0
        %691 = vmatprep.subr.bf16.mxu0 0
        %692 = vmatpush1.bf16.msra.mxu0 0
        %693 = vmatprep.subr.bf16.mxu0 0
        %694 = vmatpush1.bf16.msra.mxu0 0
        %695 = vmatprep.subr.bf16.mxu0 0
        %696 = vmatpush1.bf16.msra.mxu0 0
        %697 = vmatprep.subr.bf16.mxu0 0
        %698 = vmatpush1.bf16.msra.mxu0 0
        %699 = vmatprep.subr.bf16.mxu0 0
        %700 = vmatpush1.bf16.msra.mxu0 0
        %701 = vmatprep.subr.bf16.mxu0 0
        %702 = vmatpush1.bf16.msra.mxu0 0
        %703 = vmatprep.subr.bf16.mxu0 0
        %704 = vmatpush1.bf16.msra.mxu0 0
        %705 = vmatprep.subr.bf16.mxu0 0
        %706 = vmatpush1.bf16.msra.mxu0 0
        %707 = vmatprep.subr.bf16.mxu0 0
        %708 = vmatpush1.bf16.msra.mxu0 0
        %709 = vmatprep.subr.bf16.mxu0 0
        %710 = vmatpush1.bf16.msra.mxu0 0
        %711 = vmatprep.subr.bf16.mxu0 0
        %712 = vmatpush1.bf16.msra.mxu0 0
        %713 = vmatprep.subr.bf16.mxu0 0
        %714 = vmatpush1.bf16.msra.mxu0 0
        %715 = vmatprep.subr.bf16.mxu0 0
        %716 = vmatpush1.bf16.msra.mxu0 0
        %717 = vmatprep.mubr.bf16.mxu0 0
        %718 = vmatmul.mubr.bf16.gmra.mrb[0].mxu0 %v438
        %v719 = vpop.f32.mrb[0].mxu0
        %v720 = vadd.f32 %v652, %v719
        %v721 = vpop.f32.mrb[0].mxu0
        %v722 = vpop.f32.mrb[0].mxu0
        %v723 = vadd.f32 %v655, %v722
        %v724 = vpop.f32.mrb[0].mxu0
        %725 = vmatprep.mubr.bf16.mxu0 0
        %726 = vmatmul.mubr.bf16.gmra.mrb[0].mxu0 %v441
        %v727 = vpop.f32.mrb[0].mxu0
        %v728 = vadd.f32 %v660, %v727
        %v729 = vpop.f32.mrb[0].mxu0
        %v730 = vpop.f32.mrb[0].mxu0
        %v731 = vadd.f32 %v663, %v730
        %v732 = vpop.f32.mrb[0].mxu0
        %733 = vmatprep.mubr.bf16.mxu0 0
        %734 = vmatmul.mubr.bf16.gmra.mrb[0].mxu0 %v444
        %v735 = vpop.f32.mrb[0].mxu0
        %v736 = vadd.f32 %v668, %v735
        %v737 = vpop.f32.mrb[0].mxu0
        %v738 = vpop.f32.mrb[0].mxu0
        %v739 = vadd.f32 %v671, %v738
        %v740 = vpop.f32.mrb[0].mxu0
        %741 = vmatprep.mubr.bf16.mxu0 0
        %742 = vmatmul.mubr.bf16.gmra.mrb[0].mxu0 %v447
        %v743 = vpop.f32.mrb[0].mxu0
        %v744 = vadd.f32 %v676, %v743
        %v745 = vpop.f32.mrb[0].mxu0
        %v746 = vpop.f32.mrb[0].mxu0
        %v747 = vadd.f32 %v679, %v746
        %v748 = vpop.f32.mrb[0].mxu0
        %749 = vdwg.mxu0
        %vm750 = vsmask.f32 3328
        %vm751 = vsmask.f32 7440
        %vm752 = vmor %vm750, %vm751
        %v754 = vshrl.u32 %v393, 16
        %v756 = vrot.slane %v754, 4
        %v757 = vshll.u32 %v393, 16
        %v759 = vrot.slane %v757, 5
        %v760 = vor.u32 %v756, %v759
        %v761 = vrot.slane %v760, 4
        %v763 = vshll.u32 %v394, 16
        %v765 = vrot.slane %v763, 5
        %v766 = vsel %vm752, %v761, %v765
        %v768 = vshrl.u32 %v395, 16
        %v770 = vrot.slane %v768, 4
        %v771 = vshll.u32 %v395, 16
        %v773 = vrot.slane %v771, 5
        %v774 = vor.u32 %v770, %v773
        %v775 = vrot.slane %v774, 4
        %v777 = vshll.u32 %v396, 16
        %v779 = vrot.slane %v777, 5
        %v780 = vsel %vm752, %v775, %v779
        %v782 = vshrl.u32 %v397, 16
        %v784 = vrot.slane %v782, 4
        %v785 = vshll.u32 %v397, 16
        %v787 = vrot.slane %v785, 5
        %v788 = vor.u32 %v784, %v787
        %v789 = vrot.slane %v788, 4
        %v791 = vshll.u32 %v398, 16
        %v793 = vrot.slane %v791, 5
        %v794 = vsel %vm752, %v789, %v793
        %v796 = vshrl.u32 %v399, 16
        %v798 = vrot.slane %v796, 4
        %v799 = vshll.u32 %v399, 16
        %v801 = vrot.slane %v799, 5
        %v802 = vor.u32 %v798, %v801
        %v803 = vrot.slane %v802, 4
        %v805 = vshll.u32 %v400, 16
        %v807 = vrot.slane %v805, 5
        %v808 = vsel %vm752, %v803, %v807
        %v810 = vshrl.u32 %v401, 16
        %v812 = vrot.slane %v810, 4
        %v813 = vshll.u32 %v401, 16
        %v815 = vrot.slane %v813, 5
        %v816 = vor.u32 %v812, %v815
        %v817 = vrot.slane %v816, 4
        %v819 = vshll.u32 %v402, 16
        %v821 = vrot.slane %v819, 5
        %v822 = vsel %vm752, %v817, %v821
        %v824 = vshrl.u32 %v403, 16
        %v826 = vrot.slane %v824, 4
        %v827 = vshll.u32 %v403, 16
        %v829 = vrot.slane %v827, 5
        %v830 = vor.u32 %v826, %v829
        %v831 = vrot.slane %v830, 4
        %v833 = vshll.u32 %v404, 16
        %v835 = vrot.slane %v833, 5
        %v836 = vsel %vm752, %v831, %v835
        %v838 = vshrl.u32 %v405, 16
        %v840 = vrot.slane %v838, 4
        %v841 = vshll.u32 %v405, 16
        %v843 = vrot.slane %v841, 5
        %v844 = vor.u32 %v840, %v843
        %v845 = vrot.slane %v844, 4
        %v847 = vshll.u32 %v406, 16
        %v849 = vrot.slane %v847, 5
        %v850 = vsel %vm752, %v845, %v849
        %v852 = vshrl.u32 %v407, 16
        %v854 = vrot.slane %v852, 4
        %v855 = vshll.u32 %v407, 16
        %v857 = vrot.slane %v855, 5
        %v858 = vor.u32 %v854, %v857
        %v859 = vrot.slane %v858, 4
        %v861 = vshll.u32 %v408, 16
        %v863 = vrot.slane %v861, 5
        %v864 = vsel %vm752, %v859, %v863
        %s865 = scalar_lea.vmem %s383, 2
        %v866 = vld [vmem:[%s865] sm:$0x3]
        %v867 = vunpack.c.l.b16 %v766
        %v868 = vunpack.c.l.b16 %v780
        %v869 = vunpack.c.l.b16 %v794
        %v870 = vunpack.c.l.b16 %v808
        %v871 = vunpack.c.l.b16 %v822
        %v872 = vunpack.c.l.b16 %v836
        %v873 = vunpack.c.l.b16 %v850
        %v874 = vunpack.c.l.b16 %v864
        %v875 = vpack.c.b16 %v868, %v867
        %v876 = vpack.c.b16 %v870, %v869
        %v877 = vpack.c.b16 %v872, %v871
        %v878 = vpack.c.b16 %v874, %v873
        %v880 = vsel %vm436, %v875, 0
        %v883 = vsel %vm436, %v876, 0
        %v886 = vsel %vm436, %v877, 0
        %v889 = vsel %vm436, %v878, 0
        %v892 = vsel %vm449, %v866, 0
        %894 = vmatprep.subr.bf16.mxu0 0
        %895 = vmatpush1.bf16.msra.mxu0 %v892
        %896 = vmatprep.subr.bf16.mxu0 0
        %897 = vmatpush1.bf16.msra.mxu0 0
        %898 = vmatprep.subr.bf16.mxu0 0
        %899 = vmatpush1.bf16.msra.mxu0 0
        %900 = vmatprep.subr.bf16.mxu0 0
        %901 = vmatpush1.bf16.msra.mxu0 0
        %902 = vmatprep.subr.bf16.mxu0 0
        %903 = vmatpush1.bf16.msra.mxu0 0
        %904 = vmatprep.subr.bf16.mxu0 0
        %905 = vmatpush1.bf16.msra.mxu0 0
        %906 = vmatprep.subr.bf16.mxu0 0
        %907 = vmatpush1.bf16.msra.mxu0 0
        %908 = vmatprep.subr.bf16.mxu0 0
        %909 = vmatpush1.bf16.msra.mxu0 0
        %910 = vmatprep.subr.bf16.mxu0 0
        %911 = vmatpush1.bf16.msra.mxu0 0
        %912 = vmatprep.subr.bf16.mxu0 0
        %913 = vmatpush1.bf16.msra.mxu0 0
        %914 = vmatprep.subr.bf16.mxu0 0
        %915 = vmatpush1.bf16.msra.mxu0 0
        %916 = vmatprep.subr.bf16.mxu0 0
        %917 = vmatpush1.bf16.msra.mxu0 0
        %918 = vmatprep.subr.bf16.mxu0 0
        %919 = vmatpush1.bf16.msra.mxu0 0
        %920 = vmatprep.subr.bf16.mxu0 0
        %921 = vmatpush1.bf16.msra.mxu0 0
        %922 = vmatprep.subr.bf16.mxu0 0
        %923 = vmatpush1.bf16.msra.mxu0 0
        %924 = vmatprep.subr.bf16.mxu0 0
        %925 = vmatpush1.bf16.msra.mxu0 0
        %926 = vmatprep.mubr.bf16.mxu0 0
        %927 = vmatmul.mubr.bf16.gmra.mrb[0].mxu0 %v880
        %v928 = vpop.f32.mrb[0].mxu0
        %v929 = vadd.f32 0.0, %v928
        %v930 = vpop.f32.mrb[0].mxu0
        %v931 = vpop.f32.mrb[0].mxu0
        %v932 = vadd.f32 0.0, %v931
        %v933 = vpop.f32.mrb[0].mxu0
        %934 = vmatprep.mubr.bf16.mxu0 0
        %935 = vmatmul.mubr.bf16.gmra.mrb[0].mxu0 %v883
        %v936 = vpop.f32.mrb[0].mxu0
        %v937 = vadd.f32 0.0, %v936
        %v938 = vpop.f32.mrb[0].mxu0
        %v939 = vpop.f32.mrb[0].mxu0
        %v940 = vadd.f32 0.0, %v939
        %v941 = vpop.f32.mrb[0].mxu0
        %942 = vmatprep.mubr.bf16.mxu0 0
        %943 = vmatmul.mubr.bf16.gmra.mrb[0].mxu0 %v886
        %v944 = vpop.f32.mrb[0].mxu0
        %v945 = vadd.f32 0.0, %v944
        %v946 = vpop.f32.mrb[0].mxu0
        %v947 = vpop.f32.mrb[0].mxu0
        %v948 = vadd.f32 0.0, %v947
        %v949 = vpop.f32.mrb[0].mxu0
        %950 = vmatprep.mubr.bf16.mxu0 0
        %951 = vmatmul.mubr.bf16.gmra.mrb[0].mxu0 %v889
        %v952 = vpop.f32.mrb[0].mxu0
        %v953 = vadd.f32 0.0, %v952
        %v954 = vpop.f32.mrb[0].mxu0
        %v955 = vpop.f32.mrb[0].mxu0
        %v956 = vadd.f32 0.0, %v955
        %v957 = vpop.f32.mrb[0].mxu0
        %958 = vdwg.mxu0
        %v959 = vadd.f32 %v574, %v929
        %v960 = vadd.f32 %v577, %v932
        %v961 = vadd.f32 %v582, %v937
        %v962 = vadd.f32 %v585, %v940
        %v963 = vadd.f32 %v590, %v945
        %v964 = vadd.f32 %v593, %v948
        %v965 = vadd.f32 %v598, %v953
        %v966 = vadd.f32 %v601, %v956
        %s967 = scalar_lea.vmem %s383, 8
        %v968 = vld [vmem:[%s967] sm:$0x3]
        %v970 = vshrl.u32 %v409, 16
        %v972 = vrot.slane %v970, 4
        %v973 = vshll.u32 %v409, 16
        %v975 = vrot.slane %v973, 5
        %v976 = vor.u32 %v972, %v975
        %v977 = vrot.slane %v976, 4
        %v979 = vshll.u32 %v410, 16
        %v981 = vrot.slane %v979, 5
        %v982 = vsel %vm752, %v977, %v981
        %s983 = scalar_lea.vmem %s383, 6
        %v984 = vld [vmem:[%s983] sm:$0x3]
        %v985 = vunpack.c.l.b16 %v982
        %v986 = vpack.c.b16 %v869, %v868
        %v987 = vpack.c.b16 %v871, %v870
        %v988 = vpack.c.b16 %v873, %v872
        %v989 = vpack.c.b16 %v985, %v874
        %v991 = vsel %vm436, %v986, 0
        %v994 = vsel %vm436, %v987, 0
        %v997 = vsel %vm436, %v988, 0
        %v1000 = vsel %vm436, %v989, 0
        %v1003 = vsel %vm449, %v984, 0
        %1005 = vmatprep.subr.bf16.mxu0 0
        %1006 = vmatpush1.bf16.msra.mxu0 %v1003
        %1007 = vmatprep.subr.bf16.mxu0 0
        %1008 = vmatpush1.bf16.msra.mxu0 0
        %1009 = vmatprep.subr.bf16.mxu0 0
        %1010 = vmatpush1.bf16.msra.mxu0 0
        %1011 = vmatprep.subr.bf16.mxu0 0
        %1012 = vmatpush1.bf16.msra.mxu0 0
        %1013 = vmatprep.subr.bf16.mxu0 0
        %1014 = vmatpush1.bf16.msra.mxu0 0
        %1015 = vmatprep.subr.bf16.mxu0 0
        %1016 = vmatpush1.bf16.msra.mxu0 0
        %1017 = vmatprep.subr.bf16.mxu0 0
        %1018 = vmatpush1.bf16.msra.mxu0 0
        %1019 = vmatprep.subr.bf16.mxu0 0
        %1020 = vmatpush1.bf16.msra.mxu0 0
        %1021 = vmatprep.subr.bf16.mxu0 0
        %1022 = vmatpush1.bf16.msra.mxu0 0
        %1023 = vmatprep.subr.bf16.mxu0 0
        %1024 = vmatpush1.bf16.msra.mxu0 0
        %1025 = vmatprep.subr.bf16.mxu0 0
        %1026 = vmatpush1.bf16.msra.mxu0 0
        %1027 = vmatprep.subr.bf16.mxu0 0
        %1028 = vmatpush1.bf16.msra.mxu0 0
        %1029 = vmatprep.subr.bf16.mxu0 0
        %1030 = vmatpush1.bf16.msra.mxu0 0
        %1031 = vmatprep.subr.bf16.mxu0 0
        %1032 = vmatpush1.bf16.msra.mxu0 0
        %1033 = vmatprep.subr.bf16.mxu0 0
        %1034 = vmatpush1.bf16.msra.mxu0 0
        %1035 = vmatprep.subr.bf16.mxu0 0
        %1036 = vmatpush1.bf16.msra.mxu0 0
        %1037 = vmatprep.mubr.bf16.mxu0 0
        %1038 = vmatmul.mubr.bf16.gmra.mrb[0].mxu0 %v991
        %v1039 = vpop.f32.mrb[0].mxu0
        %v1040 = vadd.f32 0.0, %v1039
        %v1041 = vpop.f32.mrb[0].mxu0
        %v1042 = vpop.f32.mrb[0].mxu0
        %v1043 = vadd.f32 0.0, %v1042
        %v1044 = vpop.f32.mrb[0].mxu0
        %1045 = vmatprep.mubr.bf16.mxu0 0
        %1046 = vmatmul.mubr.bf16.gmra.mrb[0].mxu0 %v994
        %v1047 = vpop.f32.mrb[0].mxu0
        %v1048 = vadd.f32 0.0, %v1047
        %v1049 = vpop.f32.mrb[0].mxu0
        %v1050 = vpop.f32.mrb[0].mxu0
        %v1051 = vadd.f32 0.0, %v1050
        %v1052 = vpop.f32.mrb[0].mxu0
        %1053 = vmatprep.mubr.bf16.mxu0 0
        %1054 = vmatmul.mubr.bf16.gmra.mrb[0].mxu0 %v997
        %v1055 = vpop.f32.mrb[0].mxu0
        %v1056 = vadd.f32 0.0, %v1055
        %v1057 = vpop.f32.mrb[0].mxu0
        %v1058 = vpop.f32.mrb[0].mxu0
        %v1059 = vadd.f32 0.0, %v1058
        %v1060 = vpop.f32.mrb[0].mxu0
        %1061 = vmatprep.mubr.bf16.mxu0 0
        %1062 = vmatmul.mubr.bf16.gmra.mrb[0].mxu0 %v1000
        %v1063 = vpop.f32.mrb[0].mxu0
        %v1064 = vadd.f32 0.0, %v1063
        %v1065 = vpop.f32.mrb[0].mxu0
        %v1066 = vpop.f32.mrb[0].mxu0
        %v1067 = vadd.f32 0.0, %v1066
        %v1068 = vpop.f32.mrb[0].mxu0
        %1069 = vdwg.mxu0
        %v1070 = vadd.f32 %v959, %v1040
        %v1071 = vadd.f32 %v960, %v1043
        %v1072 = vadd.f32 %v961, %v1048
        %v1073 = vadd.f32 %v962, %v1051
        %v1074 = vadd.f32 %v963, %v1056
        %v1075 = vadd.f32 %v964, %v1059
        %v1076 = vadd.f32 %v965, %v1064
        %v1077 = vadd.f32 %v966, %v1067
        %s1078 = scalar_lea.vmem %s383, 12
        %v1079 = vld [vmem:[%s1078] sm:$0x3]
        %v1081 = vsel %vm449, %v1079, 0
        %1083 = vmatprep.subr.bf16.mxu0 0
        %1084 = vmatpush1.bf16.msra.mxu0 %v1081
        %1085 = vmatprep.subr.bf16.mxu0 0
        %1086 = vmatpush1.bf16.msra.mxu0 0
        %1087 = vmatprep.subr.bf16.mxu0 0
        %1088 = vmatpush1.bf16.msra.mxu0 0
        %1089 = vmatprep.subr.bf16.mxu0 0
        %1090 = vmatpush1.bf16.msra.mxu0 0
        %1091 = vmatprep.subr.bf16.mxu0 0
        %1092 = vmatpush1.bf16.msra.mxu0 0
        %1093 = vmatprep.subr.bf16.mxu0 0
        %1094 = vmatpush1.bf16.msra.mxu0 0
        %1095 = vmatprep.subr.bf16.mxu0 0
        %1096 = vmatpush1.bf16.msra.mxu0 0
        %1097 = vmatprep.subr.bf16.mxu0 0
        %1098 = vmatpush1.bf16.msra.mxu0 0
        %1099 = vmatprep.subr.bf16.mxu0 0
        %1100 = vmatpush1.bf16.msra.mxu0 0
        %1101 = vmatprep.subr.bf16.mxu0 0
        %1102 = vmatpush1.bf16.msra.mxu0 0
        %1103 = vmatprep.subr.bf16.mxu0 0
        %1104 = vmatpush1.bf16.msra.mxu0 0
        %1105 = vmatprep.subr.bf16.mxu0 0
        %1106 = vmatpush1.bf16.msra.mxu0 0
        %1107 = vmatprep.subr.bf16.mxu0 0
        %1108 = vmatpush1.bf16.msra.mxu0 0
        %1109 = vmatprep.subr.bf16.mxu0 0
        %1110 = vmatpush1.bf16.msra.mxu0 0
        %1111 = vmatprep.subr.bf16.mxu0 0
        %1112 = vmatpush1.bf16.msra.mxu0 0
        %1113 = vmatprep.subr.bf16.mxu0 0
        %1114 = vmatpush1.bf16.msra.mxu0 0
        %1115 = vmatprep.mubr.bf16.mxu0 0
        %1116 = vmatmul.mubr.bf16.gmra.mrb[0].mxu0 %v991
        %v1117 = vpop.f32.mrb[0].mxu0
        %v1118 = vadd.f32 0.0, %v1117
        %v1119 = vpop.f32.mrb[0].mxu0
        %v1120 = vpop.f32.mrb[0].mxu0
        %v1121 = vadd.f32 0.0, %v1120
        %v1122 = vpop.f32.mrb[0].mxu0
        %1123 = vmatprep.mubr.bf16.mxu0 0
        %1124 = vmatmul.mubr.bf16.gmra.mrb[0].mxu0 %v994
        %v1125 = vpop.f32.mrb[0].mxu0
        %v1126 = vadd.f32 0.0, %v1125
        %v1127 = vpop.f32.mrb[0].mxu0
        %v1128 = vpop.f32.mrb[0].mxu0
        %v1129 = vadd.f32 0.0, %v1128
        %v1130 = vpop.f32.mrb[0].mxu0
        %1131 = vmatprep.mubr.bf16.mxu0 0
        %1132 = vmatmul.mubr.bf16.gmra.mrb[0].mxu0 %v997
        %v1133 = vpop.f32.mrb[0].mxu0
        %v1134 = vadd.f32 0.0, %v1133
        %v1135 = vpop.f32.mrb[0].mxu0
        %v1136 = vpop.f32.mrb[0].mxu0
        %v1137 = vadd.f32 0.0, %v1136
        %v1138 = vpop.f32.mrb[0].mxu0
        %1139 = vmatprep.mubr.bf16.mxu0 0
        %1140 = vmatmul.mubr.bf16.gmra.mrb[0].mxu0 %v1000
        %v1141 = vpop.f32.mrb[0].mxu0
        %v1142 = vadd.f32 0.0, %v1141
        %v1143 = vpop.f32.mrb[0].mxu0
        %v1144 = vpop.f32.mrb[0].mxu0
        %v1145 = vadd.f32 0.0, %v1144
        %v1146 = vpop.f32.mrb[0].mxu0
        %1147 = vdwg.mxu0
        %v1149 = vsel %vm449, %v968, 0
        %1151 = vmatprep.subr.bf16.mxu0 0
        %1152 = vmatpush1.bf16.msra.mxu0 %v1149
        %1153 = vmatprep.subr.bf16.mxu0 0
        %1154 = vmatpush1.bf16.msra.mxu0 0
        %1155 = vmatprep.subr.bf16.mxu0 0
        %1156 = vmatpush1.bf16.msra.mxu0 0
        %1157 = vmatprep.subr.bf16.mxu0 0
        %1158 = vmatpush1.bf16.msra.mxu0 0
        %1159 = vmatprep.subr.bf16.mxu0 0
        %1160 = vmatpush1.bf16.msra.mxu0 0
        %1161 = vmatprep.subr.bf16.mxu0 0
        %1162 = vmatpush1.bf16.msra.mxu0 0
        %1163 = vmatprep.subr.bf16.mxu0 0
        %1164 = vmatpush1.bf16.msra.mxu0 0
        %1165 = vmatprep.subr.bf16.mxu0 0
        %1166 = vmatpush1.bf16.msra.mxu0 0
        %1167 = vmatprep.subr.bf16.mxu0 0
        %1168 = vmatpush1.bf16.msra.mxu0 0
        %1169 = vmatprep.subr.bf16.mxu0 0
        %1170 = vmatpush1.bf16.msra.mxu0 0
        %1171 = vmatprep.subr.bf16.mxu0 0
        %1172 = vmatpush1.bf16.msra.mxu0 0
        %1173 = vmatprep.subr.bf16.mxu0 0
        %1174 = vmatpush1.bf16.msra.mxu0 0
        %1175 = vmatprep.subr.bf16.mxu0 0
        %1176 = vmatpush1.bf16.msra.mxu0 0
        %1177 = vmatprep.subr.bf16.mxu0 0
        %1178 = vmatpush1.bf16.msra.mxu0 0
        %1179 = vmatprep.subr.bf16.mxu0 0
        %1180 = vmatpush1.bf16.msra.mxu0 0
        %1181 = vmatprep.subr.bf16.mxu0 0
        %1182 = vmatpush1.bf16.msra.mxu0 0
        %1183 = vmatprep.mubr.bf16.mxu0 0
        %1184 = vmatmul.mubr.bf16.gmra.mrb[0].mxu0 %v880
        %v1185 = vpop.f32.mrb[0].mxu0
        %v1186 = vadd.f32 %v1118, %v1185
        %v1187 = vpop.f32.mrb[0].mxu0
        %v1188 = vpop.f32.mrb[0].mxu0
        %v1189 = vadd.f32 %v1121, %v1188
        %v1190 = vpop.f32.mrb[0].mxu0
        %1191 = vmatprep.mubr.bf16.mxu0 0
        %1192 = vmatmul.mubr.bf16.gmra.mrb[0].mxu0 %v883
        %v1193 = vpop.f32.mrb[0].mxu0
        %v1194 = vadd.f32 %v1126, %v1193
        %v1195 = vpop.f32.mrb[0].mxu0
        %v1196 = vpop.f32.mrb[0].mxu0
        %v1197 = vadd.f32 %v1129, %v1196
        %v1198 = vpop.f32.mrb[0].mxu0
        %1199 = vmatprep.mubr.bf16.mxu0 0
        %1200 = vmatmul.mubr.bf16.gmra.mrb[0].mxu0 %v886
        %v1201 = vpop.f32.mrb[0].mxu0
        %v1202 = vadd.f32 %v1134, %v1201
        %v1203 = vpop.f32.mrb[0].mxu0
        %v1204 = vpop.f32.mrb[0].mxu0
        %v1205 = vadd.f32 %v1137, %v1204
        %v1206 = vpop.f32.mrb[0].mxu0
        %1207 = vmatprep.mubr.bf16.mxu0 0
        %1208 = vmatmul.mubr.bf16.gmra.mrb[0].mxu0 %v889
        %v1209 = vpop.f32.mrb[0].mxu0
        %v1210 = vadd.f32 %v1142, %v1209
        %v1211 = vpop.f32.mrb[0].mxu0
        %v1212 = vpop.f32.mrb[0].mxu0
        %v1213 = vadd.f32 %v1145, %v1212
        %v1214 = vpop.f32.mrb[0].mxu0
        %1215 = vdwg.mxu0
        %s1216 = scalar_lea.vmem %s383, 18
        %v1217 = vld [vmem:[%s1216] sm:$0x3]
        %v1219 = vsel %vm449, %v1217, 0
        %1221 = vmatprep.subr.bf16.mxu0 0
        %1222 = vmatpush1.bf16.msra.mxu0 %v1219
        %1223 = vmatprep.subr.bf16.mxu0 0
        %1224 = vmatpush1.bf16.msra.mxu0 0
        %1225 = vmatprep.subr.bf16.mxu0 0
        %1226 = vmatpush1.bf16.msra.mxu0 0
        %1227 = vmatprep.subr.bf16.mxu0 0
        %1228 = vmatpush1.bf16.msra.mxu0 0
        %1229 = vmatprep.subr.bf16.mxu0 0
        %1230 = vmatpush1.bf16.msra.mxu0 0
        %1231 = vmatprep.subr.bf16.mxu0 0
        %1232 = vmatpush1.bf16.msra.mxu0 0
        %1233 = vmatprep.subr.bf16.mxu0 0
        %1234 = vmatpush1.bf16.msra.mxu0 0
        %1235 = vmatprep.subr.bf16.mxu0 0
        %1236 = vmatpush1.bf16.msra.mxu0 0
        %1237 = vmatprep.subr.bf16.mxu0 0
        %1238 = vmatpush1.bf16.msra.mxu0 0
        %1239 = vmatprep.subr.bf16.mxu0 0
        %1240 = vmatpush1.bf16.msra.mxu0 0
        %1241 = vmatprep.subr.bf16.mxu0 0
        %1242 = vmatpush1.bf16.msra.mxu0 0
        %1243 = vmatprep.subr.bf16.mxu0 0
        %1244 = vmatpush1.bf16.msra.mxu0 0
        %1245 = vmatprep.subr.bf16.mxu0 0
        %1246 = vmatpush1.bf16.msra.mxu0 0
        %1247 = vmatprep.subr.bf16.mxu0 0
        %1248 = vmatpush1.bf16.msra.mxu0 0
        %1249 = vmatprep.subr.bf16.mxu0 0
        %1250 = vmatpush1.bf16.msra.mxu0 0
        %1251 = vmatprep.subr.bf16.mxu0 0
        %1252 = vmatpush1.bf16.msra.mxu0 0
        %1253 = vmatprep.mubr.bf16.mxu0 0
        %1254 = vmatmul.mubr.bf16.gmra.mrb[0].mxu0 %v991
        %v1255 = vpop.f32.mrb[0].mxu0
        %v1256 = vadd.f32 0.0, %v1255
        %v1257 = vpop.f32.mrb[0].mxu0
        %v1258 = vpop.f32.mrb[0].mxu0
        %v1259 = vadd.f32 0.0, %v1258
        %v1260 = vpop.f32.mrb[0].mxu0
        %1261 = vmatprep.mubr.bf16.mxu0 0
        %1262 = vmatmul.mubr.bf16.gmra.mrb[0].mxu0 %v994
        %v1263 = vpop.f32.mrb[0].mxu0
        %v1264 = vadd.f32 0.0, %v1263
        %v1265 = vpop.f32.mrb[0].mxu0
        %v1266 = vpop.f32.mrb[0].mxu0
        %v1267 = vadd.f32 0.0, %v1266
        %v1268 = vpop.f32.mrb[0].mxu0
        %1269 = vmatprep.mubr.bf16.mxu0 0
        %1270 = vmatmul.mubr.bf16.gmra.mrb[0].mxu0 %v997
        %v1271 = vpop.f32.mrb[0].mxu0
        %v1272 = vadd.f32 0.0, %v1271
        %v1273 = vpop.f32.mrb[0].mxu0
        %v1274 = vpop.f32.mrb[0].mxu0
        %v1275 = vadd.f32 0.0, %v1274
        %v1276 = vpop.f32.mrb[0].mxu0
        %1277 = vmatprep.mubr.bf16.mxu0 0
        %1278 = vmatmul.mubr.bf16.gmra.mrb[0].mxu0 %v1000
        %v1279 = vpop.f32.mrb[0].mxu0
        %v1280 = vadd.f32 0.0, %v1279
        %v1281 = vpop.f32.mrb[0].mxu0
        %v1282 = vpop.f32.mrb[0].mxu0
        %v1283 = vadd.f32 0.0, %v1282
        %v1284 = vpop.f32.mrb[0].mxu0
        %1285 = vdwg.mxu0
        %v1286 = vadd.f32 %v720, %v1256
        %v1287 = vadd.f32 %v723, %v1259
        %v1288 = vadd.f32 %v728, %v1264
        %v1289 = vadd.f32 %v731, %v1267
        %v1290 = vadd.f32 %v736, %v1272
        %v1291 = vadd.f32 %v739, %v1275
        %v1292 = vadd.f32 %v744, %v1280
        %v1293 = vadd.f32 %v747, %v1283
        %s1294 = scalar_lea.vmem %s383, 24
        %v1295 = vld [vmem:[%s1294] sm:$0x3]
        %v1297 = vshrl.u32 %v411, 16
        %v1299 = vrot.slane %v1297, 4
        %v1300 = vshll.u32 %v411, 16
        %v1302 = vrot.slane %v1300, 5
        %v1303 = vor.u32 %v1299, %v1302
        %v1304 = vrot.slane %v1303, 4
        %v1306 = vshll.u32 %v412, 16
        %v1308 = vrot.slane %v1306, 5
        %v1309 = vsel %vm752, %v1304, %v1308
        %s1310 = scalar_lea.vmem %s383, 22
        %v1311 = vld [vmem:[%s1310] sm:$0x3]
        %v1312 = vunpack.c.l.b16 %v1309
        %v1313 = vpack.c.b16 %v1312, %v985
        %v1315 = vsel %vm436, %v1313, 0
        %v1318 = vsel %vm449, %v1311, 0
        %1320 = vmatprep.subr.bf16.mxu0 0
        %1321 = vmatpush1.bf16.msra.mxu0 %v1318
        %1322 = vmatprep.subr.bf16.mxu0 0
        %1323 = vmatpush1.bf16.msra.mxu0 0
        %1324 = vmatprep.subr.bf16.mxu0 0
        %1325 = vmatpush1.bf16.msra.mxu0 0
        %1326 = vmatprep.subr.bf16.mxu0 0
        %1327 = vmatpush1.bf16.msra.mxu0 0
        %1328 = vmatprep.subr.bf16.mxu0 0
        %1329 = vmatpush1.bf16.msra.mxu0 0
        %1330 = vmatprep.subr.bf16.mxu0 0
        %1331 = vmatpush1.bf16.msra.mxu0 0
        %1332 = vmatprep.subr.bf16.mxu0 0
        %1333 = vmatpush1.bf16.msra.mxu0 0
        %1334 = vmatprep.subr.bf16.mxu0 0
        %1335 = vmatpush1.bf16.msra.mxu0 0
        %1336 = vmatprep.subr.bf16.mxu0 0
        %1337 = vmatpush1.bf16.msra.mxu0 0
        %1338 = vmatprep.subr.bf16.mxu0 0
        %1339 = vmatpush1.bf16.msra.mxu0 0
        %1340 = vmatprep.subr.bf16.mxu0 0
        %1341 = vmatpush1.bf16.msra.mxu0 0
        %1342 = vmatprep.subr.bf16.mxu0 0
        %1343 = vmatpush1.bf16.msra.mxu0 0
        %1344 = vmatprep.subr.bf16.mxu0 0
        %1345 = vmatpush1.bf16.msra.mxu0 0
        %1346 = vmatprep.subr.bf16.mxu0 0
        %1347 = vmatpush1.bf16.msra.mxu0 0
        %1348 = vmatprep.subr.bf16.mxu0 0
        %1349 = vmatpush1.bf16.msra.mxu0 0
        %1350 = vmatprep.subr.bf16.mxu0 0
        %1351 = vmatpush1.bf16.msra.mxu0 0
        %1352 = vmatprep.mubr.bf16.mxu0 0
        %1353 = vmatmul.mubr.bf16.gmra.mrb[0].mxu0 %v883
        %v1354 = vpop.f32.mrb[0].mxu0
        %v1355 = vadd.f32 0.0, %v1354
        %v1356 = vpop.f32.mrb[0].mxu0
        %v1357 = vpop.f32.mrb[0].mxu0
        %v1358 = vadd.f32 0.0, %v1357
        %v1359 = vpop.f32.mrb[0].mxu0
        %1360 = vmatprep.mubr.bf16.mxu0 0
        %1361 = vmatmul.mubr.bf16.gmra.mrb[0].mxu0 %v886
        %v1362 = vpop.f32.mrb[0].mxu0
        %v1363 = vadd.f32 0.0, %v1362
        %v1364 = vpop.f32.mrb[0].mxu0
        %v1365 = vpop.f32.mrb[0].mxu0
        %v1366 = vadd.f32 0.0, %v1365
        %v1367 = vpop.f32.mrb[0].mxu0
        %1368 = vmatprep.mubr.bf16.mxu0 0
        %1369 = vmatmul.mubr.bf16.gmra.mrb[0].mxu0 %v889
        %v1370 = vpop.f32.mrb[0].mxu0
        %v1371 = vadd.f32 0.0, %v1370
        %v1372 = vpop.f32.mrb[0].mxu0
        %v1373 = vpop.f32.mrb[0].mxu0
        %v1374 = vadd.f32 0.0, %v1373
        %v1375 = vpop.f32.mrb[0].mxu0
        %1376 = vmatprep.mubr.bf16.mxu0 0
        %1377 = vmatmul.mubr.bf16.gmra.mrb[0].mxu0 %v1315
        %v1378 = vpop.f32.mrb[0].mxu0
        %v1379 = vadd.f32 0.0, %v1378
        %v1380 = vpop.f32.mrb[0].mxu0
        %v1381 = vpop.f32.mrb[0].mxu0
        %v1382 = vadd.f32 0.0, %v1381
        %v1383 = vpop.f32.mrb[0].mxu0
        %1384 = vdwg.mxu0
        %v1385 = vadd.f32 %v1286, %v1355
        %v1386 = vadd.f32 %v1287, %v1358
        %v1387 = vadd.f32 %v1288, %v1363
        %v1388 = vadd.f32 %v1289, %v1366
        %v1389 = vadd.f32 %v1290, %v1371
        %v1390 = vadd.f32 %v1291, %v1374
        %v1391 = vadd.f32 %v1292, %v1379
        %v1392 = vadd.f32 %v1293, %v1382
        %s1393 = scalar_lea.vmem %s383, 28
        %v1394 = vld [vmem:[%s1393] sm:$0x3]
        %v1396 = vsel %vm449, %v1394, 0
        %1398 = vmatprep.subr.bf16.mxu0 0
        %1399 = vmatpush1.bf16.msra.mxu0 %v1396
        %1400 = vmatprep.subr.bf16.mxu0 0
        %1401 = vmatpush1.bf16.msra.mxu0 0
        %1402 = vmatprep.subr.bf16.mxu0 0
        %1403 = vmatpush1.bf16.msra.mxu0 0
        %1404 = vmatprep.subr.bf16.mxu0 0
        %1405 = vmatpush1.bf16.msra.mxu0 0
        %1406 = vmatprep.subr.bf16.mxu0 0
        %1407 = vmatpush1.bf16.msra.mxu0 0
        %1408 = vmatprep.subr.bf16.mxu0 0
        %1409 = vmatpush1.bf16.msra.mxu0 0
        %1410 = vmatprep.subr.bf16.mxu0 0
        %1411 = vmatpush1.bf16.msra.mxu0 0
        %1412 = vmatprep.subr.bf16.mxu0 0
        %1413 = vmatpush1.bf16.msra.mxu0 0
        %1414 = vmatprep.subr.bf16.mxu0 0
        %1415 = vmatpush1.bf16.msra.mxu0 0
        %1416 = vmatprep.subr.bf16.mxu0 0
        %1417 = vmatpush1.bf16.msra.mxu0 0
        %1418 = vmatprep.subr.bf16.mxu0 0
        %1419 = vmatpush1.bf16.msra.mxu0 0
        %1420 = vmatprep.subr.bf16.mxu0 0
        %1421 = vmatpush1.bf16.msra.mxu0 0
        %1422 = vmatprep.subr.bf16.mxu0 0
        %1423 = vmatpush1.bf16.msra.mxu0 0
        %1424 = vmatprep.subr.bf16.mxu0 0
        %1425 = vmatpush1.bf16.msra.mxu0 0
        %1426 = vmatprep.subr.bf16.mxu0 0
        %1427 = vmatpush1.bf16.msra.mxu0 0
        %1428 = vmatprep.subr.bf16.mxu0 0
        %1429 = vmatpush1.bf16.msra.mxu0 0
        %1430 = vmatprep.mubr.bf16.mxu0 0
        %1431 = vmatmul.mubr.bf16.gmra.mrb[0].mxu0 %v883
        %v1432 = vpop.f32.mrb[0].mxu0
        %v1433 = vadd.f32 0.0, %v1432
        %v1434 = vpop.f32.mrb[0].mxu0
        %v1435 = vpop.f32.mrb[0].mxu0
        %v1436 = vadd.f32 0.0, %v1435
        %v1437 = vpop.f32.mrb[0].mxu0
        %1438 = vmatprep.mubr.bf16.mxu0 0
        %1439 = vmatmul.mubr.bf16.gmra.mrb[0].mxu0 %v886
        %v1440 = vpop.f32.mrb[0].mxu0
        %v1441 = vadd.f32 0.0, %v1440
        %v1442 = vpop.f32.mrb[0].mxu0
        %v1443 = vpop.f32.mrb[0].mxu0
        %v1444 = vadd.f32 0.0, %v1443
        %v1445 = vpop.f32.mrb[0].mxu0
        %1446 = vmatprep.mubr.bf16.mxu0 0
        %1447 = vmatmul.mubr.bf16.gmra.mrb[0].mxu0 %v889
        %v1448 = vpop.f32.mrb[0].mxu0
        %v1449 = vadd.f32 0.0, %v1448
        %v1450 = vpop.f32.mrb[0].mxu0
        %v1451 = vpop.f32.mrb[0].mxu0
        %v1452 = vadd.f32 0.0, %v1451
        %v1453 = vpop.f32.mrb[0].mxu0
        %1454 = vmatprep.mubr.bf16.mxu0 0
        %1455 = vmatmul.mubr.bf16.gmra.mrb[0].mxu0 %v1315
        %v1456 = vpop.f32.mrb[0].mxu0
        %v1457 = vadd.f32 0.0, %v1456
        %v1458 = vpop.f32.mrb[0].mxu0
        %v1459 = vpop.f32.mrb[0].mxu0
        %v1460 = vadd.f32 0.0, %v1459
        %v1461 = vpop.f32.mrb[0].mxu0
        %1462 = vdwg.mxu0
        %v1464 = vsel %vm449, %v1295, 0
        %1466 = vmatprep.subr.bf16.mxu0 0
        %1467 = vmatpush1.bf16.msra.mxu0 %v1464
        %1468 = vmatprep.subr.bf16.mxu0 0
        %1469 = vmatpush1.bf16.msra.mxu0 0
        %1470 = vmatprep.subr.bf16.mxu0 0
        %1471 = vmatpush1.bf16.msra.mxu0 0
        %1472 = vmatprep.subr.bf16.mxu0 0
        %1473 = vmatpush1.bf16.msra.mxu0 0
        %1474 = vmatprep.subr.bf16.mxu0 0
        %1475 = vmatpush1.bf16.msra.mxu0 0
        %1476 = vmatprep.subr.bf16.mxu0 0
        %1477 = vmatpush1.bf16.msra.mxu0 0
        %1478 = vmatprep.subr.bf16.mxu0 0
        %1479 = vmatpush1.bf16.msra.mxu0 0
        %1480 = vmatprep.subr.bf16.mxu0 0
        %1481 = vmatpush1.bf16.msra.mxu0 0
        %1482 = vmatprep.subr.bf16.mxu0 0
        %1483 = vmatpush1.bf16.msra.mxu0 0
        %1484 = vmatprep.subr.bf16.mxu0 0
        %1485 = vmatpush1.bf16.msra.mxu0 0
        %1486 = vmatprep.subr.bf16.mxu0 0
        %1487 = vmatpush1.bf16.msra.mxu0 0
        %1488 = vmatprep.subr.bf16.mxu0 0
        %1489 = vmatpush1.bf16.msra.mxu0 0
        %1490 = vmatprep.subr.bf16.mxu0 0
        %1491 = vmatpush1.bf16.msra.mxu0 0
        %1492 = vmatprep.subr.bf16.mxu0 0
        %1493 = vmatpush1.bf16.msra.mxu0 0
        %1494 = vmatprep.subr.bf16.mxu0 0
        %1495 = vmatpush1.bf16.msra.mxu0 0
        %1496 = vmatprep.subr.bf16.mxu0 0
        %1497 = vmatpush1.bf16.msra.mxu0 0
        %1498 = vmatprep.mubr.bf16.mxu0 0
        %1499 = vmatmul.mubr.bf16.gmra.mrb[0].mxu0 %v991
        %v1500 = vpop.f32.mrb[0].mxu0
        %v1501 = vadd.f32 %v1433, %v1500
        %v1502 = vpop.f32.mrb[0].mxu0
        %v1503 = vpop.f32.mrb[0].mxu0
        %v1504 = vadd.f32 %v1436, %v1503
        %v1505 = vpop.f32.mrb[0].mxu0
        %1506 = vmatprep.mubr.bf16.mxu0 0
        %1507 = vmatmul.mubr.bf16.gmra.mrb[0].mxu0 %v994
        %v1508 = vpop.f32.mrb[0].mxu0
        %v1509 = vadd.f32 %v1441, %v1508
        %v1510 = vpop.f32.mrb[0].mxu0
        %v1511 = vpop.f32.mrb[0].mxu0
        %v1512 = vadd.f32 %v1444, %v1511
        %v1513 = vpop.f32.mrb[0].mxu0
        %1514 = vmatprep.mubr.bf16.mxu0 0
        %1515 = vmatmul.mubr.bf16.gmra.mrb[0].mxu0 %v997
        %v1516 = vpop.f32.mrb[0].mxu0
        %v1517 = vadd.f32 %v1449, %v1516
        %v1518 = vpop.f32.mrb[0].mxu0
        %v1519 = vpop.f32.mrb[0].mxu0
        %v1520 = vadd.f32 %v1452, %v1519
        %v1521 = vpop.f32.mrb[0].mxu0
        %1522 = vmatprep.mubr.bf16.mxu0 0
        %1523 = vmatmul.mubr.bf16.gmra.mrb[0].mxu0 %v1000
        %v1524 = vpop.f32.mrb[0].mxu0
        %v1525 = vadd.f32 %v1457, %v1524
        %v1526 = vpop.f32.mrb[0].mxu0
        %v1527 = vpop.f32.mrb[0].mxu0
        %v1528 = vadd.f32 %v1460, %v1527
        %v1529 = vpop.f32.mrb[0].mxu0
        %1530 = vdwg.mxu0
        %vm1539 = vcmask 1042432
        %vm1540 = vcmask 1046532
        %vm1541 = vmor %vm1539, %vm1540
        %v1542 = vrot.slane %v393, 5
        %v1543 = vrot.slane %v1542, 4
        %v1544 = vrot.slane %v394, 5
        %v1545 = vsel %vm1541, %v1543, %v1544
        %v1546 = vrot.slane %v395, 5
        %v1547 = vrot.slane %v1546, 4
        %v1548 = vrot.slane %v396, 5
        %v1549 = vsel %vm1541, %v1547, %v1548
        %v1550 = vrot.slane %v397, 5
        %v1551 = vrot.slane %v1550, 4
        %v1552 = vrot.slane %v398, 5
        %v1553 = vsel %vm1541, %v1551, %v1552
        %v1554 = vrot.slane %v399, 5
        %v1555 = vrot.slane %v1554, 4
        %v1556 = vrot.slane %v400, 5
        %v1557 = vsel %vm1541, %v1555, %v1556
        %v1558 = vrot.slane %v401, 5
        %v1559 = vrot.slane %v1558, 4
        %v1560 = vrot.slane %v402, 5
        %v1561 = vsel %vm1541, %v1559, %v1560
        %v1562 = vrot.slane %v403, 5
        %v1563 = vrot.slane %v1562, 4
        %v1564 = vrot.slane %v404, 5
        %v1565 = vsel %vm1541, %v1563, %v1564
        %v1566 = vrot.slane %v405, 5
        %v1567 = vrot.slane %v1566, 4
        %v1568 = vrot.slane %v406, 5
        %v1569 = vsel %vm1541, %v1567, %v1568
        %v1570 = vrot.slane %v407, 5
        %v1571 = vrot.slane %v1570, 4
        %v1572 = vrot.slane %v408, 5
        %v1573 = vsel %vm1541, %v1571, %v1572
        %s1574 = scalar_lea.vmem %s383, 10
        %v1575 = vld [vmem:[%s1574] sm:$0x3]
        %v1576 = vunpack.c.l.b16 %v1545
        %v1577 = vunpack.c.l.b16 %v1549
        %v1578 = vunpack.c.l.b16 %v1553
        %v1579 = vunpack.c.l.b16 %v1557
        %v1580 = vunpack.c.l.b16 %v1561
        %v1581 = vunpack.c.l.b16 %v1565
        %v1582 = vunpack.c.l.b16 %v1569
        %v1583 = vunpack.c.l.b16 %v1573
        %v1584 = vpack.c.b16 %v1577, %v1576
        %v1585 = vpack.c.b16 %v1579, %v1578
        %v1586 = vpack.c.b16 %v1581, %v1580
        %v1587 = vpack.c.b16 %v1583, %v1582
        %v1589 = vsel %vm436, %v1584, 0
        %v1592 = vsel %vm436, %v1585, 0
        %v1595 = vsel %vm436, %v1586, 0
        %v1598 = vsel %vm436, %v1587, 0
        %v1601 = vsel %vm449, %v1575, 0
        %1603 = vmatprep.subr.bf16.mxu0 0
        %1604 = vmatpush1.bf16.msra.mxu0 %v1601
        %1605 = vmatprep.subr.bf16.mxu0 0
        %1606 = vmatpush1.bf16.msra.mxu0 0
        %1607 = vmatprep.subr.bf16.mxu0 0
        %1608 = vmatpush1.bf16.msra.mxu0 0
        %1609 = vmatprep.subr.bf16.mxu0 0
        %1610 = vmatpush1.bf16.msra.mxu0 0
        %1611 = vmatprep.subr.bf16.mxu0 0
        %1612 = vmatpush1.bf16.msra.mxu0 0
        %1613 = vmatprep.subr.bf16.mxu0 0
        %1614 = vmatpush1.bf16.msra.mxu0 0
        %1615 = vmatprep.subr.bf16.mxu0 0
        %1616 = vmatpush1.bf16.msra.mxu0 0
        %1617 = vmatprep.subr.bf16.mxu0 0
        %1618 = vmatpush1.bf16.msra.mxu0 0
        %1619 = vmatprep.subr.bf16.mxu0 0
        %1620 = vmatpush1.bf16.msra.mxu0 0
        %1621 = vmatprep.subr.bf16.mxu0 0
        %1622 = vmatpush1.bf16.msra.mxu0 0
        %1623 = vmatprep.subr.bf16.mxu0 0
        %1624 = vmatpush1.bf16.msra.mxu0 0
        %1625 = vmatprep.subr.bf16.mxu0 0
        %1626 = vmatpush1.bf16.msra.mxu0 0
        %1627 = vmatprep.subr.bf16.mxu0 0
        %1628 = vmatpush1.bf16.msra.mxu0 0
        %1629 = vmatprep.subr.bf16.mxu0 0
        %1630 = vmatpush1.bf16.msra.mxu0 0
        %1631 = vmatprep.subr.bf16.mxu0 0
        %1632 = vmatpush1.bf16.msra.mxu0 0
        %1633 = vmatprep.subr.bf16.mxu0 0
        %1634 = vmatpush1.bf16.msra.mxu0 0
        %1635 = vmatprep.mubr.bf16.mxu0 0
        %1636 = vmatmul.mubr.bf16.gmra.mrb[0].mxu0 %v1589
        %v1637 = vpop.f32.mrb[0].mxu0
        %v1638 = vadd.f32 0.0, %v1637
        %v1639 = vpop.f32.mrb[0].mxu0
        %v1640 = vpop.f32.mrb[0].mxu0
        %v1641 = vadd.f32 0.0, %v1640
        %v1642 = vpop.f32.mrb[0].mxu0
        %1643 = vmatprep.mubr.bf16.mxu0 0
        %1644 = vmatmul.mubr.bf16.gmra.mrb[0].mxu0 %v1592
        %v1645 = vpop.f32.mrb[0].mxu0
        %v1646 = vadd.f32 0.0, %v1645
        %v1647 = vpop.f32.mrb[0].mxu0
        %v1648 = vpop.f32.mrb[0].mxu0
        %v1649 = vadd.f32 0.0, %v1648
        %v1650 = vpop.f32.mrb[0].mxu0
        %1651 = vmatprep.mubr.bf16.mxu0 0
        %1652 = vmatmul.mubr.bf16.gmra.mrb[0].mxu0 %v1595
        %v1653 = vpop.f32.mrb[0].mxu0
        %v1654 = vadd.f32 0.0, %v1653
        %v1655 = vpop.f32.mrb[0].mxu0
        %v1656 = vpop.f32.mrb[0].mxu0
        %v1657 = vadd.f32 0.0, %v1656
        %v1658 = vpop.f32.mrb[0].mxu0
        %1659 = vmatprep.mubr.bf16.mxu0 0
        %1660 = vmatmul.mubr.bf16.gmra.mrb[0].mxu0 %v1598
        %v1661 = vpop.f32.mrb[0].mxu0
        %v1662 = vadd.f32 0.0, %v1661
        %v1663 = vpop.f32.mrb[0].mxu0
        %v1664 = vpop.f32.mrb[0].mxu0
        %v1665 = vadd.f32 0.0, %v1664
        %v1666 = vpop.f32.mrb[0].mxu0
        %1667 = vdwg.mxu0
        %v1668 = vadd.f32 %v1186, %v1638
        %v1669 = vadd.f32 %v1189, %v1641
        %v1670 = vadd.f32 %v1194, %v1646
        %v1671 = vadd.f32 %v1197, %v1649
        %v1672 = vadd.f32 %v1202, %v1654
        %v1673 = vadd.f32 %v1205, %v1657
        %v1674 = vadd.f32 %v1210, %v1662
        %v1675 = vadd.f32 %v1213, %v1665
        %v1677 = vrot.slane %v409, 5
        %v1678 = vrot.slane %v1677, 4
        %v1679 = vrot.slane %v410, 5
        %v1680 = vsel %vm1541, %v1678, %v1679
        %s1681 = scalar_lea.vmem %s383, 14
        %v1682 = vld [vmem:[%s1681] sm:$0x3]
        %v1683 = vunpack.c.l.b16 %v1680
        %v1684 = vpack.c.b16 %v1578, %v1577
        %v1685 = vpack.c.b16 %v1580, %v1579
        %v1686 = vpack.c.b16 %v1582, %v1581
        %v1687 = vpack.c.b16 %v1683, %v1583
        %v1689 = vsel %vm436, %v1684, 0
        %v1692 = vsel %vm436, %v1685, 0
        %v1695 = vsel %vm436, %v1686, 0
        %v1698 = vsel %vm436, %v1687, 0
        %v1701 = vsel %vm449, %v1682, 0
        %1703 = vmatprep.subr.bf16.mxu0 0
        %1704 = vmatpush1.bf16.msra.mxu0 %v1701
        %1705 = vmatprep.subr.bf16.mxu0 0
        %1706 = vmatpush1.bf16.msra.mxu0 0
        %1707 = vmatprep.subr.bf16.mxu0 0
        %1708 = vmatpush1.bf16.msra.mxu0 0
        %1709 = vmatprep.subr.bf16.mxu0 0
        %1710 = vmatpush1.bf16.msra.mxu0 0
        %1711 = vmatprep.subr.bf16.mxu0 0
        %1712 = vmatpush1.bf16.msra.mxu0 0
        %1713 = vmatprep.subr.bf16.mxu0 0
        %1714 = vmatpush1.bf16.msra.mxu0 0
        %1715 = vmatprep.subr.bf16.mxu0 0
        %1716 = vmatpush1.bf16.msra.mxu0 0
        %1717 = vmatprep.subr.bf16.mxu0 0
        %1718 = vmatpush1.bf16.msra.mxu0 0
        %1719 = vmatprep.subr.bf16.mxu0 0
        %1720 = vmatpush1.bf16.msra.mxu0 0
        %1721 = vmatprep.subr.bf16.mxu0 0
        %1722 = vmatpush1.bf16.msra.mxu0 0
        %1723 = vmatprep.subr.bf16.mxu0 0
        %1724 = vmatpush1.bf16.msra.mxu0 0
        %1725 = vmatprep.subr.bf16.mxu0 0
        %1726 = vmatpush1.bf16.msra.mxu0 0
        %1727 = vmatprep.subr.bf16.mxu0 0
        %1728 = vmatpush1.bf16.msra.mxu0 0
        %1729 = vmatprep.subr.bf16.mxu0 0
        %1730 = vmatpush1.bf16.msra.mxu0 0
        %1731 = vmatprep.subr.bf16.mxu0 0
        %1732 = vmatpush1.bf16.msra.mxu0 0
        %1733 = vmatprep.subr.bf16.mxu0 0
        %1734 = vmatpush1.bf16.msra.mxu0 0
        %1735 = vmatprep.mubr.bf16.mxu0 0
        %1736 = vmatmul.mubr.bf16.gmra.mrb[0].mxu0 %v1689
        %v1737 = vpop.f32.mrb[0].mxu0
        %v1738 = vadd.f32 0.0, %v1737
        %v1739 = vpop.f32.mrb[0].mxu0
        %v1740 = vpop.f32.mrb[0].mxu0
        %v1741 = vadd.f32 0.0, %v1740
        %v1742 = vpop.f32.mrb[0].mxu0
        %1743 = vmatprep.mubr.bf16.mxu0 0
        %1744 = vmatmul.mubr.bf16.gmra.mrb[0].mxu0 %v1692
        %v1745 = vpop.f32.mrb[0].mxu0
        %v1746 = vadd.f32 0.0, %v1745
        %v1747 = vpop.f32.mrb[0].mxu0
        %v1748 = vpop.f32.mrb[0].mxu0
        %v1749 = vadd.f32 0.0, %v1748
        %v1750 = vpop.f32.mrb[0].mxu0
        %1751 = vmatprep.mubr.bf16.mxu0 0
        %1752 = vmatmul.mubr.bf16.gmra.mrb[0].mxu0 %v1695
        %v1753 = vpop.f32.mrb[0].mxu0
        %v1754 = vadd.f32 0.0, %v1753
        %v1755 = vpop.f32.mrb[0].mxu0
        %v1756 = vpop.f32.mrb[0].mxu0
        %v1757 = vadd.f32 0.0, %v1756
        %v1758 = vpop.f32.mrb[0].mxu0
        %1759 = vmatprep.mubr.bf16.mxu0 0
        %1760 = vmatmul.mubr.bf16.gmra.mrb[0].mxu0 %v1698
        %v1761 = vpop.f32.mrb[0].mxu0
        %v1762 = vadd.f32 0.0, %v1761
        %v1763 = vpop.f32.mrb[0].mxu0
        %v1764 = vpop.f32.mrb[0].mxu0
        %v1765 = vadd.f32 0.0, %v1764
        %v1766 = vpop.f32.mrb[0].mxu0
        %1767 = vdwg.mxu0
        %v1768 = vadd.f32 %v1668, %v1738
        %v1769 = vadd.f32 %v1669, %v1741
        %v1770 = vadd.f32 %v1670, %v1746
        %v1771 = vadd.f32 %v1671, %v1749
        %v1772 = vadd.f32 %v1672, %v1754
        %v1773 = vadd.f32 %v1673, %v1757
        %v1774 = vadd.f32 %v1674, %v1762
        %v1775 = vadd.f32 %v1675, %v1765
        %s1776 = scalar_lea.vmem %s383, 26
        %v1777 = vld [vmem:[%s1776] sm:$0x3]
        %v1779 = vsel %vm449, %v1777, 0
        %1781 = vmatprep.subr.bf16.mxu0 0
        %1782 = vmatpush1.bf16.msra.mxu0 %v1779
        %1783 = vmatprep.subr.bf16.mxu0 0
        %1784 = vmatpush1.bf16.msra.mxu0 0
        %1785 = vmatprep.subr.bf16.mxu0 0
        %1786 = vmatpush1.bf16.msra.mxu0 0
        %1787 = vmatprep.subr.bf16.mxu0 0
        %1788 = vmatpush1.bf16.msra.mxu0 0
        %1789 = vmatprep.subr.bf16.mxu0 0
        %1790 = vmatpush1.bf16.msra.mxu0 0
        %1791 = vmatprep.subr.bf16.mxu0 0
        %1792 = vmatpush1.bf16.msra.mxu0 0
        %1793 = vmatprep.subr.bf16.mxu0 0
        %1794 = vmatpush1.bf16.msra.mxu0 0
        %1795 = vmatprep.subr.bf16.mxu0 0
        %1796 = vmatpush1.bf16.msra.mxu0 0
        %1797 = vmatprep.subr.bf16.mxu0 0
        %1798 = vmatpush1.bf16.msra.mxu0 0
        %1799 = vmatprep.subr.bf16.mxu0 0
        %1800 = vmatpush1.bf16.msra.mxu0 0
        %1801 = vmatprep.subr.bf16.mxu0 0
        %1802 = vmatpush1.bf16.msra.mxu0 0
        %1803 = vmatprep.subr.bf16.mxu0 0
        %1804 = vmatpush1.bf16.msra.mxu0 0
        %1805 = vmatprep.subr.bf16.mxu0 0
        %1806 = vmatpush1.bf16.msra.mxu0 0
        %1807 = vmatprep.subr.bf16.mxu0 0
        %1808 = vmatpush1.bf16.msra.mxu0 0
        %1809 = vmatprep.subr.bf16.mxu0 0
        %1810 = vmatpush1.bf16.msra.mxu0 0
        %1811 = vmatprep.subr.bf16.mxu0 0
        %1812 = vmatpush1.bf16.msra.mxu0 0
        %1813 = vmatprep.mubr.bf16.mxu0 0
        %1814 = vmatmul.mubr.bf16.gmra.mrb[0].mxu0 %v1689
        %v1815 = vpop.f32.mrb[0].mxu0
        %v1816 = vadd.f32 0.0, %v1815
        %v1817 = vpop.f32.mrb[0].mxu0
        %v1818 = vpop.f32.mrb[0].mxu0
        %v1819 = vadd.f32 0.0, %v1818
        %v1820 = vpop.f32.mrb[0].mxu0
        %1821 = vmatprep.mubr.bf16.mxu0 0
        %1822 = vmatmul.mubr.bf16.gmra.mrb[0].mxu0 %v1692
        %v1823 = vpop.f32.mrb[0].mxu0
        %v1824 = vadd.f32 0.0, %v1823
        %v1825 = vpop.f32.mrb[0].mxu0
        %v1826 = vpop.f32.mrb[0].mxu0
        %v1827 = vadd.f32 0.0, %v1826
        %v1828 = vpop.f32.mrb[0].mxu0
        %1829 = vmatprep.mubr.bf16.mxu0 0
        %1830 = vmatmul.mubr.bf16.gmra.mrb[0].mxu0 %v1695
        %v1831 = vpop.f32.mrb[0].mxu0
        %v1832 = vadd.f32 0.0, %v1831
        %v1833 = vpop.f32.mrb[0].mxu0
        %v1834 = vpop.f32.mrb[0].mxu0
        %v1835 = vadd.f32 0.0, %v1834
        %v1836 = vpop.f32.mrb[0].mxu0
        %1837 = vmatprep.mubr.bf16.mxu0 0
        %1838 = vmatmul.mubr.bf16.gmra.mrb[0].mxu0 %v1698
        %v1839 = vpop.f32.mrb[0].mxu0
        %v1840 = vadd.f32 0.0, %v1839
        %v1841 = vpop.f32.mrb[0].mxu0
        %v1842 = vpop.f32.mrb[0].mxu0
        %v1843 = vadd.f32 0.0, %v1842
        %v1844 = vpop.f32.mrb[0].mxu0
        %1845 = vdwg.mxu0
        %v1846 = vadd.f32 %v1501, %v1816
        %v1847 = vadd.f32 %v1504, %v1819
        %v1848 = vadd.f32 %v1509, %v1824
        %v1849 = vadd.f32 %v1512, %v1827
        %v1850 = vadd.f32 %v1517, %v1832
        %v1851 = vadd.f32 %v1520, %v1835
        %v1852 = vadd.f32 %v1525, %v1840
        %v1853 = vadd.f32 %v1528, %v1843
        %v1855 = vrot.slane %v411, 5
        %v1856 = vrot.slane %v1855, 4
        %v1857 = vrot.slane %v412, 5
        %v1858 = vsel %vm1541, %v1856, %v1857
        %s1859 = scalar_lea.vmem %s383, 30
        %v1860 = vld [vmem:[%s1859] sm:$0x3]
        %v1861 = vunpack.c.l.b16 %v1858
        %v1862 = vpack.c.b16 %v1861, %v1683
        %v1864 = vsel %vm436, %v1862, 0
        %v1867 = vsel %vm449, %v1860, 0
        %1869 = vmatprep.subr.bf16.mxu0 0
        %1870 = vmatpush1.bf16.msra.mxu0 %v1867
        %1871 = vmatprep.subr.bf16.mxu0 0
        %1872 = vmatpush1.bf16.msra.mxu0 0
        %1873 = vmatprep.subr.bf16.mxu0 0
        %1874 = vmatpush1.bf16.msra.mxu0 0
        %1875 = vmatprep.subr.bf16.mxu0 0
        %1876 = vmatpush1.bf16.msra.mxu0 0
        %1877 = vmatprep.subr.bf16.mxu0 0
        %1878 = vmatpush1.bf16.msra.mxu0 0
        %1879 = vmatprep.subr.bf16.mxu0 0
        %1880 = vmatpush1.bf16.msra.mxu0 0
        %1881 = vmatprep.subr.bf16.mxu0 0
        %1882 = vmatpush1.bf16.msra.mxu0 0
        %1883 = vmatprep.subr.bf16.mxu0 0
        %1884 = vmatpush1.bf16.msra.mxu0 0
        %1885 = vmatprep.subr.bf16.mxu0 0
        %1886 = vmatpush1.bf16.msra.mxu0 0
        %1887 = vmatprep.subr.bf16.mxu0 0
        %1888 = vmatpush1.bf16.msra.mxu0 0
        %1889 = vmatprep.subr.bf16.mxu0 0
        %1890 = vmatpush1.bf16.msra.mxu0 0
        %1891 = vmatprep.subr.bf16.mxu0 0
        %1892 = vmatpush1.bf16.msra.mxu0 0
        %1893 = vmatprep.subr.bf16.mxu0 0
        %1894 = vmatpush1.bf16.msra.mxu0 0
        %1895 = vmatprep.subr.bf16.mxu0 0
        %1896 = vmatpush1.bf16.msra.mxu0 0
        %1897 = vmatprep.subr.bf16.mxu0 0
        %1898 = vmatpush1.bf16.msra.mxu0 0
        %1899 = vmatprep.subr.bf16.mxu0 0
        %1900 = vmatpush1.bf16.msra.mxu0 0
        %1901 = vmatprep.mubr.bf16.mxu0 0
        %1902 = vmatmul.mubr.bf16.gmra.mrb[0].mxu0 %v1592
        %v1903 = vpop.f32.mrb[0].mxu0
        %v1904 = vadd.f32 0.0, %v1903
        %v1905 = vpop.f32.mrb[0].mxu0
        %v1906 = vpop.f32.mrb[0].mxu0
        %v1907 = vadd.f32 0.0, %v1906
        %v1908 = vpop.f32.mrb[0].mxu0
        %1909 = vmatprep.mubr.bf16.mxu0 0
        %1910 = vmatmul.mubr.bf16.gmra.mrb[0].mxu0 %v1595
        %v1911 = vpop.f32.mrb[0].mxu0
        %v1912 = vadd.f32 0.0, %v1911
        %v1913 = vpop.f32.mrb[0].mxu0
        %v1914 = vpop.f32.mrb[0].mxu0
        %v1915 = vadd.f32 0.0, %v1914
        %v1916 = vpop.f32.mrb[0].mxu0
        %1917 = vmatprep.mubr.bf16.mxu0 0
        %1918 = vmatmul.mubr.bf16.gmra.mrb[0].mxu0 %v1598
        %v1919 = vpop.f32.mrb[0].mxu0
        %v1920 = vadd.f32 0.0, %v1919
        %v1921 = vpop.f32.mrb[0].mxu0
        %v1922 = vpop.f32.mrb[0].mxu0
        %v1923 = vadd.f32 0.0, %v1922
        %v1924 = vpop.f32.mrb[0].mxu0
        %1925 = vmatprep.mubr.bf16.mxu0 0
        %1926 = vmatmul.mubr.bf16.gmra.mrb[0].mxu0 %v1864
        %v1927 = vpop.f32.mrb[0].mxu0
        %v1928 = vadd.f32 0.0, %v1927
        %v1929 = vpop.f32.mrb[0].mxu0
        %v1930 = vpop.f32.mrb[0].mxu0
        %v1931 = vadd.f32 0.0, %v1930
        %v1932 = vpop.f32.mrb[0].mxu0
        %1933 = vdwg.mxu0
        %v1934 = vadd.f32 %v1846, %v1904
        %v1935 = vadd.f32 %v1847, %v1907
        %v1936 = vadd.f32 %v1848, %v1912
        %v1937 = vadd.f32 %v1849, %v1915
        %v1938 = vadd.f32 %v1850, %v1920
        %v1939 = vadd.f32 %v1851, %v1923
        %v1940 = vadd.f32 %v1852, %v1928
        %v1941 = vadd.f32 %v1853, %v1931
        %v1942 = vld [vmem:[%s390] sm:$0x1]
        %v1943 = vld [vmem:[%s387] sm:$0x3]
        %v1945 = vsel %vm449, %v1943, 0
        %1947 = vmatprep.subr.bf16.mxu0 0
        %1948 = vmatpush1.bf16.msra.mxu0 %v1945
        %1949 = vmatprep.subr.bf16.mxu0 0
        %1950 = vmatpush1.bf16.msra.mxu0 0
        %1951 = vmatprep.subr.bf16.mxu0 0
        %1952 = vmatpush1.bf16.msra.mxu0 0
        %1953 = vmatprep.subr.bf16.mxu0 0
        %1954 = vmatpush1.bf16.msra.mxu0 0
        %1955 = vmatprep.subr.bf16.mxu0 0
        %1956 = vmatpush1.bf16.msra.mxu0 0
        %1957 = vmatprep.subr.bf16.mxu0 0
        %1958 = vmatpush1.bf16.msra.mxu0 0
        %1959 = vmatprep.subr.bf16.mxu0 0
        %1960 = vmatpush1.bf16.msra.mxu0 0
        %1961 = vmatprep.subr.bf16.mxu0 0
        %1962 = vmatpush1.bf16.msra.mxu0 0
        %1963 = vmatprep.subr.bf16.mxu0 0
        %1964 = vmatpush1.bf16.msra.mxu0 0
        %1965 = vmatprep.subr.bf16.mxu0 0
        %1966 = vmatpush1.bf16.msra.mxu0 0
        %1967 = vmatprep.subr.bf16.mxu0 0
        %1968 = vmatpush1.bf16.msra.mxu0 0
        %1969 = vmatprep.subr.bf16.mxu0 0
        %1970 = vmatpush1.bf16.msra.mxu0 0
        %1971 = vmatprep.subr.bf16.mxu0 0
        %1972 = vmatpush1.bf16.msra.mxu0 0
        %1973 = vmatprep.subr.bf16.mxu0 0
        %1974 = vmatpush1.bf16.msra.mxu0 0
        %1975 = vmatprep.subr.bf16.mxu0 0
        %1976 = vmatpush1.bf16.msra.mxu0 0
        %1977 = vmatprep.subr.bf16.mxu0 0
        %1978 = vmatpush1.bf16.msra.mxu0 0
        %1979 = vmatprep.mubr.bf16.mxu0 0
        %1980 = vmatmul.mubr.bf16.gmra.mrb[0].mxu0 %v991
        %v1981 = vpop.f32.mrb[0].mxu0
        %v1982 = vadd.f32 0.0, %v1981
        %v1983 = vpop.f32.mrb[0].mxu0
        %v1984 = vpop.f32.mrb[0].mxu0
        %v1985 = vadd.f32 0.0, %v1984
        %v1986 = vpop.f32.mrb[0].mxu0
        %1987 = vmatprep.mubr.bf16.mxu0 0
        %1988 = vmatmul.mubr.bf16.gmra.mrb[0].mxu0 %v994
        %v1989 = vpop.f32.mrb[0].mxu0
        %v1990 = vadd.f32 0.0, %v1989
        %v1991 = vpop.f32.mrb[0].mxu0
        %v1992 = vpop.f32.mrb[0].mxu0
        %v1993 = vadd.f32 0.0, %v1992
        %v1994 = vpop.f32.mrb[0].mxu0
        %1995 = vmatprep.mubr.bf16.mxu0 0
        %1996 = vmatmul.mubr.bf16.gmra.mrb[0].mxu0 %v997
        %v1997 = vpop.f32.mrb[0].mxu0
        %v1998 = vadd.f32 0.0, %v1997
        %v1999 = vpop.f32.mrb[0].mxu0
        %v2000 = vpop.f32.mrb[0].mxu0
        %v2001 = vadd.f32 0.0, %v2000
        %v2002 = vpop.f32.mrb[0].mxu0
        %2003 = vmatprep.mubr.bf16.mxu0 0
        %2004 = vmatmul.mubr.bf16.gmra.mrb[0].mxu0 %v1000
        %v2005 = vpop.f32.mrb[0].mxu0
        %v2006 = vadd.f32 0.0, %v2005
        %v2007 = vpop.f32.mrb[0].mxu0
        %v2008 = vpop.f32.mrb[0].mxu0
        %v2009 = vadd.f32 0.0, %v2008
        %v2010 = vpop.f32.mrb[0].mxu0
        %2011 = vdwg.mxu0
        %v2012 = vadd.f32 %v1070, %v1982
        %v2013 = vadd.f32 %v1071, %v1985
        %v2014 = vadd.f32 %v1072, %v1990
        %v2015 = vadd.f32 %v1073, %v1993
        %v2016 = vadd.f32 %v1074, %v1998
        %v2017 = vadd.f32 %v1075, %v2001
        %v2018 = vadd.f32 %v1076, %v2006
        %v2019 = vadd.f32 %v1077, %v2009
        %v2021 = vlaneseq
        %v2022 = vshrl.u32 %v2021, 7
        %v2023 = vsub.s32 0, %v2022
        %v2024 = vrot.slane %v1942, %v2023
        %v2026 = vadd.f32 %v2012, %v2024
        %v2027 = vadd.f32 %v2013, %v2024
        %v2028 = vadd.f32 %v2014, %v2024
        %v2029 = vadd.f32 %v2015, %v2024
        %v2030 = vadd.f32 %v2016, %v2024
        %v2031 = vadd.f32 %v2017, %v2024
        %v2032 = vadd.f32 %v2018, %v2024
        %v2033 = vadd.f32 %v2019, %v2024
        %v2034 = vpack.c.bf16 %v2026, %v2026
        %v2035 = vpack.c.bf16 %v2027, %v2027
        %v2036 = vpack.c.bf16 %v2028, %v2028
        %v2037 = vpack.c.bf16 %v2029, %v2029
        %v2038 = vpack.c.bf16 %v2030, %v2030
        %v2039 = vpack.c.bf16 %v2031, %v2031
        %v2040 = vpack.c.bf16 %v2032, %v2032
        %v2041 = vpack.c.bf16 %v2033, %v2033
        %v2051 = vunpack.c.l.s4 1966171168
        %v2052 = vunpack.c.0.s8 %v2051
        %v2053 = vlaneseq
        %v2054 = vshrl.u32 %v2053, 7
        %v2055 = vsub.s32 %v2052, %v2054
        %v2056 = vrot.slane %v2034, %v2055
        %v2057 = vcombine.high %v2056, %v2056
        %v2059 = vunpack.c.l.s4 1966171168
        %v2060 = vunpack.c.0.s8 %v2059
        %v2061 = vlaneseq
        %v2062 = vshrl.u32 %v2061, 7
        %v2063 = vsub.s32 %v2060, %v2062
        %v2064 = vrot.slane %v2056, %v2063
        %v2066 = vunpack.c.l.s4 1966171168
        %v2067 = vunpack.c.0.s8 %v2066
        %v2068 = vlaneseq
        %v2069 = vshrl.u32 %v2068, 7
        %v2070 = vsub.s32 %v2067, %v2069
        %v2071 = vrot.slane %v2057, %v2070
        %v2072 = vcombine.high %v2064, %v2064
        %v2073 = vcombine.high %v2071, %v2071
        %v2075 = vunpack.c.l.s4 1966171168
        %v2076 = vunpack.c.0.s8 %v2075
        %v2077 = vlaneseq
        %v2078 = vshrl.u32 %v2077, 7
        %v2079 = vsub.s32 %v2076, %v2078
        %v2080 = vrot.slane %v2035, %v2079
        %v2081 = vcombine.high %v2080, %v2080
        %v2083 = vunpack.c.l.s4 1966171168
        %v2084 = vunpack.c.0.s8 %v2083
        %v2085 = vlaneseq
        %v2086 = vshrl.u32 %v2085, 7
        %v2087 = vsub.s32 %v2084, %v2086
        %v2088 = vrot.slane %v2080, %v2087
        %v2090 = vunpack.c.l.s4 1966171168
        %v2091 = vunpack.c.0.s8 %v2090
        %v2092 = vlaneseq
        %v2093 = vshrl.u32 %v2092, 7
        %v2094 = vsub.s32 %v2091, %v2093
        %v2095 = vrot.slane %v2081, %v2094
        %v2096 = vcombine.high %v2088, %v2088
        %v2097 = vcombine.high %v2095, %v2095
        %v2099 = vunpack.c.l.s4 1966171168
        %v2100 = vunpack.c.0.s8 %v2099
        %v2101 = vlaneseq
        %v2102 = vshrl.u32 %v2101, 7
        %v2103 = vsub.s32 %v2100, %v2102
        %v2104 = vrot.slane %v2036, %v2103
        %v2105 = vcombine.high %v2104, %v2104
        %v2107 = vunpack.c.l.s4 1966171168
        %v2108 = vunpack.c.0.s8 %v2107
        %v2109 = vlaneseq
        %v2110 = vshrl.u32 %v2109, 7
        %v2111 = vsub.s32 %v2108, %v2110
        %v2112 = vrot.slane %v2104, %v2111
        %v2114 = vunpack.c.l.s4 1966171168
        %v2115 = vunpack.c.0.s8 %v2114
        %v2116 = vlaneseq
        %v2117 = vshrl.u32 %v2116, 7
        %v2118 = vsub.s32 %v2115, %v2117
        %v2119 = vrot.slane %v2105, %v2118
        %v2120 = vcombine.high %v2112, %v2112
        %v2121 = vcombine.high %v2119, %v2119
        %v2123 = vunpack.c.l.s4 1966171168
        %v2124 = vunpack.c.0.s8 %v2123
        %v2125 = vlaneseq
        %v2126 = vshrl.u32 %v2125, 7
        %v2127 = vsub.s32 %v2124, %v2126
        %v2128 = vrot.slane %v2037, %v2127
        %v2129 = vcombine.high %v2128, %v2128
        %v2131 = vunpack.c.l.s4 1966171168
        %v2132 = vunpack.c.0.s8 %v2131
        %v2133 = vlaneseq
        %v2134 = vshrl.u32 %v2133, 7
        %v2135 = vsub.s32 %v2132, %v2134
        %v2136 = vrot.slane %v2128, %v2135
        %v2138 = vunpack.c.l.s4 1966171168
        %v2139 = vunpack.c.0.s8 %v2138
        %v2140 = vlaneseq
        %v2141 = vshrl.u32 %v2140, 7
        %v2142 = vsub.s32 %v2139, %v2141
        %v2143 = vrot.slane %v2129, %v2142
        %v2144 = vcombine.high %v2136, %v2136
        %v2145 = vcombine.high %v2143, %v2143
        %v2147 = vunpack.c.l.s4 1966171168
        %v2148 = vunpack.c.0.s8 %v2147
        %v2149 = vlaneseq
        %v2150 = vshrl.u32 %v2149, 7
        %v2151 = vsub.s32 %v2148, %v2150
        %v2152 = vrot.slane %v2038, %v2151
        %v2153 = vcombine.high %v2152, %v2152
        %v2155 = vunpack.c.l.s4 1966171168
        %v2156 = vunpack.c.0.s8 %v2155
        %v2157 = vlaneseq
        %v2158 = vshrl.u32 %v2157, 7
        %v2159 = vsub.s32 %v2156, %v2158
        %v2160 = vrot.slane %v2152, %v2159
        %v2162 = vunpack.c.l.s4 1966171168
        %v2163 = vunpack.c.0.s8 %v2162
        %v2164 = vlaneseq
        %v2165 = vshrl.u32 %v2164, 7
        %v2166 = vsub.s32 %v2163, %v2165
        %v2167 = vrot.slane %v2153, %v2166
        %v2168 = vcombine.high %v2160, %v2160
        %v2169 = vcombine.high %v2167, %v2167
        %v2171 = vunpack.c.l.s4 1966171168
        %v2172 = vunpack.c.0.s8 %v2171
        %v2173 = vlaneseq
        %v2174 = vshrl.u32 %v2173, 7
        %v2175 = vsub.s32 %v2172, %v2174
        %v2176 = vrot.slane %v2039, %v2175
        %v2177 = vcombine.high %v2176, %v2176
        %v2179 = vunpack.c.l.s4 1966171168
        %v2180 = vunpack.c.0.s8 %v2179
        %v2181 = vlaneseq
        %v2182 = vshrl.u32 %v2181, 7
        %v2183 = vsub.s32 %v2180, %v2182
        %v2184 = vrot.slane %v2176, %v2183
        %v2186 = vunpack.c.l.s4 1966171168
        %v2187 = vunpack.c.0.s8 %v2186
        %v2188 = vlaneseq
        %v2189 = vshrl.u32 %v2188, 7
        %v2190 = vsub.s32 %v2187, %v2189
        %v2191 = vrot.slane %v2177, %v2190
        %v2192 = vcombine.high %v2184, %v2184
        %v2193 = vcombine.high %v2191, %v2191
        %v2195 = vunpack.c.l.s4 1966171168
        %v2196 = vunpack.c.0.s8 %v2195
        %v2197 = vlaneseq
        %v2198 = vshrl.u32 %v2197, 7
        %v2199 = vsub.s32 %v2196, %v2198
        %v2200 = vrot.slane %v2040, %v2199
        %v2201 = vcombine.high %v2200, %v2200
        %v2203 = vunpack.c.l.s4 1966171168
        %v2204 = vunpack.c.0.s8 %v2203
        %v2205 = vlaneseq
        %v2206 = vshrl.u32 %v2205, 7
        %v2207 = vsub.s32 %v2204, %v2206
        %v2208 = vrot.slane %v2200, %v2207
        %v2210 = vunpack.c.l.s4 1966171168
        %v2211 = vunpack.c.0.s8 %v2210
        %v2212 = vlaneseq
        %v2213 = vshrl.u32 %v2212, 7
        %v2214 = vsub.s32 %v2211, %v2213
        %v2215 = vrot.slane %v2201, %v2214
        %v2216 = vcombine.high %v2208, %v2208
        %v2217 = vcombine.high %v2215, %v2215
        %v2219 = vunpack.c.l.s4 1966171168
        %v2220 = vunpack.c.0.s8 %v2219
        %v2221 = vlaneseq
        %v2222 = vshrl.u32 %v2221, 7
        %v2223 = vsub.s32 %v2220, %v2222
        %v2224 = vrot.slane %v2041, %v2223
        %v2225 = vcombine.high %v2224, %v2224
        %v2227 = vunpack.c.l.s4 1966171168
        %v2228 = vunpack.c.0.s8 %v2227
        %v2229 = vlaneseq
        %v2230 = vshrl.u32 %v2229, 7
        %v2231 = vsub.s32 %v2228, %v2230
        %v2232 = vrot.slane %v2224, %v2231
        %v2234 = vunpack.c.l.s4 1966171168
        %v2235 = vunpack.c.0.s8 %v2234
        %v2236 = vlaneseq
        %v2237 = vshrl.u32 %v2236, 7
        %v2238 = vsub.s32 %v2235, %v2237
        %v2239 = vrot.slane %v2225, %v2238
        %v2240 = vcombine.high %v2232, %v2232
        %v2241 = vcombine.high %v2239, %v2239
        %v2242 = vunpack.i.l.s16 %v2064
        %v2243 = vunpack.i.h.s16 %v2064
        %v2244 = vunpack.i.l.s16 %v2071
        %v2245 = vunpack.i.h.s16 %v2071
        %v2246 = vunpack.i.l.s16 %v2072
        %v2247 = vunpack.i.h.s16 %v2072
        %v2248 = vunpack.i.l.s16 %v2073
        %v2249 = vunpack.i.h.s16 %v2073
        %v2250 = vunpack.i.l.s16 %v2088
        %v2251 = vunpack.i.h.s16 %v2088
        %v2252 = vunpack.i.l.s16 %v2095
        %v2253 = vunpack.i.h.s16 %v2095
        %v2254 = vunpack.i.l.s16 %v2096
        %v2255 = vunpack.i.h.s16 %v2096
        %v2256 = vunpack.i.l.s16 %v2097
        %v2257 = vunpack.i.h.s16 %v2097
        %v2258 = vunpack.i.l.s16 %v2112
        %v2259 = vunpack.i.h.s16 %v2112
        %v2260 = vunpack.i.l.s16 %v2119
        %v2261 = vunpack.i.h.s16 %v2119
        %v2262 = vunpack.i.l.s16 %v2120
        %v2263 = vunpack.i.h.s16 %v2120
        %v2264 = vunpack.i.l.s16 %v2121
        %v2265 = vunpack.i.h.s16 %v2121
        %v2266 = vunpack.i.l.s16 %v2136
        %v2267 = vunpack.i.h.s16 %v2136
        %v2268 = vunpack.i.l.s16 %v2143
        %v2269 = vunpack.i.h.s16 %v2143
        %v2270 = vunpack.i.l.s16 %v2144
        %v2271 = vunpack.i.h.s16 %v2144
        %v2272 = vunpack.i.l.s16 %v2145
        %v2273 = vunpack.i.h.s16 %v2145
        %v2274 = vunpack.i.l.s16 %v2160
        %v2275 = vunpack.i.h.s16 %v2160
        %v2276 = vunpack.i.l.s16 %v2167
        %v2277 = vunpack.i.h.s16 %v2167
        %v2278 = vunpack.i.l.s16 %v2168
        %v2279 = vunpack.i.h.s16 %v2168
        %v2280 = vunpack.i.l.s16 %v2169
        %v2281 = vunpack.i.h.s16 %v2169
        %v2282 = vunpack.i.l.s16 %v2184
        %v2283 = vunpack.i.h.s16 %v2184
        %v2284 = vunpack.i.l.s16 %v2191
        %v2285 = vunpack.i.h.s16 %v2191
        %v2286 = vunpack.i.l.s16 %v2192
        %v2287 = vunpack.i.h.s16 %v2192
        %v2288 = vunpack.i.l.s16 %v2193
        %v2289 = vunpack.i.h.s16 %v2193
        %v2290 = vunpack.i.l.s16 %v2208
        %v2291 = vunpack.i.h.s16 %v2208
        %v2292 = vunpack.i.l.s16 %v2215
        %v2293 = vunpack.i.h.s16 %v2215
        %v2294 = vunpack.i.l.s16 %v2216
        %v2295 = vunpack.i.h.s16 %v2216
        %v2296 = vunpack.i.l.s16 %v2217
        %v2297 = vunpack.i.h.s16 %v2217
        %v2298 = vunpack.i.l.s16 %v2232
        %v2299 = vunpack.i.h.s16 %v2232
        %v2300 = vunpack.i.l.s16 %v2239
        %v2301 = vunpack.i.h.s16 %v2239
        %v2302 = vunpack.i.l.s16 %v2240
        %v2303 = vunpack.i.h.s16 %v2240
        %v2304 = vunpack.i.l.s16 %v2241
        %v2305 = vunpack.i.h.s16 %v2241
        %v2306 = vpack.i.b16 %v2242, %v2242
        %v2307 = vpack.i.b16 %v2243, %v2243
        %v2308 = vpack.i.b16 %v2244, %v2244
        %v2309 = vpack.i.b16 %v2245, %v2245
        %v2310 = vpack.i.b16 %v2246, %v2246
        %v2311 = vpack.i.b16 %v2247, %v2247
        %v2312 = vpack.i.b16 %v2248, %v2248
        %v2313 = vpack.i.b16 %v2249, %v2249
        %v2314 = vpack.i.b16 %v2250, %v2250
        %v2315 = vpack.i.b16 %v2251, %v2251
        %v2316 = vpack.i.b16 %v2252, %v2252
        %v2317 = vpack.i.b16 %v2253, %v2253
        %v2318 = vpack.i.b16 %v2254, %v2254
        %v2319 = vpack.i.b16 %v2255, %v2255
        %v2320 = vpack.i.b16 %v2256, %v2256
        %v2321 = vpack.i.b16 %v2257, %v2257
        %v2322 = vpack.i.b16 %v2258, %v2258
        %v2323 = vpack.i.b16 %v2259, %v2259
        %v2324 = vpack.i.b16 %v2260, %v2260
        %v2325 = vpack.i.b16 %v2261, %v2261
        %v2326 = vpack.i.b16 %v2262, %v2262
        %v2327 = vpack.i.b16 %v2263, %v2263
        %v2328 = vpack.i.b16 %v2264, %v2264
        %v2329 = vpack.i.b16 %v2265, %v2265
        %v2330 = vpack.i.b16 %v2266, %v2266
        %v2331 = vpack.i.b16 %v2267, %v2267
        %v2332 = vpack.i.b16 %v2268, %v2268
        %v2333 = vpack.i.b16 %v2269, %v2269
        %v2334 = vpack.i.b16 %v2270, %v2270
        %v2335 = vpack.i.b16 %v2271, %v2271
        %v2336 = vpack.i.b16 %v2272, %v2272
        %v2337 = vpack.i.b16 %v2273, %v2273
        %v2338 = vpack.i.b16 %v2274, %v2274
        %v2339 = vpack.i.b16 %v2275, %v2275
        %v2340 = vpack.i.b16 %v2276, %v2276
        %v2341 = vpack.i.b16 %v2277, %v2277
        %v2342 = vpack.i.b16 %v2278, %v2278
        %v2343 = vpack.i.b16 %v2279, %v2279
        %v2344 = vpack.i.b16 %v2280, %v2280
        %v2345 = vpack.i.b16 %v2281, %v2281
        %v2346 = vpack.i.b16 %v2282, %v2282
        %v2347 = vpack.i.b16 %v2283, %v2283
        %v2348 = vpack.i.b16 %v2284, %v2284
        %v2349 = vpack.i.b16 %v2285, %v2285
        %v2350 = vpack.i.b16 %v2286, %v2286
        %v2351 = vpack.i.b16 %v2287, %v2287
        %v2352 = vpack.i.b16 %v2288, %v2288
        %v2353 = vpack.i.b16 %v2289, %v2289
        %v2354 = vpack.i.b16 %v2290, %v2290
        %v2355 = vpack.i.b16 %v2291, %v2291
        %v2356 = vpack.i.b16 %v2292, %v2292
        %v2357 = vpack.i.b16 %v2293, %v2293
        %v2358 = vpack.i.b16 %v2294, %v2294
        %v2359 = vpack.i.b16 %v2295, %v2295
        %v2360 = vpack.i.b16 %v2296, %v2296
        %v2361 = vpack.i.b16 %v2297, %v2297
        %v2362 = vpack.i.b16 %v2298, %v2298
        %v2363 = vpack.i.b16 %v2299, %v2299
        %v2364 = vpack.i.b16 %v2300, %v2300
        %v2365 = vpack.i.b16 %v2301, %v2301
        %v2366 = vpack.i.b16 %v2302, %v2302
        %v2367 = vpack.i.b16 %v2303, %v2303
        %v2368 = vpack.i.b16 %v2304, %v2304
        %v2369 = vpack.i.b16 %v2305, %v2305
        %vm2434 = vcmask 122880
        %vm2435 = vsmask.f32 256
        %vm2436 = vmand %vm2434, %vm2435
        %v2437 = vld [vmem:[%s343] sm:$0x1]
        %v2438 = vsel %vm2436, %v2306, %v2437
        %2439 = vst [vmem:[%s343] sm:$0x1] %v2438
        %v2440 = vld [vmem:[%s343 + $0x1] sm:$0x1]
        %v2441 = vsel %vm2436, %v2307, %v2440
        %2442 = vst [vmem:[%s343 + $0x1] sm:$0x1] %v2441
        %v2443 = vld [vmem:[%s343 + $0x2] sm:$0x1]
        %v2444 = vsel %vm2436, %v2308, %v2443
        %2445 = vst [vmem:[%s343 + $0x2] sm:$0x1] %v2444
        %v2446 = vld [vmem:[%s343 + $0x3] sm:$0x1]
        %v2447 = vsel %vm2436, %v2309, %v2446
        %2448 = vst [vmem:[%s343 + $0x3] sm:$0x1] %v2447
        %v2449 = vld [vmem:[%s343 + $0x4] sm:$0x1]
        %v2450 = vsel %vm2436, %v2310, %v2449
        %2451 = vst [vmem:[%s343 + $0x4] sm:$0x1] %v2450
        %v2452 = vld [vmem:[%s343 + $0x5] sm:$0x1]
        %v2453 = vsel %vm2436, %v2311, %v2452
        %2454 = vst [vmem:[%s343 + $0x5] sm:$0x1] %v2453
        %v2455 = vld [vmem:[%s343 + $0x6] sm:$0x1]
        %v2456 = vsel %vm2436, %v2312, %v2455
        %2457 = vst [vmem:[%s343 + $0x6] sm:$0x1] %v2456
        %v2458 = vld [vmem:[%s343 + $0x7] sm:$0x1]
        %v2459 = vsel %vm2436, %v2313, %v2458
        %2460 = vst [vmem:[%s343 + $0x7] sm:$0x1] %v2459
        %v2461 = vld [vmem:[%s343 + $0x10] sm:$0x1]
        %v2462 = vsel %vm2436, %v2314, %v2461
        %2463 = vst [vmem:[%s343 + $0x10] sm:$0x1] %v2462
        %v2464 = vld [vmem:[%s343 + $0x11] sm:$0x1]
        %v2465 = vsel %vm2436, %v2315, %v2464
        %2466 = vst [vmem:[%s343 + $0x11] sm:$0x1] %v2465
        %v2467 = vld [vmem:[%s343 + $0x12] sm:$0x1]
        %v2468 = vsel %vm2436, %v2316, %v2467
        %2469 = vst [vmem:[%s343 + $0x12] sm:$0x1] %v2468
        %v2470 = vld [vmem:[%s343 + $0x13] sm:$0x1]
        %v2471 = vsel %vm2436, %v2317, %v2470
        %2472 = vst [vmem:[%s343 + $0x13] sm:$0x1] %v2471
        %v2473 = vld [vmem:[%s343 + $0x14] sm:$0x1]
        %v2474 = vsel %vm2436, %v2318, %v2473
        %2475 = vst [vmem:[%s343 + $0x14] sm:$0x1] %v2474
        %v2476 = vld [vmem:[%s343 + $0x15] sm:$0x1]
        %v2477 = vsel %vm2436, %v2319, %v2476
        %2478 = vst [vmem:[%s343 + $0x15] sm:$0x1] %v2477
        %v2479 = vld [vmem:[%s343 + $0x16] sm:$0x1]
        %v2480 = vsel %vm2436, %v2320, %v2479
        %2481 = vst [vmem:[%s343 + $0x16] sm:$0x1] %v2480
        %v2482 = vld [vmem:[%s343 + $0x17] sm:$0x1]
        %v2483 = vsel %vm2436, %v2321, %v2482
        %2484 = vst [vmem:[%s343 + $0x17] sm:$0x1] %v2483
        %v2485 = vld [vmem:[%s343 + $0x20] sm:$0x1]
        %v2486 = vsel %vm2436, %v2322, %v2485
        %2487 = vst [vmem:[%s343 + $0x20] sm:$0x1] %v2486
        %v2488 = vld [vmem:[%s343 + $0x21] sm:$0x1]
        %v2489 = vsel %vm2436, %v2323, %v2488
        %2490 = vst [vmem:[%s343 + $0x21] sm:$0x1] %v2489
        %v2491 = vld [vmem:[%s343 + $0x22] sm:$0x1]
        %v2492 = vsel %vm2436, %v2324, %v2491
        %2493 = vst [vmem:[%s343 + $0x22] sm:$0x1] %v2492
        %v2494 = vld [vmem:[%s343 + $0x23] sm:$0x1]
        %v2495 = vsel %vm2436, %v2325, %v2494
        %2496 = vst [vmem:[%s343 + $0x23] sm:$0x1] %v2495
        %v2497 = vld [vmem:[%s343 + $0x24] sm:$0x1]
        %v2498 = vsel %vm2436, %v2326, %v2497
        %2499 = vst [vmem:[%s343 + $0x24] sm:$0x1] %v2498
        %v2500 = vld [vmem:[%s343 + $0x25] sm:$0x1]
        %v2501 = vsel %vm2436, %v2327, %v2500
        %2502 = vst [vmem:[%s343 + $0x25] sm:$0x1] %v2501
        %v2503 = vld [vmem:[%s343 + $0x26] sm:$0x1]
        %v2504 = vsel %vm2436, %v2328, %v2503
        %2505 = vst [vmem:[%s343 + $0x26] sm:$0x1] %v2504
        %v2506 = vld [vmem:[%s343 + $0x27] sm:$0x1]
        %v2507 = vsel %vm2436, %v2329, %v2506
        %2508 = vst [vmem:[%s343 + $0x27] sm:$0x1] %v2507
        %v2509 = vld [vmem:[%s343 + $0x30] sm:$0x1]
        %v2510 = vsel %vm2436, %v2330, %v2509
        %2511 = vst [vmem:[%s343 + $0x30] sm:$0x1] %v2510
        %v2512 = vld [vmem:[%s343 + $0x31] sm:$0x1]
        %v2513 = vsel %vm2436, %v2331, %v2512
        %2514 = vst [vmem:[%s343 + $0x31] sm:$0x1] %v2513
        %v2515 = vld [vmem:[%s343 + $0x32] sm:$0x1]
        %v2516 = vsel %vm2436, %v2332, %v2515
        %2517 = vst [vmem:[%s343 + $0x32] sm:$0x1] %v2516
        %v2518 = vld [vmem:[%s343 + $0x33] sm:$0x1]
        %v2519 = vsel %vm2436, %v2333, %v2518
        %2520 = vst [vmem:[%s343 + $0x33] sm:$0x1] %v2519
        %v2521 = vld [vmem:[%s343 + $0x34] sm:$0x1]
        %v2522 = vsel %vm2436, %v2334, %v2521
        %2523 = vst [vmem:[%s343 + $0x34] sm:$0x1] %v2522
        %v2524 = vld [vmem:[%s343 + $0x35] sm:$0x1]
        %v2525 = vsel %vm2436, %v2335, %v2524
        %2526 = vst [vmem:[%s343 + $0x35] sm:$0x1] %v2525
        %v2527 = vld [vmem:[%s343 + $0x36] sm:$0x1]
        %v2528 = vsel %vm2436, %v2336, %v2527
        %2529 = vst [vmem:[%s343 + $0x36] sm:$0x1] %v2528
        %v2530 = vld [vmem:[%s343 + $0x37] sm:$0x1]
        %v2531 = vsel %vm2436, %v2337, %v2530
        %2532 = vst [vmem:[%s343 + $0x37] sm:$0x1] %v2531
        %v2533 = vld [vmem:[%s343 + $0x40] sm:$0x1]
        %v2534 = vsel %vm2436, %v2338, %v2533
        %2535 = vst [vmem:[%s343 + $0x40] sm:$0x1] %v2534
        %v2536 = vld [vmem:[%s343 + $0x41] sm:$0x1]
        %v2537 = vsel %vm2436, %v2339, %v2536
        %2538 = vst [vmem:[%s343 + $0x41] sm:$0x1] %v2537
        %v2539 = vld [vmem:[%s343 + $0x42] sm:$0x1]
        %v2540 = vsel %vm2436, %v2340, %v2539
        %2541 = vst [vmem:[%s343 + $0x42] sm:$0x1] %v2540
        %v2542 = vld [vmem:[%s343 + $0x43] sm:$0x1]
        %v2543 = vsel %vm2436, %v2341, %v2542
        %2544 = vst [vmem:[%s343 + $0x43] sm:$0x1] %v2543
        %v2545 = vld [vmem:[%s343 + $0x44] sm:$0x1]
        %v2546 = vsel %vm2436, %v2342, %v2545
        %2547 = vst [vmem:[%s343 + $0x44] sm:$0x1] %v2546
        %v2548 = vld [vmem:[%s343 + $0x45] sm:$0x1]
        %v2549 = vsel %vm2436, %v2343, %v2548
        %2550 = vst [vmem:[%s343 + $0x45] sm:$0x1] %v2549
        %v2551 = vld [vmem:[%s343 + $0x46] sm:$0x1]
        %v2552 = vsel %vm2436, %v2344, %v2551
        %2553 = vst [vmem:[%s343 + $0x46] sm:$0x1] %v2552
        %v2554 = vld [vmem:[%s343 + $0x47] sm:$0x1]
        %v2555 = vsel %vm2436, %v2345, %v2554
        %2556 = vst [vmem:[%s343 + $0x47] sm:$0x1] %v2555
        %v2557 = vld [vmem:[%s343 + $0x50] sm:$0x1]
        %v2558 = vsel %vm2436, %v2346, %v2557
        %2559 = vst [vmem:[%s343 + $0x50] sm:$0x1] %v2558
        %v2560 = vld [vmem:[%s343 + $0x51] sm:$0x1]
        %v2561 = vsel %vm2436, %v2347, %v2560
        %2562 = vst [vmem:[%s343 + $0x51] sm:$0x1] %v2561
        %v2563 = vld [vmem:[%s343 + $0x52] sm:$0x1]
        %v2564 = vsel %vm2436, %v2348, %v2563
        %2565 = vst [vmem:[%s343 + $0x52] sm:$0x1] %v2564
        %v2566 = vld [vmem:[%s343 + $0x53] sm:$0x1]
        %v2567 = vsel %vm2436, %v2349, %v2566
        %2568 = vst [vmem:[%s343 + $0x53] sm:$0x1] %v2567
        %v2569 = vld [vmem:[%s343 + $0x54] sm:$0x1]
        %v2570 = vsel %vm2436, %v2350, %v2569
        %2571 = vst [vmem:[%s343 + $0x54] sm:$0x1] %v2570
        %v2572 = vld [vmem:[%s343 + $0x55] sm:$0x1]
        %v2573 = vsel %vm2436, %v2351, %v2572
        %2574 = vst [vmem:[%s343 + $0x55] sm:$0x1] %v2573
        %v2575 = vld [vmem:[%s343 + $0x56] sm:$0x1]
        %v2576 = vsel %vm2436, %v2352, %v2575
        %2577 = vst [vmem:[%s343 + $0x56] sm:$0x1] %v2576
        %v2578 = vld [vmem:[%s343 + $0x57] sm:$0x1]
        %v2579 = vsel %vm2436, %v2353, %v2578
        %2580 = vst [vmem:[%s343 + $0x57] sm:$0x1] %v2579
        %v2581 = vld [vmem:[%s343 + $0x60] sm:$0x1]
        %v2582 = vsel %vm2436, %v2354, %v2581
        %2583 = vst [vmem:[%s343 + $0x60] sm:$0x1] %v2582
        %v2584 = vld [vmem:[%s343 + $0x61] sm:$0x1]
        %v2585 = vsel %vm2436, %v2355, %v2584
        %2586 = vst [vmem:[%s343 + $0x61] sm:$0x1] %v2585
        %v2587 = vld [vmem:[%s343 + $0x62] sm:$0x1]
        %v2588 = vsel %vm2436, %v2356, %v2587
        %2589 = vst [vmem:[%s343 + $0x62] sm:$0x1] %v2588
        %v2590 = vld [vmem:[%s343 + $0x63] sm:$0x1]
        %v2591 = vsel %vm2436, %v2357, %v2590
        %2592 = vst [vmem:[%s343 + $0x63] sm:$0x1] %v2591
        %v2593 = vld [vmem:[%s343 + $0x64] sm:$0x1]
        %v2594 = vsel %vm2436, %v2358, %v2593
        %2595 = vst [vmem:[%s343 + $0x64] sm:$0x1] %v2594
        %v2596 = vld [vmem:[%s343 + $0x65] sm:$0x1]
        %v2597 = vsel %vm2436, %v2359, %v2596
        %2598 = vst [vmem:[%s343 + $0x65] sm:$0x1] %v2597
        %v2599 = vld [vmem:[%s343 + $0x66] sm:$0x1]
        %v2600 = vsel %vm2436, %v2360, %v2599
        %2601 = vst [vmem:[%s343 + $0x66] sm:$0x1] %v2600
        %v2602 = vld [vmem:[%s343 + $0x67] sm:$0x1]
        %v2603 = vsel %vm2436, %v2361, %v2602
        %2604 = vst [vmem:[%s343 + $0x67] sm:$0x1] %v2603
        %v2605 = vld [vmem:[%s343 + $0x70] sm:$0x1]
        %v2606 = vsel %vm2436, %v2362, %v2605
        %2607 = vst [vmem:[%s343 + $0x70] sm:$0x1] %v2606
        %v2608 = vld [vmem:[%s343 + $0x71] sm:$0x1]
        %v2609 = vsel %vm2436, %v2363, %v2608
        %2610 = vst [vmem:[%s343 + $0x71] sm:$0x1] %v2609
        %v2611 = vld [vmem:[%s343 + $0x72] sm:$0x1]
        %v2612 = vsel %vm2436, %v2364, %v2611
        %2613 = vst [vmem:[%s343 + $0x72] sm:$0x1] %v2612
        %v2614 = vld [vmem:[%s343 + $0x73] sm:$0x1]
        %v2615 = vsel %vm2436, %v2365, %v2614
        %2616 = vst [vmem:[%s343 + $0x73] sm:$0x1] %v2615
        %v2617 = vld [vmem:[%s343 + $0x74] sm:$0x1]
        %v2618 = vsel %vm2436, %v2366, %v2617
        %2619 = vst [vmem:[%s343 + $0x74] sm:$0x1] %v2618
        %v2620 = vld [vmem:[%s343 + $0x75] sm:$0x1]
        %v2621 = vsel %vm2436, %v2367, %v2620
        %2622 = vst [vmem:[%s343 + $0x75] sm:$0x1] %v2621
        %v2623 = vld [vmem:[%s343 + $0x76] sm:$0x1]
        %v2624 = vsel %vm2436, %v2368, %v2623
        %2625 = vst [vmem:[%s343 + $0x76] sm:$0x1] %v2624
        %v2626 = vld [vmem:[%s343 + $0x77] sm:$0x1]
        %v2627 = vsel %vm2436, %v2369, %v2626
        %2628 = vst [vmem:[%s343 + $0x77] sm:$0x1] %v2627
        %s2629 = scalar_lea.vmem %s387, 2
        %v2630 = vld [vmem:[%s2629] sm:$0x3]
        %v2632 = vsel %vm449, %v2630, 0
        %2634 = vmatprep.subr.bf16.mxu0 0
        %2635 = vmatpush1.bf16.msra.mxu0 %v2632
        %2636 = vmatprep.subr.bf16.mxu0 0
        %2637 = vmatpush1.bf16.msra.mxu0 0
        %2638 = vmatprep.subr.bf16.mxu0 0
        %2639 = vmatpush1.bf16.msra.mxu0 0
        %2640 = vmatprep.subr.bf16.mxu0 0
        %2641 = vmatpush1.bf16.msra.mxu0 0
        %2642 = vmatprep.subr.bf16.mxu0 0
        %2643 = vmatpush1.bf16.msra.mxu0 0
        %2644 = vmatprep.subr.bf16.mxu0 0
        %2645 = vmatpush1.bf16.msra.mxu0 0
        %2646 = vmatprep.subr.bf16.mxu0 0
        %2647 = vmatpush1.bf16.msra.mxu0 0
        %2648 = vmatprep.subr.bf16.mxu0 0
        %2649 = vmatpush1.bf16.msra.mxu0 0
        %2650 = vmatprep.subr.bf16.mxu0 0
        %2651 = vmatpush1.bf16.msra.mxu0 0
        %2652 = vmatprep.subr.bf16.mxu0 0
        %2653 = vmatpush1.bf16.msra.mxu0 0
        %2654 = vmatprep.subr.bf16.mxu0 0
        %2655 = vmatpush1.bf16.msra.mxu0 0
        %2656 = vmatprep.subr.bf16.mxu0 0
        %2657 = vmatpush1.bf16.msra.mxu0 0
        %2658 = vmatprep.subr.bf16.mxu0 0
        %2659 = vmatpush1.bf16.msra.mxu0 0
        %2660 = vmatprep.subr.bf16.mxu0 0
        %2661 = vmatpush1.bf16.msra.mxu0 0
        %2662 = vmatprep.subr.bf16.mxu0 0
        %2663 = vmatpush1.bf16.msra.mxu0 0
        %2664 = vmatprep.subr.bf16.mxu0 0
        %2665 = vmatpush1.bf16.msra.mxu0 0
        %2666 = vmatprep.mubr.bf16.mxu0 0
        %2667 = vmatmul.mubr.bf16.gmra.mrb[0].mxu0 %v991
        %v2668 = vpop.f32.mrb[0].mxu0
        %v2669 = vadd.f32 0.0, %v2668
        %v2670 = vpop.f32.mrb[0].mxu0
        %v2671 = vpop.f32.mrb[0].mxu0
        %v2672 = vadd.f32 0.0, %v2671
        %v2673 = vpop.f32.mrb[0].mxu0
        %2674 = vmatprep.mubr.bf16.mxu0 0
        %2675 = vmatmul.mubr.bf16.gmra.mrb[0].mxu0 %v994
        %v2676 = vpop.f32.mrb[0].mxu0
        %v2677 = vadd.f32 0.0, %v2676
        %v2678 = vpop.f32.mrb[0].mxu0
        %v2679 = vpop.f32.mrb[0].mxu0
        %v2680 = vadd.f32 0.0, %v2679
        %v2681 = vpop.f32.mrb[0].mxu0
        %2682 = vmatprep.mubr.bf16.mxu0 0
        %2683 = vmatmul.mubr.bf16.gmra.mrb[0].mxu0 %v997
        %v2684 = vpop.f32.mrb[0].mxu0
        %v2685 = vadd.f32 0.0, %v2684
        %v2686 = vpop.f32.mrb[0].mxu0
        %v2687 = vpop.f32.mrb[0].mxu0
        %v2688 = vadd.f32 0.0, %v2687
        %v2689 = vpop.f32.mrb[0].mxu0
        %2690 = vmatprep.mubr.bf16.mxu0 0
        %2691 = vmatmul.mubr.bf16.gmra.mrb[0].mxu0 %v1000
        %v2692 = vpop.f32.mrb[0].mxu0
        %v2693 = vadd.f32 0.0, %v2692
        %v2694 = vpop.f32.mrb[0].mxu0
        %v2695 = vpop.f32.mrb[0].mxu0
        %v2696 = vadd.f32 0.0, %v2695
        %v2697 = vpop.f32.mrb[0].mxu0
        %2698 = vdwg.mxu0
        %v2699 = vadd.f32 %v1768, %v2669
        %v2700 = vadd.f32 %v1769, %v2672
        %v2701 = vadd.f32 %v1770, %v2677
        %v2702 = vadd.f32 %v1771, %v2680
        %v2703 = vadd.f32 %v1772, %v2685
        %v2704 = vadd.f32 %v1773, %v2688
        %v2705 = vadd.f32 %v1774, %v2693
        %v2706 = vadd.f32 %v1775, %v2696
        %v2707 = vadd.f32 %v2699, %v2024
        %v2708 = vadd.f32 %v2700, %v2024
        %v2709 = vadd.f32 %v2701, %v2024
        %v2710 = vadd.f32 %v2702, %v2024
        %v2711 = vadd.f32 %v2703, %v2024
        %v2712 = vadd.f32 %v2704, %v2024
        %v2713 = vadd.f32 %v2705, %v2024
        %v2714 = vadd.f32 %v2706, %v2024
        %v2715 = vpack.c.bf16 %v2707, %v2707
        %v2716 = vpack.c.bf16 %v2708, %v2708
        %v2717 = vpack.c.bf16 %v2709, %v2709
        %v2718 = vpack.c.bf16 %v2710, %v2710
        %v2719 = vpack.c.bf16 %v2711, %v2711
        %v2720 = vpack.c.bf16 %v2712, %v2712
        %v2721 = vpack.c.bf16 %v2713, %v2713
        %v2722 = vpack.c.bf16 %v2714, %v2714
        %v2732 = vunpack.c.l.s4 1966171168
        %v2733 = vunpack.c.0.s8 %v2732
        %v2734 = vlaneseq
        %v2735 = vshrl.u32 %v2734, 7
        %v2736 = vsub.s32 %v2733, %v2735
        %v2737 = vrot.slane %v2715, %v2736
        %v2738 = vcombine.high %v2737, %v2737
        %v2740 = vunpack.c.l.s4 1966171168
        %v2741 = vunpack.c.0.s8 %v2740
        %v2742 = vlaneseq
        %v2743 = vshrl.u32 %v2742, 7
        %v2744 = vsub.s32 %v2741, %v2743
        %v2745 = vrot.slane %v2737, %v2744
        %v2747 = vunpack.c.l.s4 1966171168
        %v2748 = vunpack.c.0.s8 %v2747
        %v2749 = vlaneseq
        %v2750 = vshrl.u32 %v2749, 7
        %v2751 = vsub.s32 %v2748, %v2750
        %v2752 = vrot.slane %v2738, %v2751
        %v2753 = vcombine.high %v2745, %v2745
        %v2754 = vcombine.high %v2752, %v2752
        %v2756 = vunpack.c.l.s4 1966171168
        %v2757 = vunpack.c.0.s8 %v2756
        %v2758 = vlaneseq
        %v2759 = vshrl.u32 %v2758, 7
        %v2760 = vsub.s32 %v2757, %v2759
        %v2761 = vrot.slane %v2716, %v2760
        %v2762 = vcombine.high %v2761, %v2761
        %v2764 = vunpack.c.l.s4 1966171168
        %v2765 = vunpack.c.0.s8 %v2764
        %v2766 = vlaneseq
        %v2767 = vshrl.u32 %v2766, 7
        %v2768 = vsub.s32 %v2765, %v2767
        %v2769 = vrot.slane %v2761, %v2768
        %v2771 = vunpack.c.l.s4 1966171168
        %v2772 = vunpack.c.0.s8 %v2771
        %v2773 = vlaneseq
        %v2774 = vshrl.u32 %v2773, 7
        %v2775 = vsub.s32 %v2772, %v2774
        %v2776 = vrot.slane %v2762, %v2775
        %v2777 = vcombine.high %v2769, %v2769
        %v2778 = vcombine.high %v2776, %v2776
        %v2780 = vunpack.c.l.s4 1966171168
        %v2781 = vunpack.c.0.s8 %v2780
        %v2782 = vlaneseq
        %v2783 = vshrl.u32 %v2782, 7
        %v2784 = vsub.s32 %v2781, %v2783
        %v2785 = vrot.slane %v2717, %v2784
        %v2786 = vcombine.high %v2785, %v2785
        %v2788 = vunpack.c.l.s4 1966171168
        %v2789 = vunpack.c.0.s8 %v2788
        %v2790 = vlaneseq
        %v2791 = vshrl.u32 %v2790, 7
        %v2792 = vsub.s32 %v2789, %v2791
        %v2793 = vrot.slane %v2785, %v2792
        %v2795 = vunpack.c.l.s4 1966171168
        %v2796 = vunpack.c.0.s8 %v2795
        %v2797 = vlaneseq
        %v2798 = vshrl.u32 %v2797, 7
        %v2799 = vsub.s32 %v2796, %v2798
        %v2800 = vrot.slane %v2786, %v2799
        %v2801 = vcombine.high %v2793, %v2793
        %v2802 = vcombine.high %v2800, %v2800
        %v2804 = vunpack.c.l.s4 1966171168
        %v2805 = vunpack.c.0.s8 %v2804
        %v2806 = vlaneseq
        %v2807 = vshrl.u32 %v2806, 7
        %v2808 = vsub.s32 %v2805, %v2807
        %v2809 = vrot.slane %v2718, %v2808
        %v2810 = vcombine.high %v2809, %v2809
        %v2812 = vunpack.c.l.s4 1966171168
        %v2813 = vunpack.c.0.s8 %v2812
        %v2814 = vlaneseq
        %v2815 = vshrl.u32 %v2814, 7
        %v2816 = vsub.s32 %v2813, %v2815
        %v2817 = vrot.slane %v2809, %v2816
        %v2819 = vunpack.c.l.s4 1966171168
        %v2820 = vunpack.c.0.s8 %v2819
        %v2821 = vlaneseq
        %v2822 = vshrl.u32 %v2821, 7
        %v2823 = vsub.s32 %v2820, %v2822
        %v2824 = vrot.slane %v2810, %v2823
        %v2825 = vcombine.high %v2817, %v2817
        %v2826 = vcombine.high %v2824, %v2824
        %v2828 = vunpack.c.l.s4 1966171168
        %v2829 = vunpack.c.0.s8 %v2828
        %v2830 = vlaneseq
        %v2831 = vshrl.u32 %v2830, 7
        %v2832 = vsub.s32 %v2829, %v2831
        %v2833 = vrot.slane %v2719, %v2832
        %v2834 = vcombine.high %v2833, %v2833
        %v2836 = vunpack.c.l.s4 1966171168
        %v2837 = vunpack.c.0.s8 %v2836
        %v2838 = vlaneseq
        %v2839 = vshrl.u32 %v2838, 7
        %v2840 = vsub.s32 %v2837, %v2839
        %v2841 = vrot.slane %v2833, %v2840
        %v2843 = vunpack.c.l.s4 1966171168
        %v2844 = vunpack.c.0.s8 %v2843
        %v2845 = vlaneseq
        %v2846 = vshrl.u32 %v2845, 7
        %v2847 = vsub.s32 %v2844, %v2846
        %v2848 = vrot.slane %v2834, %v2847
        %v2849 = vcombine.high %v2841, %v2841
        %v2850 = vcombine.high %v2848, %v2848
        %v2852 = vunpack.c.l.s4 1966171168
        %v2853 = vunpack.c.0.s8 %v2852
        %v2854 = vlaneseq
        %v2855 = vshrl.u32 %v2854, 7
        %v2856 = vsub.s32 %v2853, %v2855
        %v2857 = vrot.slane %v2720, %v2856
        %v2858 = vcombine.high %v2857, %v2857
        %v2860 = vunpack.c.l.s4 1966171168
        %v2861 = vunpack.c.0.s8 %v2860
        %v2862 = vlaneseq
        %v2863 = vshrl.u32 %v2862, 7
        %v2864 = vsub.s32 %v2861, %v2863
        %v2865 = vrot.slane %v2857, %v2864
        %v2867 = vunpack.c.l.s4 1966171168
        %v2868 = vunpack.c.0.s8 %v2867
        %v2869 = vlaneseq
        %v2870 = vshrl.u32 %v2869, 7
        %v2871 = vsub.s32 %v2868, %v2870
        %v2872 = vrot.slane %v2858, %v2871
        %v2873 = vcombine.high %v2865, %v2865
        %v2874 = vcombine.high %v2872, %v2872
        %v2876 = vunpack.c.l.s4 1966171168
        %v2877 = vunpack.c.0.s8 %v2876
        %v2878 = vlaneseq
        %v2879 = vshrl.u32 %v2878, 7
        %v2880 = vsub.s32 %v2877, %v2879
        %v2881 = vrot.slane %v2721, %v2880
        %v2882 = vcombine.high %v2881, %v2881
        %v2884 = vunpack.c.l.s4 1966171168
        %v2885 = vunpack.c.0.s8 %v2884
        %v2886 = vlaneseq
        %v2887 = vshrl.u32 %v2886, 7
        %v2888 = vsub.s32 %v2885, %v2887
        %v2889 = vrot.slane %v2881, %v2888
        %v2891 = vunpack.c.l.s4 1966171168
        %v2892 = vunpack.c.0.s8 %v2891
        %v2893 = vlaneseq
        %v2894 = vshrl.u32 %v2893, 7
        %v2895 = vsub.s32 %v2892, %v2894
        %v2896 = vrot.slane %v2882, %v2895
        %v2897 = vcombine.high %v2889, %v2889
        %v2898 = vcombine.high %v2896, %v2896
        %v2900 = vunpack.c.l.s4 1966171168
        %v2901 = vunpack.c.0.s8 %v2900
        %v2902 = vlaneseq
        %v2903 = vshrl.u32 %v2902, 7
        %v2904 = vsub.s32 %v2901, %v2903
        %v2905 = vrot.slane %v2722, %v2904
        %v2906 = vcombine.high %v2905, %v2905
        %v2908 = vunpack.c.l.s4 1966171168
        %v2909 = vunpack.c.0.s8 %v2908
        %v2910 = vlaneseq
        %v2911 = vshrl.u32 %v2910, 7
        %v2912 = vsub.s32 %v2909, %v2911
        %v2913 = vrot.slane %v2905, %v2912
        %v2915 = vunpack.c.l.s4 1966171168
        %v2916 = vunpack.c.0.s8 %v2915
        %v2917 = vlaneseq
        %v2918 = vshrl.u32 %v2917, 7
        %v2919 = vsub.s32 %v2916, %v2918
        %v2920 = vrot.slane %v2906, %v2919
        %v2921 = vcombine.high %v2913, %v2913
        %v2922 = vcombine.high %v2920, %v2920
        %v2923 = vunpack.i.l.s16 %v2745
        %v2924 = vunpack.i.h.s16 %v2745
        %v2925 = vunpack.i.l.s16 %v2752
        %v2926 = vunpack.i.h.s16 %v2752
        %v2927 = vunpack.i.l.s16 %v2753
        %v2928 = vunpack.i.h.s16 %v2753
        %v2929 = vunpack.i.l.s16 %v2754
        %v2930 = vunpack.i.h.s16 %v2754
        %v2931 = vunpack.i.l.s16 %v2769
        %v2932 = vunpack.i.h.s16 %v2769
        %v2933 = vunpack.i.l.s16 %v2776
        %v2934 = vunpack.i.h.s16 %v2776
        %v2935 = vunpack.i.l.s16 %v2777
        %v2936 = vunpack.i.h.s16 %v2777
        %v2937 = vunpack.i.l.s16 %v2778
        %v2938 = vunpack.i.h.s16 %v2778
        %v2939 = vunpack.i.l.s16 %v2793
        %v2940 = vunpack.i.h.s16 %v2793
        %v2941 = vunpack.i.l.s16 %v2800
        %v2942 = vunpack.i.h.s16 %v2800
        %v2943 = vunpack.i.l.s16 %v2801
        %v2944 = vunpack.i.h.s16 %v2801
        %v2945 = vunpack.i.l.s16 %v2802
        %v2946 = vunpack.i.h.s16 %v2802
        %v2947 = vunpack.i.l.s16 %v2817
        %v2948 = vunpack.i.h.s16 %v2817
        %v2949 = vunpack.i.l.s16 %v2824
        %v2950 = vunpack.i.h.s16 %v2824
        %v2951 = vunpack.i.l.s16 %v2825
        %v2952 = vunpack.i.h.s16 %v2825
        %v2953 = vunpack.i.l.s16 %v2826
        %v2954 = vunpack.i.h.s16 %v2826
        %v2955 = vunpack.i.l.s16 %v2841
        %v2956 = vunpack.i.h.s16 %v2841
        %v2957 = vunpack.i.l.s16 %v2848
        %v2958 = vunpack.i.h.s16 %v2848
        %v2959 = vunpack.i.l.s16 %v2849
        %v2960 = vunpack.i.h.s16 %v2849
        %v2961 = vunpack.i.l.s16 %v2850
        %v2962 = vunpack.i.h.s16 %v2850
        %v2963 = vunpack.i.l.s16 %v2865
        %v2964 = vunpack.i.h.s16 %v2865
        %v2965 = vunpack.i.l.s16 %v2872
        %v2966 = vunpack.i.h.s16 %v2872
        %v2967 = vunpack.i.l.s16 %v2873
        %v2968 = vunpack.i.h.s16 %v2873
        %v2969 = vunpack.i.l.s16 %v2874
        %v2970 = vunpack.i.h.s16 %v2874
        %v2971 = vunpack.i.l.s16 %v2889
        %v2972 = vunpack.i.h.s16 %v2889
        %v2973 = vunpack.i.l.s16 %v2896
        %v2974 = vunpack.i.h.s16 %v2896
        %v2975 = vunpack.i.l.s16 %v2897
        %v2976 = vunpack.i.h.s16 %v2897
        %v2977 = vunpack.i.l.s16 %v2898
        %v2978 = vunpack.i.h.s16 %v2898
        %v2979 = vunpack.i.l.s16 %v2913
        %v2980 = vunpack.i.h.s16 %v2913
        %v2981 = vunpack.i.l.s16 %v2920
        %v2982 = vunpack.i.h.s16 %v2920
        %v2983 = vunpack.i.l.s16 %v2921
        %v2984 = vunpack.i.h.s16 %v2921
        %v2985 = vunpack.i.l.s16 %v2922
        %v2986 = vunpack.i.h.s16 %v2922
        %v2987 = vpack.i.b16 %v2923, %v2923
        %v2988 = vpack.i.b16 %v2924, %v2924
        %v2989 = vpack.i.b16 %v2925, %v2925
        %v2990 = vpack.i.b16 %v2926, %v2926
        %v2991 = vpack.i.b16 %v2927, %v2927
        %v2992 = vpack.i.b16 %v2928, %v2928
        %v2993 = vpack.i.b16 %v2929, %v2929
        %v2994 = vpack.i.b16 %v2930, %v2930
        %v2995 = vpack.i.b16 %v2931, %v2931
        %v2996 = vpack.i.b16 %v2932, %v2932
        %v2997 = vpack.i.b16 %v2933, %v2933
        %v2998 = vpack.i.b16 %v2934, %v2934
        %v2999 = vpack.i.b16 %v2935, %v2935
        %v3000 = vpack.i.b16 %v2936, %v2936
        %v3001 = vpack.i.b16 %v2937, %v2937
        %v3002 = vpack.i.b16 %v2938, %v2938
        %v3003 = vpack.i.b16 %v2939, %v2939
        %v3004 = vpack.i.b16 %v2940, %v2940
        %v3005 = vpack.i.b16 %v2941, %v2941
        %v3006 = vpack.i.b16 %v2942, %v2942
        %v3007 = vpack.i.b16 %v2943, %v2943
        %v3008 = vpack.i.b16 %v2944, %v2944
        %v3009 = vpack.i.b16 %v2945, %v2945
        %v3010 = vpack.i.b16 %v2946, %v2946
        %v3011 = vpack.i.b16 %v2947, %v2947
        %v3012 = vpack.i.b16 %v2948, %v2948
        %v3013 = vpack.i.b16 %v2949, %v2949
        %v3014 = vpack.i.b16 %v2950, %v2950
        %v3015 = vpack.i.b16 %v2951, %v2951
        %v3016 = vpack.i.b16 %v2952, %v2952
        %v3017 = vpack.i.b16 %v2953, %v2953
        %v3018 = vpack.i.b16 %v2954, %v2954
        %v3019 = vpack.i.b16 %v2955, %v2955
        %v3020 = vpack.i.b16 %v2956, %v2956
        %v3021 = vpack.i.b16 %v2957, %v2957
        %v3022 = vpack.i.b16 %v2958, %v2958
        %v3023 = vpack.i.b16 %v2959, %v2959
        %v3024 = vpack.i.b16 %v2960, %v2960
        %v3025 = vpack.i.b16 %v2961, %v2961
        %v3026 = vpack.i.b16 %v2962, %v2962
        %v3027 = vpack.i.b16 %v2963, %v2963
        %v3028 = vpack.i.b16 %v2964, %v2964
        %v3029 = vpack.i.b16 %v2965, %v2965
        %v3030 = vpack.i.b16 %v2966, %v2966
        %v3031 = vpack.i.b16 %v2967, %v2967
        %v3032 = vpack.i.b16 %v2968, %v2968
        %v3033 = vpack.i.b16 %v2969, %v2969
        %v3034 = vpack.i.b16 %v2970, %v2970
        %v3035 = vpack.i.b16 %v2971, %v2971
        %v3036 = vpack.i.b16 %v2972, %v2972
        %v3037 = vpack.i.b16 %v2973, %v2973
        %v3038 = vpack.i.b16 %v2974, %v2974
        %v3039 = vpack.i.b16 %v2975, %v2975
        %v3040 = vpack.i.b16 %v2976, %v2976
        %v3041 = vpack.i.b16 %v2977, %v2977
        %v3042 = vpack.i.b16 %v2978, %v2978
        %v3043 = vpack.i.b16 %v2979, %v2979
        %v3044 = vpack.i.b16 %v2980, %v2980
        %v3045 = vpack.i.b16 %v2981, %v2981
        %v3046 = vpack.i.b16 %v2982, %v2982
        %v3047 = vpack.i.b16 %v2983, %v2983
        %v3048 = vpack.i.b16 %v2984, %v2984
        %v3049 = vpack.i.b16 %v2985, %v2985
        %v3050 = vpack.i.b16 %v2986, %v2986
        %vm3115 = vsmask.f32 7938
        %vm3116 = vmand %vm2434, %vm3115
        %v3117 = vld [vmem:[%s343] sm:$0x1]
        %v3118 = vsel %vm3116, %v2987, %v3117
        %3119 = vst [vmem:[%s343] sm:$0x1] %v3118
        %v3120 = vld [vmem:[%s343 + $0x1] sm:$0x1]
        %v3121 = vsel %vm3116, %v2988, %v3120
        %3122 = vst [vmem:[%s343 + $0x1] sm:$0x1] %v3121
        %v3123 = vld [vmem:[%s343 + $0x2] sm:$0x1]
        %v3124 = vsel %vm3116, %v2989, %v3123
        %3125 = vst [vmem:[%s343 + $0x2] sm:$0x1] %v3124
        %v3126 = vld [vmem:[%s343 + $0x3] sm:$0x1]
        %v3127 = vsel %vm3116, %v2990, %v3126
        %3128 = vst [vmem:[%s343 + $0x3] sm:$0x1] %v3127
        %v3129 = vld [vmem:[%s343 + $0x4] sm:$0x1]
        %v3130 = vsel %vm3116, %v2991, %v3129
        %3131 = vst [vmem:[%s343 + $0x4] sm:$0x1] %v3130
        %v3132 = vld [vmem:[%s343 + $0x5] sm:$0x1]
        %v3133 = vsel %vm3116, %v2992, %v3132
        %3134 = vst [vmem:[%s343 + $0x5] sm:$0x1] %v3133
        %v3135 = vld [vmem:[%s343 + $0x6] sm:$0x1]
        %v3136 = vsel %vm3116, %v2993, %v3135
        %3137 = vst [vmem:[%s343 + $0x6] sm:$0x1] %v3136
        %v3138 = vld [vmem:[%s343 + $0x7] sm:$0x1]
        %v3139 = vsel %vm3116, %v2994, %v3138
        %3140 = vst [vmem:[%s343 + $0x7] sm:$0x1] %v3139
        %v3141 = vld [vmem:[%s343 + $0x10] sm:$0x1]
        %v3142 = vsel %vm3116, %v2995, %v3141
        %3143 = vst [vmem:[%s343 + $0x10] sm:$0x1] %v3142
        %v3144 = vld [vmem:[%s343 + $0x11] sm:$0x1]
        %v3145 = vsel %vm3116, %v2996, %v3144
        %3146 = vst [vmem:[%s343 + $0x11] sm:$0x1] %v3145
        %v3147 = vld [vmem:[%s343 + $0x12] sm:$0x1]
        %v3148 = vsel %vm3116, %v2997, %v3147
        %3149 = vst [vmem:[%s343 + $0x12] sm:$0x1] %v3148
        %v3150 = vld [vmem:[%s343 + $0x13] sm:$0x1]
        %v3151 = vsel %vm3116, %v2998, %v3150
        %3152 = vst [vmem:[%s343 + $0x13] sm:$0x1] %v3151
        %v3153 = vld [vmem:[%s343 + $0x14] sm:$0x1]
        %v3154 = vsel %vm3116, %v2999, %v3153
        %3155 = vst [vmem:[%s343 + $0x14] sm:$0x1] %v3154
        %v3156 = vld [vmem:[%s343 + $0x15] sm:$0x1]
        %v3157 = vsel %vm3116, %v3000, %v3156
        %3158 = vst [vmem:[%s343 + $0x15] sm:$0x1] %v3157
        %v3159 = vld [vmem:[%s343 + $0x16] sm:$0x1]
        %v3160 = vsel %vm3116, %v3001, %v3159
        %3161 = vst [vmem:[%s343 + $0x16] sm:$0x1] %v3160
        %v3162 = vld [vmem:[%s343 + $0x17] sm:$0x1]
        %v3163 = vsel %vm3116, %v3002, %v3162
        %3164 = vst [vmem:[%s343 + $0x17] sm:$0x1] %v3163
        %v3165 = vld [vmem:[%s343 + $0x20] sm:$0x1]
        %v3166 = vsel %vm3116, %v3003, %v3165
        %3167 = vst [vmem:[%s343 + $0x20] sm:$0x1] %v3166
        %v3168 = vld [vmem:[%s343 + $0x21] sm:$0x1]
        %v3169 = vsel %vm3116, %v3004, %v3168
        %3170 = vst [vmem:[%s343 + $0x21] sm:$0x1] %v3169
        %v3171 = vld [vmem:[%s343 + $0x22] sm:$0x1]
        %v3172 = vsel %vm3116, %v3005, %v3171
        %3173 = vst [vmem:[%s343 + $0x22] sm:$0x1] %v3172
        %v3174 = vld [vmem:[%s343 + $0x23] sm:$0x1]
        %v3175 = vsel %vm3116, %v3006, %v3174
        %3176 = vst [vmem:[%s343 + $0x23] sm:$0x1] %v3175
        %v3177 = vld [vmem:[%s343 + $0x24] sm:$0x1]
        %v3178 = vsel %vm3116, %v3007, %v3177
        %3179 = vst [vmem:[%s343 + $0x24] sm:$0x1] %v3178
        %v3180 = vld [vmem:[%s343 + $0x25] sm:$0x1]
        %v3181 = vsel %vm3116, %v3008, %v3180
        %3182 = vst [vmem:[%s343 + $0x25] sm:$0x1] %v3181
        %v3183 = vld [vmem:[%s343 + $0x26] sm:$0x1]
        %v3184 = vsel %vm3116, %v3009, %v3183
        %3185 = vst [vmem:[%s343 + $0x26] sm:$0x1] %v3184
        %v3186 = vld [vmem:[%s343 + $0x27] sm:$0x1]
        %v3187 = vsel %vm3116, %v3010, %v3186
        %3188 = vst [vmem:[%s343 + $0x27] sm:$0x1] %v3187
        %v3189 = vld [vmem:[%s343 + $0x30] sm:$0x1]
        %v3190 = vsel %vm3116, %v3011, %v3189
        %3191 = vst [vmem:[%s343 + $0x30] sm:$0x1] %v3190
        %v3192 = vld [vmem:[%s343 + $0x31] sm:$0x1]
        %v3193 = vsel %vm3116, %v3012, %v3192
        %3194 = vst [vmem:[%s343 + $0x31] sm:$0x1] %v3193
        %v3195 = vld [vmem:[%s343 + $0x32] sm:$0x1]
        %v3196 = vsel %vm3116, %v3013, %v3195
        %3197 = vst [vmem:[%s343 + $0x32] sm:$0x1] %v3196
        %v3198 = vld [vmem:[%s343 + $0x33] sm:$0x1]
        %v3199 = vsel %vm3116, %v3014, %v3198
        %3200 = vst [vmem:[%s343 + $0x33] sm:$0x1] %v3199
        %v3201 = vld [vmem:[%s343 + $0x34] sm:$0x1]
        %v3202 = vsel %vm3116, %v3015, %v3201
        %3203 = vst [vmem:[%s343 + $0x34] sm:$0x1] %v3202
        %v3204 = vld [vmem:[%s343 + $0x35] sm:$0x1]
        %v3205 = vsel %vm3116, %v3016, %v3204
        %3206 = vst [vmem:[%s343 + $0x35] sm:$0x1] %v3205
        %v3207 = vld [vmem:[%s343 + $0x36] sm:$0x1]
        %v3208 = vsel %vm3116, %v3017, %v3207
        %3209 = vst [vmem:[%s343 + $0x36] sm:$0x1] %v3208
        %v3210 = vld [vmem:[%s343 + $0x37] sm:$0x1]
        %v3211 = vsel %vm3116, %v3018, %v3210
        %3212 = vst [vmem:[%s343 + $0x37] sm:$0x1] %v3211
        %v3213 = vld [vmem:[%s343 + $0x40] sm:$0x1]
        %v3214 = vsel %vm3116, %v3019, %v3213
        %3215 = vst [vmem:[%s343 + $0x40] sm:$0x1] %v3214
        %v3216 = vld [vmem:[%s343 + $0x41] sm:$0x1]
        %v3217 = vsel %vm3116, %v3020, %v3216
        %3218 = vst [vmem:[%s343 + $0x41] sm:$0x1] %v3217
        %v3219 = vld [vmem:[%s343 + $0x42] sm:$0x1]
        %v3220 = vsel %vm3116, %v3021, %v3219
        %3221 = vst [vmem:[%s343 + $0x42] sm:$0x1] %v3220
        %v3222 = vld [vmem:[%s343 + $0x43] sm:$0x1]
        %v3223 = vsel %vm3116, %v3022, %v3222
        %3224 = vst [vmem:[%s343 + $0x43] sm:$0x1] %v3223
        %v3225 = vld [vmem:[%s343 + $0x44] sm:$0x1]
        %v3226 = vsel %vm3116, %v3023, %v3225
        %3227 = vst [vmem:[%s343 + $0x44] sm:$0x1] %v3226
        %v3228 = vld [vmem:[%s343 + $0x45] sm:$0x1]
        %v3229 = vsel %vm3116, %v3024, %v3228
        %3230 = vst [vmem:[%s343 + $0x45] sm:$0x1] %v3229
        %v3231 = vld [vmem:[%s343 + $0x46] sm:$0x1]
        %v3232 = vsel %vm3116, %v3025, %v3231
        %3233 = vst [vmem:[%s343 + $0x46] sm:$0x1] %v3232
        %v3234 = vld [vmem:[%s343 + $0x47] sm:$0x1]
        %v3235 = vsel %vm3116, %v3026, %v3234
        %3236 = vst [vmem:[%s343 + $0x47] sm:$0x1] %v3235
        %v3237 = vld [vmem:[%s343 + $0x50] sm:$0x1]
        %v3238 = vsel %vm3116, %v3027, %v3237
        %3239 = vst [vmem:[%s343 + $0x50] sm:$0x1] %v3238
        %v3240 = vld [vmem:[%s343 + $0x51] sm:$0x1]
        %v3241 = vsel %vm3116, %v3028, %v3240
        %3242 = vst [vmem:[%s343 + $0x51] sm:$0x1] %v3241
        %v3243 = vld [vmem:[%s343 + $0x52] sm:$0x1]
        %v3244 = vsel %vm3116, %v3029, %v3243
        %3245 = vst [vmem:[%s343 + $0x52] sm:$0x1] %v3244
        %v3246 = vld [vmem:[%s343 + $0x53] sm:$0x1]
        %v3247 = vsel %vm3116, %v3030, %v3246
        %3248 = vst [vmem:[%s343 + $0x53] sm:$0x1] %v3247
        %v3249 = vld [vmem:[%s343 + $0x54] sm:$0x1]
        %v3250 = vsel %vm3116, %v3031, %v3249
        %3251 = vst [vmem:[%s343 + $0x54] sm:$0x1] %v3250
        %v3252 = vld [vmem:[%s343 + $0x55] sm:$0x1]
        %v3253 = vsel %vm3116, %v3032, %v3252
        %3254 = vst [vmem:[%s343 + $0x55] sm:$0x1] %v3253
        %v3255 = vld [vmem:[%s343 + $0x56] sm:$0x1]
        %v3256 = vsel %vm3116, %v3033, %v3255
        %3257 = vst [vmem:[%s343 + $0x56] sm:$0x1] %v3256
        %v3258 = vld [vmem:[%s343 + $0x57] sm:$0x1]
        %v3259 = vsel %vm3116, %v3034, %v3258
        %3260 = vst [vmem:[%s343 + $0x57] sm:$0x1] %v3259
        %v3261 = vld [vmem:[%s343 + $0x60] sm:$0x1]
        %v3262 = vsel %vm3116, %v3035, %v3261
        %3263 = vst [vmem:[%s343 + $0x60] sm:$0x1] %v3262
        %v3264 = vld [vmem:[%s343 + $0x61] sm:$0x1]
        %v3265 = vsel %vm3116, %v3036, %v3264
        %3266 = vst [vmem:[%s343 + $0x61] sm:$0x1] %v3265
        %v3267 = vld [vmem:[%s343 + $0x62] sm:$0x1]
        %v3268 = vsel %vm3116, %v3037, %v3267
        %3269 = vst [vmem:[%s343 + $0x62] sm:$0x1] %v3268
        %v3270 = vld [vmem:[%s343 + $0x63] sm:$0x1]
        %v3271 = vsel %vm3116, %v3038, %v3270
        %3272 = vst [vmem:[%s343 + $0x63] sm:$0x1] %v3271
        %v3273 = vld [vmem:[%s343 + $0x64] sm:$0x1]
        %v3274 = vsel %vm3116, %v3039, %v3273
        %3275 = vst [vmem:[%s343 + $0x64] sm:$0x1] %v3274
        %v3276 = vld [vmem:[%s343 + $0x65] sm:$0x1]
        %v3277 = vsel %vm3116, %v3040, %v3276
        %3278 = vst [vmem:[%s343 + $0x65] sm:$0x1] %v3277
        %v3279 = vld [vmem:[%s343 + $0x66] sm:$0x1]
        %v3280 = vsel %vm3116, %v3041, %v3279
        %3281 = vst [vmem:[%s343 + $0x66] sm:$0x1] %v3280
        %v3282 = vld [vmem:[%s343 + $0x67] sm:$0x1]
        %v3283 = vsel %vm3116, %v3042, %v3282
        %3284 = vst [vmem:[%s343 + $0x67] sm:$0x1] %v3283
        %v3285 = vld [vmem:[%s343 + $0x70] sm:$0x1]
        %v3286 = vsel %vm3116, %v3043, %v3285
        %3287 = vst [vmem:[%s343 + $0x70] sm:$0x1] %v3286
        %v3288 = vld [vmem:[%s343 + $0x71] sm:$0x1]
        %v3289 = vsel %vm3116, %v3044, %v3288
        %3290 = vst [vmem:[%s343 + $0x71] sm:$0x1] %v3289
        %v3291 = vld [vmem:[%s343 + $0x72] sm:$0x1]
        %v3292 = vsel %vm3116, %v3045, %v3291
        %3293 = vst [vmem:[%s343 + $0x72] sm:$0x1] %v3292
        %v3294 = vld [vmem:[%s343 + $0x73] sm:$0x1]
        %v3295 = vsel %vm3116, %v3046, %v3294
        %3296 = vst [vmem:[%s343 + $0x73] sm:$0x1] %v3295
        %v3297 = vld [vmem:[%s343 + $0x74] sm:$0x1]
        %v3298 = vsel %vm3116, %v3047, %v3297
        %3299 = vst [vmem:[%s343 + $0x74] sm:$0x1] %v3298
        %v3300 = vld [vmem:[%s343 + $0x75] sm:$0x1]
        %v3301 = vsel %vm3116, %v3048, %v3300
        %3302 = vst [vmem:[%s343 + $0x75] sm:$0x1] %v3301
        %v3303 = vld [vmem:[%s343 + $0x76] sm:$0x1]
        %v3304 = vsel %vm3116, %v3049, %v3303
        %3305 = vst [vmem:[%s343 + $0x76] sm:$0x1] %v3304
        %v3306 = vld [vmem:[%s343 + $0x77] sm:$0x1]
        %v3307 = vsel %vm3116, %v3050, %v3306
        %3308 = vst [vmem:[%s343 + $0x77] sm:$0x1] %v3307
        %s3309 = scalar_lea.vmem %s387, 4
        %v3310 = vld [vmem:[%s3309] sm:$0x3]
        %v3312 = vsel %vm449, %v3310, 0
        %3314 = vmatprep.subr.bf16.mxu0 0
        %3315 = vmatpush1.bf16.msra.mxu0 %v3312
        %3316 = vmatprep.subr.bf16.mxu0 0
        %3317 = vmatpush1.bf16.msra.mxu0 0
        %3318 = vmatprep.subr.bf16.mxu0 0
        %3319 = vmatpush1.bf16.msra.mxu0 0
        %3320 = vmatprep.subr.bf16.mxu0 0
        %3321 = vmatpush1.bf16.msra.mxu0 0
        %3322 = vmatprep.subr.bf16.mxu0 0
        %3323 = vmatpush1.bf16.msra.mxu0 0
        %3324 = vmatprep.subr.bf16.mxu0 0
        %3325 = vmatpush1.bf16.msra.mxu0 0
        %3326 = vmatprep.subr.bf16.mxu0 0
        %3327 = vmatpush1.bf16.msra.mxu0 0
        %3328 = vmatprep.subr.bf16.mxu0 0
        %3329 = vmatpush1.bf16.msra.mxu0 0
        %3330 = vmatprep.subr.bf16.mxu0 0
        %3331 = vmatpush1.bf16.msra.mxu0 0
        %3332 = vmatprep.subr.bf16.mxu0 0
        %3333 = vmatpush1.bf16.msra.mxu0 0
        %3334 = vmatprep.subr.bf16.mxu0 0
        %3335 = vmatpush1.bf16.msra.mxu0 0
        %3336 = vmatprep.subr.bf16.mxu0 0
        %3337 = vmatpush1.bf16.msra.mxu0 0
        %3338 = vmatprep.subr.bf16.mxu0 0
        %3339 = vmatpush1.bf16.msra.mxu0 0
        %3340 = vmatprep.subr.bf16.mxu0 0
        %3341 = vmatpush1.bf16.msra.mxu0 0
        %3342 = vmatprep.subr.bf16.mxu0 0
        %3343 = vmatpush1.bf16.msra.mxu0 0
        %3344 = vmatprep.subr.bf16.mxu0 0
        %3345 = vmatpush1.bf16.msra.mxu0 0
        %3346 = vmatprep.mubr.bf16.mxu0 0
        %3347 = vmatmul.mubr.bf16.gmra.mrb[0].mxu0 %v991
        %v3348 = vpop.f32.mrb[0].mxu0
        %v3349 = vadd.f32 0.0, %v3348
        %v3350 = vpop.f32.mrb[0].mxu0
        %v3351 = vpop.f32.mrb[0].mxu0
        %v3352 = vadd.f32 0.0, %v3351
        %v3353 = vpop.f32.mrb[0].mxu0
        %3354 = vmatprep.mubr.bf16.mxu0 0
        %3355 = vmatmul.mubr.bf16.gmra.mrb[0].mxu0 %v994
        %v3356 = vpop.f32.mrb[0].mxu0
        %v3357 = vadd.f32 0.0, %v3356
        %v3358 = vpop.f32.mrb[0].mxu0
        %v3359 = vpop.f32.mrb[0].mxu0
        %v3360 = vadd.f32 0.0, %v3359
        %v3361 = vpop.f32.mrb[0].mxu0
        %3362 = vmatprep.mubr.bf16.mxu0 0
        %3363 = vmatmul.mubr.bf16.gmra.mrb[0].mxu0 %v997
        %v3364 = vpop.f32.mrb[0].mxu0
        %v3365 = vadd.f32 0.0, %v3364
        %v3366 = vpop.f32.mrb[0].mxu0
        %v3367 = vpop.f32.mrb[0].mxu0
        %v3368 = vadd.f32 0.0, %v3367
        %v3369 = vpop.f32.mrb[0].mxu0
        %3370 = vmatprep.mubr.bf16.mxu0 0
        %3371 = vmatmul.mubr.bf16.gmra.mrb[0].mxu0 %v1000
        %v3372 = vpop.f32.mrb[0].mxu0
        %v3373 = vadd.f32 0.0, %v3372
        %v3374 = vpop.f32.mrb[0].mxu0
        %v3375 = vpop.f32.mrb[0].mxu0
        %v3376 = vadd.f32 0.0, %v3375
        %v3377 = vpop.f32.mrb[0].mxu0
        %3378 = vdwg.mxu0
        %v3379 = vadd.f32 %v1385, %v3349
        %v3380 = vadd.f32 %v1386, %v3352
        %v3381 = vadd.f32 %v1387, %v3357
        %v3382 = vadd.f32 %v1388, %v3360
        %v3383 = vadd.f32 %v1389, %v3365
        %v3384 = vadd.f32 %v1390, %v3368
        %v3385 = vadd.f32 %v1391, %v3373
        %v3386 = vadd.f32 %v1392, %v3376
        %v3387 = vadd.f32 %v3379, %v2024
        %v3388 = vadd.f32 %v3380, %v2024
        %v3389 = vadd.f32 %v3381, %v2024
        %v3390 = vadd.f32 %v3382, %v2024
        %v3391 = vadd.f32 %v3383, %v2024
        %v3392 = vadd.f32 %v3384, %v2024
        %v3393 = vadd.f32 %v3385, %v2024
        %v3394 = vadd.f32 %v3386, %v2024
        %v3395 = vpack.c.bf16 %v3387, %v3387
        %v3396 = vpack.c.bf16 %v3388, %v3388
        %v3397 = vpack.c.bf16 %v3389, %v3389
        %v3398 = vpack.c.bf16 %v3390, %v3390
        %v3399 = vpack.c.bf16 %v3391, %v3391
        %v3400 = vpack.c.bf16 %v3392, %v3392
        %v3401 = vpack.c.bf16 %v3393, %v3393
        %v3402 = vpack.c.bf16 %v3394, %v3394
        %v3412 = vunpack.c.l.s4 1966171168
        %v3413 = vunpack.c.0.s8 %v3412
        %v3414 = vlaneseq
        %v3415 = vshrl.u32 %v3414, 7
        %v3416 = vsub.s32 %v3413, %v3415
        %v3417 = vrot.slane %v3395, %v3416
        %v3418 = vcombine.high %v3417, %v3417
        %v3420 = vunpack.c.l.s4 1966171168
        %v3421 = vunpack.c.0.s8 %v3420
        %v3422 = vlaneseq
        %v3423 = vshrl.u32 %v3422, 7
        %v3424 = vsub.s32 %v3421, %v3423
        %v3425 = vrot.slane %v3417, %v3424
        %v3427 = vunpack.c.l.s4 1966171168
        %v3428 = vunpack.c.0.s8 %v3427
        %v3429 = vlaneseq
        %v3430 = vshrl.u32 %v3429, 7
        %v3431 = vsub.s32 %v3428, %v3430
        %v3432 = vrot.slane %v3418, %v3431
        %v3433 = vcombine.high %v3425, %v3425
        %v3434 = vcombine.high %v3432, %v3432
        %v3436 = vunpack.c.l.s4 1966171168
        %v3437 = vunpack.c.0.s8 %v3436
        %v3438 = vlaneseq
        %v3439 = vshrl.u32 %v3438, 7
        %v3440 = vsub.s32 %v3437, %v3439
        %v3441 = vrot.slane %v3396, %v3440
        %v3442 = vcombine.high %v3441, %v3441
        %v3444 = vunpack.c.l.s4 1966171168
        %v3445 = vunpack.c.0.s8 %v3444
        %v3446 = vlaneseq
        %v3447 = vshrl.u32 %v3446, 7
        %v3448 = vsub.s32 %v3445, %v3447
        %v3449 = vrot.slane %v3441, %v3448
        %v3451 = vunpack.c.l.s4 1966171168
        %v3452 = vunpack.c.0.s8 %v3451
        %v3453 = vlaneseq
        %v3454 = vshrl.u32 %v3453, 7
        %v3455 = vsub.s32 %v3452, %v3454
        %v3456 = vrot.slane %v3442, %v3455
        %v3457 = vcombine.high %v3449, %v3449
        %v3458 = vcombine.high %v3456, %v3456
        %v3460 = vunpack.c.l.s4 1966171168
        %v3461 = vunpack.c.0.s8 %v3460
        %v3462 = vlaneseq
        %v3463 = vshrl.u32 %v3462, 7
        %v3464 = vsub.s32 %v3461, %v3463
        %v3465 = vrot.slane %v3397, %v3464
        %v3466 = vcombine.high %v3465, %v3465
        %v3468 = vunpack.c.l.s4 1966171168
        %v3469 = vunpack.c.0.s8 %v3468
        %v3470 = vlaneseq
        %v3471 = vshrl.u32 %v3470, 7
        %v3472 = vsub.s32 %v3469, %v3471
        %v3473 = vrot.slane %v3465, %v3472
        %v3475 = vunpack.c.l.s4 1966171168
        %v3476 = vunpack.c.0.s8 %v3475
        %v3477 = vlaneseq
        %v3478 = vshrl.u32 %v3477, 7
        %v3479 = vsub.s32 %v3476, %v3478
        %v3480 = vrot.slane %v3466, %v3479
        %v3481 = vcombine.high %v3473, %v3473
        %v3482 = vcombine.high %v3480, %v3480
        %v3484 = vunpack.c.l.s4 1966171168
        %v3485 = vunpack.c.0.s8 %v3484
        %v3486 = vlaneseq
        %v3487 = vshrl.u32 %v3486, 7
        %v3488 = vsub.s32 %v3485, %v3487
        %v3489 = vrot.slane %v3398, %v3488
        %v3490 = vcombine.high %v3489, %v3489
        %v3492 = vunpack.c.l.s4 1966171168
        %v3493 = vunpack.c.0.s8 %v3492
        %v3494 = vlaneseq
        %v3495 = vshrl.u32 %v3494, 7
        %v3496 = vsub.s32 %v3493, %v3495
        %v3497 = vrot.slane %v3489, %v3496
        %v3499 = vunpack.c.l.s4 1966171168
        %v3500 = vunpack.c.0.s8 %v3499
        %v3501 = vlaneseq
        %v3502 = vshrl.u32 %v3501, 7
        %v3503 = vsub.s32 %v3500, %v3502
        %v3504 = vrot.slane %v3490, %v3503
        %v3505 = vcombine.high %v3497, %v3497
        %v3506 = vcombine.high %v3504, %v3504
        %v3508 = vunpack.c.l.s4 1966171168
        %v3509 = vunpack.c.0.s8 %v3508
        %v3510 = vlaneseq
        %v3511 = vshrl.u32 %v3510, 7
        %v3512 = vsub.s32 %v3509, %v3511
        %v3513 = vrot.slane %v3399, %v3512
        %v3514 = vcombine.high %v3513, %v3513
        %v3516 = vunpack.c.l.s4 1966171168
        %v3517 = vunpack.c.0.s8 %v3516
        %v3518 = vlaneseq
        %v3519 = vshrl.u32 %v3518, 7
        %v3520 = vsub.s32 %v3517, %v3519
        %v3521 = vrot.slane %v3513, %v3520
        %v3523 = vunpack.c.l.s4 1966171168
        %v3524 = vunpack.c.0.s8 %v3523
        %v3525 = vlaneseq
        %v3526 = vshrl.u32 %v3525, 7
        %v3527 = vsub.s32 %v3524, %v3526
        %v3528 = vrot.slane %v3514, %v3527
        %v3529 = vcombine.high %v3521, %v3521
        %v3530 = vcombine.high %v3528, %v3528
        %v3532 = vunpack.c.l.s4 1966171168
        %v3533 = vunpack.c.0.s8 %v3532
        %v3534 = vlaneseq
        %v3535 = vshrl.u32 %v3534, 7
        %v3536 = vsub.s32 %v3533, %v3535
        %v3537 = vrot.slane %v3400, %v3536
        %v3538 = vcombine.high %v3537, %v3537
        %v3540 = vunpack.c.l.s4 1966171168
        %v3541 = vunpack.c.0.s8 %v3540
        %v3542 = vlaneseq
        %v3543 = vshrl.u32 %v3542, 7
        %v3544 = vsub.s32 %v3541, %v3543
        %v3545 = vrot.slane %v3537, %v3544
        %v3547 = vunpack.c.l.s4 1966171168
        %v3548 = vunpack.c.0.s8 %v3547
        %v3549 = vlaneseq
        %v3550 = vshrl.u32 %v3549, 7
        %v3551 = vsub.s32 %v3548, %v3550
        %v3552 = vrot.slane %v3538, %v3551
        %v3553 = vcombine.high %v3545, %v3545
        %v3554 = vcombine.high %v3552, %v3552
        %v3556 = vunpack.c.l.s4 1966171168
        %v3557 = vunpack.c.0.s8 %v3556
        %v3558 = vlaneseq
        %v3559 = vshrl.u32 %v3558, 7
        %v3560 = vsub.s32 %v3557, %v3559
        %v3561 = vrot.slane %v3401, %v3560
        %v3562 = vcombine.high %v3561, %v3561
        %v3564 = vunpack.c.l.s4 1966171168
        %v3565 = vunpack.c.0.s8 %v3564
        %v3566 = vlaneseq
        %v3567 = vshrl.u32 %v3566, 7
        %v3568 = vsub.s32 %v3565, %v3567
        %v3569 = vrot.slane %v3561, %v3568
        %v3571 = vunpack.c.l.s4 1966171168
        %v3572 = vunpack.c.0.s8 %v3571
        %v3573 = vlaneseq
        %v3574 = vshrl.u32 %v3573, 7
        %v3575 = vsub.s32 %v3572, %v3574
        %v3576 = vrot.slane %v3562, %v3575
        %v3577 = vcombine.high %v3569, %v3569
        %v3578 = vcombine.high %v3576, %v3576
        %v3580 = vunpack.c.l.s4 1966171168
        %v3581 = vunpack.c.0.s8 %v3580
        %v3582 = vlaneseq
        %v3583 = vshrl.u32 %v3582, 7
        %v3584 = vsub.s32 %v3581, %v3583
        %v3585 = vrot.slane %v3402, %v3584
        %v3586 = vcombine.high %v3585, %v3585
        %v3588 = vunpack.c.l.s4 1966171168
        %v3589 = vunpack.c.0.s8 %v3588
        %v3590 = vlaneseq
        %v3591 = vshrl.u32 %v3590, 7
        %v3592 = vsub.s32 %v3589, %v3591
        %v3593 = vrot.slane %v3585, %v3592
        %v3595 = vunpack.c.l.s4 1966171168
        %v3596 = vunpack.c.0.s8 %v3595
        %v3597 = vlaneseq
        %v3598 = vshrl.u32 %v3597, 7
        %v3599 = vsub.s32 %v3596, %v3598
        %v3600 = vrot.slane %v3586, %v3599
        %v3601 = vcombine.high %v3593, %v3593
        %v3602 = vcombine.high %v3600, %v3600
        %v3603 = vunpack.i.l.s16 %v3425
        %v3604 = vunpack.i.h.s16 %v3425
        %v3605 = vunpack.i.l.s16 %v3432
        %v3606 = vunpack.i.h.s16 %v3432
        %v3607 = vunpack.i.l.s16 %v3433
        %v3608 = vunpack.i.h.s16 %v3433
        %v3609 = vunpack.i.l.s16 %v3434
        %v3610 = vunpack.i.h.s16 %v3434
        %v3611 = vunpack.i.l.s16 %v3449
        %v3612 = vunpack.i.h.s16 %v3449
        %v3613 = vunpack.i.l.s16 %v3456
        %v3614 = vunpack.i.h.s16 %v3456
        %v3615 = vunpack.i.l.s16 %v3457
        %v3616 = vunpack.i.h.s16 %v3457
        %v3617 = vunpack.i.l.s16 %v3458
        %v3618 = vunpack.i.h.s16 %v3458
        %v3619 = vunpack.i.l.s16 %v3473
        %v3620 = vunpack.i.h.s16 %v3473
        %v3621 = vunpack.i.l.s16 %v3480
        %v3622 = vunpack.i.h.s16 %v3480
        %v3623 = vunpack.i.l.s16 %v3481
        %v3624 = vunpack.i.h.s16 %v3481
        %v3625 = vunpack.i.l.s16 %v3482
        %v3626 = vunpack.i.h.s16 %v3482
        %v3627 = vunpack.i.l.s16 %v3497
        %v3628 = vunpack.i.h.s16 %v3497
        %v3629 = vunpack.i.l.s16 %v3504
        %v3630 = vunpack.i.h.s16 %v3504
        %v3631 = vunpack.i.l.s16 %v3505
        %v3632 = vunpack.i.h.s16 %v3505
        %v3633 = vunpack.i.l.s16 %v3506
        %v3634 = vunpack.i.h.s16 %v3506
        %v3635 = vunpack.i.l.s16 %v3521
        %v3636 = vunpack.i.h.s16 %v3521
        %v3637 = vunpack.i.l.s16 %v3528
        %v3638 = vunpack.i.h.s16 %v3528
        %v3639 = vunpack.i.l.s16 %v3529
        %v3640 = vunpack.i.h.s16 %v3529
        %v3641 = vunpack.i.l.s16 %v3530
        %v3642 = vunpack.i.h.s16 %v3530
        %v3643 = vunpack.i.l.s16 %v3545
        %v3644 = vunpack.i.h.s16 %v3545
        %v3645 = vunpack.i.l.s16 %v3552
        %v3646 = vunpack.i.h.s16 %v3552
        %v3647 = vunpack.i.l.s16 %v3553
        %v3648 = vunpack.i.h.s16 %v3553
        %v3649 = vunpack.i.l.s16 %v3554
        %v3650 = vunpack.i.h.s16 %v3554
        %v3651 = vunpack.i.l.s16 %v3569
        %v3652 = vunpack.i.h.s16 %v3569
        %v3653 = vunpack.i.l.s16 %v3576
        %v3654 = vunpack.i.h.s16 %v3576
        %v3655 = vunpack.i.l.s16 %v3577
        %v3656 = vunpack.i.h.s16 %v3577
        %v3657 = vunpack.i.l.s16 %v3578
        %v3658 = vunpack.i.h.s16 %v3578
        %v3659 = vunpack.i.l.s16 %v3593
        %v3660 = vunpack.i.h.s16 %v3593
        %v3661 = vunpack.i.l.s16 %v3600
        %v3662 = vunpack.i.h.s16 %v3600
        %v3663 = vunpack.i.l.s16 %v3601
        %v3664 = vunpack.i.h.s16 %v3601
        %v3665 = vunpack.i.l.s16 %v3602
        %v3666 = vunpack.i.h.s16 %v3602
        %v3667 = vpack.i.b16 %v3603, %v3603
        %v3668 = vpack.i.b16 %v3604, %v3604
        %v3669 = vpack.i.b16 %v3605, %v3605
        %v3670 = vpack.i.b16 %v3606, %v3606
        %v3671 = vpack.i.b16 %v3607, %v3607
        %v3672 = vpack.i.b16 %v3608, %v3608
        %v3673 = vpack.i.b16 %v3609, %v3609
        %v3674 = vpack.i.b16 %v3610, %v3610
        %v3675 = vpack.i.b16 %v3611, %v3611
        %v3676 = vpack.i.b16 %v3612, %v3612
        %v3677 = vpack.i.b16 %v3613, %v3613
        %v3678 = vpack.i.b16 %v3614, %v3614
        %v3679 = vpack.i.b16 %v3615, %v3615
        %v3680 = vpack.i.b16 %v3616, %v3616
        %v3681 = vpack.i.b16 %v3617, %v3617
        %v3682 = vpack.i.b16 %v3618, %v3618
        %v3683 = vpack.i.b16 %v3619, %v3619
        %v3684 = vpack.i.b16 %v3620, %v3620
        %v3685 = vpack.i.b16 %v3621, %v3621
        %v3686 = vpack.i.b16 %v3622, %v3622
        %v3687 = vpack.i.b16 %v3623, %v3623
        %v3688 = vpack.i.b16 %v3624, %v3624
        %v3689 = vpack.i.b16 %v3625, %v3625
        %v3690 = vpack.i.b16 %v3626, %v3626
        %v3691 = vpack.i.b16 %v3627, %v3627
        %v3692 = vpack.i.b16 %v3628, %v3628
        %v3693 = vpack.i.b16 %v3629, %v3629
        %v3694 = vpack.i.b16 %v3630, %v3630
        %v3695 = vpack.i.b16 %v3631, %v3631
        %v3696 = vpack.i.b16 %v3632, %v3632
        %v3697 = vpack.i.b16 %v3633, %v3633
        %v3698 = vpack.i.b16 %v3634, %v3634
        %v3699 = vpack.i.b16 %v3635, %v3635
        %v3700 = vpack.i.b16 %v3636, %v3636
        %v3701 = vpack.i.b16 %v3637, %v3637
        %v3702 = vpack.i.b16 %v3638, %v3638
        %v3703 = vpack.i.b16 %v3639, %v3639
        %v3704 = vpack.i.b16 %v3640, %v3640
        %v3705 = vpack.i.b16 %v3641, %v3641
        %v3706 = vpack.i.b16 %v3642, %v3642
        %v3707 = vpack.i.b16 %v3643, %v3643
        %v3708 = vpack.i.b16 %v3644, %v3644
        %v3709 = vpack.i.b16 %v3645, %v3645
        %v3710 = vpack.i.b16 %v3646, %v3646
        %v3711 = vpack.i.b16 %v3647, %v3647
        %v3712 = vpack.i.b16 %v3648, %v3648
        %v3713 = vpack.i.b16 %v3649, %v3649
        %v3714 = vpack.i.b16 %v3650, %v3650
        %v3715 = vpack.i.b16 %v3651, %v3651
        %v3716 = vpack.i.b16 %v3652, %v3652
        %v3717 = vpack.i.b16 %v3653, %v3653
        %v3718 = vpack.i.b16 %v3654, %v3654
        %v3719 = vpack.i.b16 %v3655, %v3655
        %v3720 = vpack.i.b16 %v3656, %v3656
        %v3721 = vpack.i.b16 %v3657, %v3657
        %v3722 = vpack.i.b16 %v3658, %v3658
        %v3723 = vpack.i.b16 %v3659, %v3659
        %v3724 = vpack.i.b16 %v3660, %v3660
        %v3725 = vpack.i.b16 %v3661, %v3661
        %v3726 = vpack.i.b16 %v3662, %v3662
        %v3727 = vpack.i.b16 %v3663, %v3663
        %v3728 = vpack.i.b16 %v3664, %v3664
        %v3729 = vpack.i.b16 %v3665, %v3665
        %v3730 = vpack.i.b16 %v3666, %v3666
        %s3795 = scalar_lea.vmem %s343, 8 [#allocation2]
        %v3796 = vld [vmem:[%s3795] sm:$0x1]
        %v3797 = vsel %vm2436, %v3667, %v3796
        %3798 = vst [vmem:[%s3795] sm:$0x1] %v3797
        %v3799 = vld [vmem:[%s3795 + $0x1] sm:$0x1]
        %v3800 = vsel %vm2436, %v3668, %v3799
        %3801 = vst [vmem:[%s3795 + $0x1] sm:$0x1] %v3800
        %v3802 = vld [vmem:[%s3795 + $0x2] sm:$0x1]
        %v3803 = vsel %vm2436, %v3669, %v3802
        %3804 = vst [vmem:[%s3795 + $0x2] sm:$0x1] %v3803
        %v3805 = vld [vmem:[%s3795 + $0x3] sm:$0x1]
        %v3806 = vsel %vm2436, %v3670, %v3805
        %3807 = vst [vmem:[%s3795 + $0x3] sm:$0x1] %v3806
        %v3808 = vld [vmem:[%s3795 + $0x4] sm:$0x1]
        %v3809 = vsel %vm2436, %v3671, %v3808
        %3810 = vst [vmem:[%s3795 + $0x4] sm:$0x1] %v3809
        %v3811 = vld [vmem:[%s3795 + $0x5] sm:$0x1]
        %v3812 = vsel %vm2436, %v3672, %v3811
        %3813 = vst [vmem:[%s3795 + $0x5] sm:$0x1] %v3812
        %v3814 = vld [vmem:[%s3795 + $0x6] sm:$0x1]
        %v3815 = vsel %vm2436, %v3673, %v3814
        %3816 = vst [vmem:[%s3795 + $0x6] sm:$0x1] %v3815
        %v3817 = vld [vmem:[%s3795 + $0x7] sm:$0x1]
        %v3818 = vsel %vm2436, %v3674, %v3817
        %3819 = vst [vmem:[%s3795 + $0x7] sm:$0x1] %v3818
        %v3820 = vld [vmem:[%s3795 + $0x10] sm:$0x1]
        %v3821 = vsel %vm2436, %v3675, %v3820
        %3822 = vst [vmem:[%s3795 + $0x10] sm:$0x1] %v3821
        %v3823 = vld [vmem:[%s3795 + $0x11] sm:$0x1]
        %v3824 = vsel %vm2436, %v3676, %v3823
        %3825 = vst [vmem:[%s3795 + $0x11] sm:$0x1] %v3824
        %v3826 = vld [vmem:[%s3795 + $0x12] sm:$0x1]
        %v3827 = vsel %vm2436, %v3677, %v3826
        %3828 = vst [vmem:[%s3795 + $0x12] sm:$0x1] %v3827
        %v3829 = vld [vmem:[%s3795 + $0x13] sm:$0x1]
        %v3830 = vsel %vm2436, %v3678, %v3829
        %3831 = vst [vmem:[%s3795 + $0x13] sm:$0x1] %v3830
        %v3832 = vld [vmem:[%s3795 + $0x14] sm:$0x1]
        %v3833 = vsel %vm2436, %v3679, %v3832
        %3834 = vst [vmem:[%s3795 + $0x14] sm:$0x1] %v3833
        %v3835 = vld [vmem:[%s3795 + $0x15] sm:$0x1]
        %v3836 = vsel %vm2436, %v3680, %v3835
        %3837 = vst [vmem:[%s3795 + $0x15] sm:$0x1] %v3836
        %v3838 = vld [vmem:[%s3795 + $0x16] sm:$0x1]
        %v3839 = vsel %vm2436, %v3681, %v3838
        %3840 = vst [vmem:[%s3795 + $0x16] sm:$0x1] %v3839
        %v3841 = vld [vmem:[%s3795 + $0x17] sm:$0x1]
        %v3842 = vsel %vm2436, %v3682, %v3841
        %3843 = vst [vmem:[%s3795 + $0x17] sm:$0x1] %v3842
        %v3844 = vld [vmem:[%s3795 + $0x20] sm:$0x1]
        %v3845 = vsel %vm2436, %v3683, %v3844
        %3846 = vst [vmem:[%s3795 + $0x20] sm:$0x1] %v3845
        %v3847 = vld [vmem:[%s3795 + $0x21] sm:$0x1]
        %v3848 = vsel %vm2436, %v3684, %v3847
        %3849 = vst [vmem:[%s3795 + $0x21] sm:$0x1] %v3848
        %v3850 = vld [vmem:[%s3795 + $0x22] sm:$0x1]
        %v3851 = vsel %vm2436, %v3685, %v3850
        %3852 = vst [vmem:[%s3795 + $0x22] sm:$0x1] %v3851
        %v3853 = vld [vmem:[%s3795 + $0x23] sm:$0x1]
        %v3854 = vsel %vm2436, %v3686, %v3853
        %3855 = vst [vmem:[%s3795 + $0x23] sm:$0x1] %v3854
        %v3856 = vld [vmem:[%s3795 + $0x24] sm:$0x1]
        %v3857 = vsel %vm2436, %v3687, %v3856
        %3858 = vst [vmem:[%s3795 + $0x24] sm:$0x1] %v3857
        %v3859 = vld [vmem:[%s3795 + $0x25] sm:$0x1]
        %v3860 = vsel %vm2436, %v3688, %v3859
        %3861 = vst [vmem:[%s3795 + $0x25] sm:$0x1] %v3860
        %v3862 = vld [vmem:[%s3795 + $0x26] sm:$0x1]
        %v3863 = vsel %vm2436, %v3689, %v3862
        %3864 = vst [vmem:[%s3795 + $0x26] sm:$0x1] %v3863
        %v3865 = vld [vmem:[%s3795 + $0x27] sm:$0x1]
        %v3866 = vsel %vm2436, %v3690, %v3865
        %3867 = vst [vmem:[%s3795 + $0x27] sm:$0x1] %v3866
        %v3868 = vld [vmem:[%s3795 + $0x30] sm:$0x1]
        %v3869 = vsel %vm2436, %v3691, %v3868
        %3870 = vst [vmem:[%s3795 + $0x30] sm:$0x1] %v3869
        %v3871 = vld [vmem:[%s3795 + $0x31] sm:$0x1]
        %v3872 = vsel %vm2436, %v3692, %v3871
        %3873 = vst [vmem:[%s3795 + $0x31] sm:$0x1] %v3872
        %v3874 = vld [vmem:[%s3795 + $0x32] sm:$0x1]
        %v3875 = vsel %vm2436, %v3693, %v3874
        %3876 = vst [vmem:[%s3795 + $0x32] sm:$0x1] %v3875
        %v3877 = vld [vmem:[%s3795 + $0x33] sm:$0x1]
        %v3878 = vsel %vm2436, %v3694, %v3877
        %3879 = vst [vmem:[%s3795 + $0x33] sm:$0x1] %v3878
        %v3880 = vld [vmem:[%s3795 + $0x34] sm:$0x1]
        %v3881 = vsel %vm2436, %v3695, %v3880
        %3882 = vst [vmem:[%s3795 + $0x34] sm:$0x1] %v3881
        %v3883 = vld [vmem:[%s3795 + $0x35] sm:$0x1]
        %v3884 = vsel %vm2436, %v3696, %v3883
        %3885 = vst [vmem:[%s3795 + $0x35] sm:$0x1] %v3884
        %v3886 = vld [vmem:[%s3795 + $0x36] sm:$0x1]
        %v3887 = vsel %vm2436, %v3697, %v3886
        %3888 = vst [vmem:[%s3795 + $0x36] sm:$0x1] %v3887
        %v3889 = vld [vmem:[%s3795 + $0x37] sm:$0x1]
        %v3890 = vsel %vm2436, %v3698, %v3889
        %3891 = vst [vmem:[%s3795 + $0x37] sm:$0x1] %v3890
        %v3892 = vld [vmem:[%s3795 + $0x40] sm:$0x1]
        %v3893 = vsel %vm2436, %v3699, %v3892
        %3894 = vst [vmem:[%s3795 + $0x40] sm:$0x1] %v3893
        %v3895 = vld [vmem:[%s3795 + $0x41] sm:$0x1]
        %v3896 = vsel %vm2436, %v3700, %v3895
        %3897 = vst [vmem:[%s3795 + $0x41] sm:$0x1] %v3896
        %v3898 = vld [vmem:[%s3795 + $0x42] sm:$0x1]
        %v3899 = vsel %vm2436, %v3701, %v3898
        %3900 = vst [vmem:[%s3795 + $0x42] sm:$0x1] %v3899
        %v3901 = vld [vmem:[%s3795 + $0x43] sm:$0x1]
        %v3902 = vsel %vm2436, %v3702, %v3901
        %3903 = vst [vmem:[%s3795 + $0x43] sm:$0x1] %v3902
        %v3904 = vld [vmem:[%s3795 + $0x44] sm:$0x1]
        %v3905 = vsel %vm2436, %v3703, %v3904
        %3906 = vst [vmem:[%s3795 + $0x44] sm:$0x1] %v3905
        %v3907 = vld [vmem:[%s3795 + $0x45] sm:$0x1]
        %v3908 = vsel %vm2436, %v3704, %v3907
        %3909 = vst [vmem:[%s3795 + $0x45] sm:$0x1] %v3908
        %v3910 = vld [vmem:[%s3795 + $0x46] sm:$0x1]
        %v3911 = vsel %vm2436, %v3705, %v3910
        %3912 = vst [vmem:[%s3795 + $0x46] sm:$0x1] %v3911
        %v3913 = vld [vmem:[%s3795 + $0x47] sm:$0x1]
        %v3914 = vsel %vm2436, %v3706, %v3913
        %3915 = vst [vmem:[%s3795 + $0x47] sm:$0x1] %v3914
        %v3916 = vld [vmem:[%s3795 + $0x50] sm:$0x1]
        %v3917 = vsel %vm2436, %v3707, %v3916
        %3918 = vst [vmem:[%s3795 + $0x50] sm:$0x1] %v3917
        %v3919 = vld [vmem:[%s3795 + $0x51] sm:$0x1]
        %v3920 = vsel %vm2436, %v3708, %v3919
        %3921 = vst [vmem:[%s3795 + $0x51] sm:$0x1] %v3920
        %v3922 = vld [vmem:[%s3795 + $0x52] sm:$0x1]
        %v3923 = vsel %vm2436, %v3709, %v3922
        %3924 = vst [vmem:[%s3795 + $0x52] sm:$0x1] %v3923
        %v3925 = vld [vmem:[%s3795 + $0x53] sm:$0x1]
        %v3926 = vsel %vm2436, %v3710, %v3925
        %3927 = vst [vmem:[%s3795 + $0x53] sm:$0x1] %v3926
        %v3928 = vld [vmem:[%s3795 + $0x54] sm:$0x1]
        %v3929 = vsel %vm2436, %v3711, %v3928
        %3930 = vst [vmem:[%s3795 + $0x54] sm:$0x1] %v3929
        %v3931 = vld [vmem:[%s3795 + $0x55] sm:$0x1]
        %v3932 = vsel %vm2436, %v3712, %v3931
        %3933 = vst [vmem:[%s3795 + $0x55] sm:$0x1] %v3932
        %v3934 = vld [vmem:[%s3795 + $0x56] sm:$0x1]
        %v3935 = vsel %vm2436, %v3713, %v3934
        %3936 = vst [vmem:[%s3795 + $0x56] sm:$0x1] %v3935
        %v3937 = vld [vmem:[%s3795 + $0x57] sm:$0x1]
        %v3938 = vsel %vm2436, %v3714, %v3937
        %3939 = vst [vmem:[%s3795 + $0x57] sm:$0x1] %v3938
        %v3940 = vld [vmem:[%s3795 + $0x60] sm:$0x1]
        %v3941 = vsel %vm2436, %v3715, %v3940
        %3942 = vst [vmem:[%s3795 + $0x60] sm:$0x1] %v3941
        %v3943 = vld [vmem:[%s3795 + $0x61] sm:$0x1]
        %v3944 = vsel %vm2436, %v3716, %v3943
        %3945 = vst [vmem:[%s3795 + $0x61] sm:$0x1] %v3944
        %v3946 = vld [vmem:[%s3795 + $0x62] sm:$0x1]
        %v3947 = vsel %vm2436, %v3717, %v3946
        %3948 = vst [vmem:[%s3795 + $0x62] sm:$0x1] %v3947
        %v3949 = vld [vmem:[%s3795 + $0x63] sm:$0x1]
        %v3950 = vsel %vm2436, %v3718, %v3949
        %3951 = vst [vmem:[%s3795 + $0x63] sm:$0x1] %v3950
        %v3952 = vld [vmem:[%s3795 + $0x64] sm:$0x1]
        %v3953 = vsel %vm2436, %v3719, %v3952
        %3954 = vst [vmem:[%s3795 + $0x64] sm:$0x1] %v3953
        %v3955 = vld [vmem:[%s3795 + $0x65] sm:$0x1]
        %v3956 = vsel %vm2436, %v3720, %v3955
        %3957 = vst [vmem:[%s3795 + $0x65] sm:$0x1] %v3956
        %v3958 = vld [vmem:[%s3795 + $0x66] sm:$0x1]
        %v3959 = vsel %vm2436, %v3721, %v3958
        %3960 = vst [vmem:[%s3795 + $0x66] sm:$0x1] %v3959
        %v3961 = vld [vmem:[%s3795 + $0x67] sm:$0x1]
        %v3962 = vsel %vm2436, %v3722, %v3961
        %3963 = vst [vmem:[%s3795 + $0x67] sm:$0x1] %v3962
        %v3964 = vld [vmem:[%s3795 + $0x70] sm:$0x1]
        %v3965 = vsel %vm2436, %v3723, %v3964
        %3966 = vst [vmem:[%s3795 + $0x70] sm:$0x1] %v3965
        %v3967 = vld [vmem:[%s3795 + $0x71] sm:$0x1]
        %v3968 = vsel %vm2436, %v3724, %v3967
        %3969 = vst [vmem:[%s3795 + $0x71] sm:$0x1] %v3968
        %v3970 = vld [vmem:[%s3795 + $0x72] sm:$0x1]
        %v3971 = vsel %vm2436, %v3725, %v3970
        %3972 = vst [vmem:[%s3795 + $0x72] sm:$0x1] %v3971
        %v3973 = vld [vmem:[%s3795 + $0x73] sm:$0x1]
        %v3974 = vsel %vm2436, %v3726, %v3973
        %3975 = vst [vmem:[%s3795 + $0x73] sm:$0x1] %v3974
        %v3976 = vld [vmem:[%s3795 + $0x74] sm:$0x1]
        %v3977 = vsel %vm2436, %v3727, %v3976
        %3978 = vst [vmem:[%s3795 + $0x74] sm:$0x1] %v3977
        %v3979 = vld [vmem:[%s3795 + $0x75] sm:$0x1]
        %v3980 = vsel %vm2436, %v3728, %v3979
        %3981 = vst [vmem:[%s3795 + $0x75] sm:$0x1] %v3980
        %v3982 = vld [vmem:[%s3795 + $0x76] sm:$0x1]
        %v3983 = vsel %vm2436, %v3729, %v3982
        %3984 = vst [vmem:[%s3795 + $0x76] sm:$0x1] %v3983
        %v3985 = vld [vmem:[%s3795 + $0x77] sm:$0x1]
        %v3986 = vsel %vm2436, %v3730, %v3985
        %3987 = vst [vmem:[%s3795 + $0x77] sm:$0x1] %v3986
        %s3988 = scalar_lea.vmem %s387, 6
        %v3989 = vld [vmem:[%s3988] sm:$0x3]
        %v3991 = vsel %vm449, %v3989, 0
        %3993 = vmatprep.subr.bf16.mxu0 0
        %3994 = vmatpush1.bf16.msra.mxu0 %v3991
        %3995 = vmatprep.subr.bf16.mxu0 0
        %3996 = vmatpush1.bf16.msra.mxu0 0
        %3997 = vmatprep.subr.bf16.mxu0 0
        %3998 = vmatpush1.bf16.msra.mxu0 0
        %3999 = vmatprep.subr.bf16.mxu0 0
        %4000 = vmatpush1.bf16.msra.mxu0 0
        %4001 = vmatprep.subr.bf16.mxu0 0
        %4002 = vmatpush1.bf16.msra.mxu0 0
        %4003 = vmatprep.subr.bf16.mxu0 0
        %4004 = vmatpush1.bf16.msra.mxu0 0
        %4005 = vmatprep.subr.bf16.mxu0 0
        %4006 = vmatpush1.bf16.msra.mxu0 0
        %4007 = vmatprep.subr.bf16.mxu0 0
        %4008 = vmatpush1.bf16.msra.mxu0 0
        %4009 = vmatprep.subr.bf16.mxu0 0
        %4010 = vmatpush1.bf16.msra.mxu0 0
        %4011 = vmatprep.subr.bf16.mxu0 0
        %4012 = vmatpush1.bf16.msra.mxu0 0
        %4013 = vmatprep.subr.bf16.mxu0 0
        %4014 = vmatpush1.bf16.msra.mxu0 0
        %4015 = vmatprep.subr.bf16.mxu0 0
        %4016 = vmatpush1.bf16.msra.mxu0 0
        %4017 = vmatprep.subr.bf16.mxu0 0
        %4018 = vmatpush1.bf16.msra.mxu0 0
        %4019 = vmatprep.subr.bf16.mxu0 0
        %4020 = vmatpush1.bf16.msra.mxu0 0
        %4021 = vmatprep.subr.bf16.mxu0 0
        %4022 = vmatpush1.bf16.msra.mxu0 0
        %4023 = vmatprep.subr.bf16.mxu0 0
        %4024 = vmatpush1.bf16.msra.mxu0 0
        %4025 = vmatprep.mubr.bf16.mxu0 0
        %4026 = vmatmul.mubr.bf16.gmra.mrb[0].mxu0 %v991
        %v4027 = vpop.f32.mrb[0].mxu0
        %v4028 = vadd.f32 0.0, %v4027
        %v4029 = vpop.f32.mrb[0].mxu0
        %v4030 = vpop.f32.mrb[0].mxu0
        %v4031 = vadd.f32 0.0, %v4030
        %v4032 = vpop.f32.mrb[0].mxu0
        %4033 = vmatprep.mubr.bf16.mxu0 0
        %4034 = vmatmul.mubr.bf16.gmra.mrb[0].mxu0 %v994
        %v4035 = vpop.f32.mrb[0].mxu0
        %v4036 = vadd.f32 0.0, %v4035
        %v4037 = vpop.f32.mrb[0].mxu0
        %v4038 = vpop.f32.mrb[0].mxu0
        %v4039 = vadd.f32 0.0, %v4038
        %v4040 = vpop.f32.mrb[0].mxu0
        %4041 = vmatprep.mubr.bf16.mxu0 0
        %4042 = vmatmul.mubr.bf16.gmra.mrb[0].mxu0 %v997
        %v4043 = vpop.f32.mrb[0].mxu0
        %v4044 = vadd.f32 0.0, %v4043
        %v4045 = vpop.f32.mrb[0].mxu0
        %v4046 = vpop.f32.mrb[0].mxu0
        %v4047 = vadd.f32 0.0, %v4046
        %v4048 = vpop.f32.mrb[0].mxu0
        %4049 = vmatprep.mubr.bf16.mxu0 0
        %4050 = vmatmul.mubr.bf16.gmra.mrb[0].mxu0 %v1000
        %v4051 = vpop.f32.mrb[0].mxu0
        %v4052 = vadd.f32 0.0, %v4051
        %v4053 = vpop.f32.mrb[0].mxu0
        %v4054 = vpop.f32.mrb[0].mxu0
        %v4055 = vadd.f32 0.0, %v4054
        %v4056 = vpop.f32.mrb[0].mxu0
        %4057 = vdwg.mxu0
        %v4058 = vadd.f32 %v1934, %v4028
        %v4059 = vadd.f32 %v1935, %v4031
        %v4060 = vadd.f32 %v1936, %v4036
        %v4061 = vadd.f32 %v1937, %v4039
        %v4062 = vadd.f32 %v1938, %v4044
        %v4063 = vadd.f32 %v1939, %v4047
        %v4064 = vadd.f32 %v1940, %v4052
        %v4065 = vadd.f32 %v1941, %v4055
        %v4066 = vadd.f32 %v4058, %v2024
        %v4067 = vadd.f32 %v4059, %v2024
        %v4068 = vadd.f32 %v4060, %v2024
        %v4069 = vadd.f32 %v4061, %v2024
        %v4070 = vadd.f32 %v4062, %v2024
        %v4071 = vadd.f32 %v4063, %v2024
        %v4072 = vadd.f32 %v4064, %v2024
        %v4073 = vadd.f32 %v4065, %v2024
        %v4074 = vpack.c.bf16 %v4066, %v4066
        %v4075 = vpack.c.bf16 %v4067, %v4067
        %v4076 = vpack.c.bf16 %v4068, %v4068
        %v4077 = vpack.c.bf16 %v4069, %v4069
        %v4078 = vpack.c.bf16 %v4070, %v4070
        %v4079 = vpack.c.bf16 %v4071, %v4071
        %v4080 = vpack.c.bf16 %v4072, %v4072
        %v4081 = vpack.c.bf16 %v4073, %v4073
        %v4091 = vunpack.c.l.s4 1966171168
        %v4092 = vunpack.c.0.s8 %v4091
        %v4093 = vlaneseq
        %v4094 = vshrl.u32 %v4093, 7
        %v4095 = vsub.s32 %v4092, %v4094
        %v4096 = vrot.slane %v4074, %v4095
        %v4097 = vcombine.high %v4096, %v4096
        %v4099 = vunpack.c.l.s4 1966171168
        %v4100 = vunpack.c.0.s8 %v4099
        %v4101 = vlaneseq
        %v4102 = vshrl.u32 %v4101, 7
        %v4103 = vsub.s32 %v4100, %v4102
        %v4104 = vrot.slane %v4096, %v4103
        %v4106 = vunpack.c.l.s4 1966171168
        %v4107 = vunpack.c.0.s8 %v4106
        %v4108 = vlaneseq
        %v4109 = vshrl.u32 %v4108, 7
        %v4110 = vsub.s32 %v4107, %v4109
        %v4111 = vrot.slane %v4097, %v4110
        %v4112 = vcombine.high %v4104, %v4104
        %v4113 = vcombine.high %v4111, %v4111
        %v4115 = vunpack.c.l.s4 1966171168
        %v4116 = vunpack.c.0.s8 %v4115
        %v4117 = vlaneseq
        %v4118 = vshrl.u32 %v4117, 7
        %v4119 = vsub.s32 %v4116, %v4118
        %v4120 = vrot.slane %v4075, %v4119
        %v4121 = vcombine.high %v4120, %v4120
        %v4123 = vunpack.c.l.s4 1966171168
        %v4124 = vunpack.c.0.s8 %v4123
        %v4125 = vlaneseq
        %v4126 = vshrl.u32 %v4125, 7
        %v4127 = vsub.s32 %v4124, %v4126
        %v4128 = vrot.slane %v4120, %v4127
        %v4130 = vunpack.c.l.s4 1966171168
        %v4131 = vunpack.c.0.s8 %v4130
        %v4132 = vlaneseq
        %v4133 = vshrl.u32 %v4132, 7
        %v4134 = vsub.s32 %v4131, %v4133
        %v4135 = vrot.slane %v4121, %v4134
        %v4136 = vcombine.high %v4128, %v4128
        %v4137 = vcombine.high %v4135, %v4135
        %v4139 = vunpack.c.l.s4 1966171168
        %v4140 = vunpack.c.0.s8 %v4139
        %v4141 = vlaneseq
        %v4142 = vshrl.u32 %v4141, 7
        %v4143 = vsub.s32 %v4140, %v4142
        %v4144 = vrot.slane %v4076, %v4143
        %v4145 = vcombine.high %v4144, %v4144
        %v4147 = vunpack.c.l.s4 1966171168
        %v4148 = vunpack.c.0.s8 %v4147
        %v4149 = vlaneseq
        %v4150 = vshrl.u32 %v4149, 7
        %v4151 = vsub.s32 %v4148, %v4150
        %v4152 = vrot.slane %v4144, %v4151
        %v4154 = vunpack.c.l.s4 1966171168
        %v4155 = vunpack.c.0.s8 %v4154
        %v4156 = vlaneseq
        %v4157 = vshrl.u32 %v4156, 7
        %v4158 = vsub.s32 %v4155, %v4157
        %v4159 = vrot.slane %v4145, %v4158
        %v4160 = vcombine.high %v4152, %v4152
        %v4161 = vcombine.high %v4159, %v4159
        %v4163 = vunpack.c.l.s4 1966171168
        %v4164 = vunpack.c.0.s8 %v4163
        %v4165 = vlaneseq
        %v4166 = vshrl.u32 %v4165, 7
        %v4167 = vsub.s32 %v4164, %v4166
        %v4168 = vrot.slane %v4077, %v4167
        %v4169 = vcombine.high %v4168, %v4168
        %v4171 = vunpack.c.l.s4 1966171168
        %v4172 = vunpack.c.0.s8 %v4171
        %v4173 = vlaneseq
        %v4174 = vshrl.u32 %v4173, 7
        %v4175 = vsub.s32 %v4172, %v4174
        %v4176 = vrot.slane %v4168, %v4175
        %v4178 = vunpack.c.l.s4 1966171168
        %v4179 = vunpack.c.0.s8 %v4178
        %v4180 = vlaneseq
        %v4181 = vshrl.u32 %v4180, 7
        %v4182 = vsub.s32 %v4179, %v4181
        %v4183 = vrot.slane %v4169, %v4182
        %v4184 = vcombine.high %v4176, %v4176
        %v4185 = vcombine.high %v4183, %v4183
        %v4187 = vunpack.c.l.s4 1966171168
        %v4188 = vunpack.c.0.s8 %v4187
        %v4189 = vlaneseq
        %v4190 = vshrl.u32 %v4189, 7
        %v4191 = vsub.s32 %v4188, %v4190
        %v4192 = vrot.slane %v4078, %v4191
        %v4193 = vcombine.high %v4192, %v4192
        %v4195 = vunpack.c.l.s4 1966171168
        %v4196 = vunpack.c.0.s8 %v4195
        %v4197 = vlaneseq
        %v4198 = vshrl.u32 %v4197, 7
        %v4199 = vsub.s32 %v4196, %v4198
        %v4200 = vrot.slane %v4192, %v4199
        %v4202 = vunpack.c.l.s4 1966171168
        %v4203 = vunpack.c.0.s8 %v4202
        %v4204 = vlaneseq
        %v4205 = vshrl.u32 %v4204, 7
        %v4206 = vsub.s32 %v4203, %v4205
        %v4207 = vrot.slane %v4193, %v4206
        %v4208 = vcombine.high %v4200, %v4200
        %v4209 = vcombine.high %v4207, %v4207
        %v4211 = vunpack.c.l.s4 1966171168
        %v4212 = vunpack.c.0.s8 %v4211
        %v4213 = vlaneseq
        %v4214 = vshrl.u32 %v4213, 7
        %v4215 = vsub.s32 %v4212, %v4214
        %v4216 = vrot.slane %v4079, %v4215
        %v4217 = vcombine.high %v4216, %v4216
        %v4219 = vunpack.c.l.s4 1966171168
        %v4220 = vunpack.c.0.s8 %v4219
        %v4221 = vlaneseq
        %v4222 = vshrl.u32 %v4221, 7
        %v4223 = vsub.s32 %v4220, %v4222
        %v4224 = vrot.slane %v4216, %v4223
        %v4226 = vunpack.c.l.s4 1966171168
        %v4227 = vunpack.c.0.s8 %v4226
        %v4228 = vlaneseq
        %v4229 = vshrl.u32 %v4228, 7
        %v4230 = vsub.s32 %v4227, %v4229
        %v4231 = vrot.slane %v4217, %v4230
        %v4232 = vcombine.high %v4224, %v4224
        %v4233 = vcombine.high %v4231, %v4231
        %v4235 = vunpack.c.l.s4 1966171168
        %v4236 = vunpack.c.0.s8 %v4235
        %v4237 = vlaneseq
        %v4238 = vshrl.u32 %v4237, 7
        %v4239 = vsub.s32 %v4236, %v4238
        %v4240 = vrot.slane %v4080, %v4239
        %v4241 = vcombine.high %v4240, %v4240
        %v4243 = vunpack.c.l.s4 1966171168
        %v4244 = vunpack.c.0.s8 %v4243
        %v4245 = vlaneseq
        %v4246 = vshrl.u32 %v4245, 7
        %v4247 = vsub.s32 %v4244, %v4246
        %v4248 = vrot.slane %v4240, %v4247
        %v4250 = vunpack.c.l.s4 1966171168
        %v4251 = vunpack.c.0.s8 %v4250
        %v4252 = vlaneseq
        %v4253 = vshrl.u32 %v4252, 7
        %v4254 = vsub.s32 %v4251, %v4253
        %v4255 = vrot.slane %v4241, %v4254
        %v4256 = vcombine.high %v4248, %v4248
        %v4257 = vcombine.high %v4255, %v4255
        %v4259 = vunpack.c.l.s4 1966171168
        %v4260 = vunpack.c.0.s8 %v4259
        %v4261 = vlaneseq
        %v4262 = vshrl.u32 %v4261, 7
        %v4263 = vsub.s32 %v4260, %v4262
        %v4264 = vrot.slane %v4081, %v4263
        %v4265 = vcombine.high %v4264, %v4264
        %v4267 = vunpack.c.l.s4 1966171168
        %v4268 = vunpack.c.0.s8 %v4267
        %v4269 = vlaneseq
        %v4270 = vshrl.u32 %v4269, 7
        %v4271 = vsub.s32 %v4268, %v4270
        %v4272 = vrot.slane %v4264, %v4271
        %v4274 = vunpack.c.l.s4 1966171168
        %v4275 = vunpack.c.0.s8 %v4274
        %v4276 = vlaneseq
        %v4277 = vshrl.u32 %v4276, 7
        %v4278 = vsub.s32 %v4275, %v4277
        %v4279 = vrot.slane %v4265, %v4278
        %v4280 = vcombine.high %v4272, %v4272
        %v4281 = vcombine.high %v4279, %v4279
        %v4282 = vunpack.i.l.s16 %v4104
        %v4283 = vunpack.i.h.s16 %v4104
        %v4284 = vunpack.i.l.s16 %v4111
        %v4285 = vunpack.i.h.s16 %v4111
        %v4286 = vunpack.i.l.s16 %v4112
        %v4287 = vunpack.i.h.s16 %v4112
        %v4288 = vunpack.i.l.s16 %v4113
        %v4289 = vunpack.i.h.s16 %v4113
        %v4290 = vunpack.i.l.s16 %v4128
        %v4291 = vunpack.i.h.s16 %v4128
        %v4292 = vunpack.i.l.s16 %v4135
        %v4293 = vunpack.i.h.s16 %v4135
        %v4294 = vunpack.i.l.s16 %v4136
        %v4295 = vunpack.i.h.s16 %v4136
        %v4296 = vunpack.i.l.s16 %v4137
        %v4297 = vunpack.i.h.s16 %v4137
        %v4298 = vunpack.i.l.s16 %v4152
        %v4299 = vunpack.i.h.s16 %v4152
        %v4300 = vunpack.i.l.s16 %v4159
        %v4301 = vunpack.i.h.s16 %v4159
        %v4302 = vunpack.i.l.s16 %v4160
        %v4303 = vunpack.i.h.s16 %v4160
        %v4304 = vunpack.i.l.s16 %v4161
        %v4305 = vunpack.i.h.s16 %v4161
        %v4306 = vunpack.i.l.s16 %v4176
        %v4307 = vunpack.i.h.s16 %v4176
        %v4308 = vunpack.i.l.s16 %v4183
        %v4309 = vunpack.i.h.s16 %v4183
        %v4310 = vunpack.i.l.s16 %v4184
        %v4311 = vunpack.i.h.s16 %v4184
        %v4312 = vunpack.i.l.s16 %v4185
        %v4313 = vunpack.i.h.s16 %v4185
        %v4314 = vunpack.i.l.s16 %v4200
        %v4315 = vunpack.i.h.s16 %v4200
        %v4316 = vunpack.i.l.s16 %v4207
        %v4317 = vunpack.i.h.s16 %v4207
        %v4318 = vunpack.i.l.s16 %v4208
        %v4319 = vunpack.i.h.s16 %v4208
        %v4320 = vunpack.i.l.s16 %v4209
        %v4321 = vunpack.i.h.s16 %v4209
        %v4322 = vunpack.i.l.s16 %v4224
        %v4323 = vunpack.i.h.s16 %v4224
        %v4324 = vunpack.i.l.s16 %v4231
        %v4325 = vunpack.i.h.s16 %v4231
        %v4326 = vunpack.i.l.s16 %v4232
        %v4327 = vunpack.i.h.s16 %v4232
        %v4328 = vunpack.i.l.s16 %v4233
        %v4329 = vunpack.i.h.s16 %v4233
        %v4330 = vunpack.i.l.s16 %v4248
        %v4331 = vunpack.i.h.s16 %v4248
        %v4332 = vunpack.i.l.s16 %v4255
        %v4333 = vunpack.i.h.s16 %v4255
        %v4334 = vunpack.i.l.s16 %v4256
        %v4335 = vunpack.i.h.s16 %v4256
        %v4336 = vunpack.i.l.s16 %v4257
        %v4337 = vunpack.i.h.s16 %v4257
        %v4338 = vunpack.i.l.s16 %v4272
        %v4339 = vunpack.i.h.s16 %v4272
        %v4340 = vunpack.i.l.s16 %v4279
        %v4341 = vunpack.i.h.s16 %v4279
        %v4342 = vunpack.i.l.s16 %v4280
        %v4343 = vunpack.i.h.s16 %v4280
        %v4344 = vunpack.i.l.s16 %v4281
        %v4345 = vunpack.i.h.s16 %v4281
        %v4346 = vpack.i.b16 %v4282, %v4282
        %v4347 = vpack.i.b16 %v4283, %v4283
        %v4348 = vpack.i.b16 %v4284, %v4284
        %v4349 = vpack.i.b16 %v4285, %v4285
        %v4350 = vpack.i.b16 %v4286, %v4286
        %v4351 = vpack.i.b16 %v4287, %v4287
        %v4352 = vpack.i.b16 %v4288, %v4288
        %v4353 = vpack.i.b16 %v4289, %v4289
        %v4354 = vpack.i.b16 %v4290, %v4290
        %v4355 = vpack.i.b16 %v4291, %v4291
        %v4356 = vpack.i.b16 %v4292, %v4292
        %v4357 = vpack.i.b16 %v4293, %v4293
        %v4358 = vpack.i.b16 %v4294, %v4294
        %v4359 = vpack.i.b16 %v4295, %v4295
        %v4360 = vpack.i.b16 %v4296, %v4296
        %v4361 = vpack.i.b16 %v4297, %v4297
        %v4362 = vpack.i.b16 %v4298, %v4298
        %v4363 = vpack.i.b16 %v4299, %v4299
        %v4364 = vpack.i.b16 %v4300, %v4300
        %v4365 = vpack.i.b16 %v4301, %v4301
        %v4366 = vpack.i.b16 %v4302, %v4302
        %v4367 = vpack.i.b16 %v4303, %v4303
        %v4368 = vpack.i.b16 %v4304, %v4304
        %v4369 = vpack.i.b16 %v4305, %v4305
        %v4370 = vpack.i.b16 %v4306, %v4306
        %v4371 = vpack.i.b16 %v4307, %v4307
        %v4372 = vpack.i.b16 %v4308, %v4308
        %v4373 = vpack.i.b16 %v4309, %v4309
        %v4374 = vpack.i.b16 %v4310, %v4310
        %v4375 = vpack.i.b16 %v4311, %v4311
        %v4376 = vpack.i.b16 %v4312, %v4312
        %v4377 = vpack.i.b16 %v4313, %v4313
        %v4378 = vpack.i.b16 %v4314, %v4314
        %v4379 = vpack.i.b16 %v4315, %v4315
        %v4380 = vpack.i.b16 %v4316, %v4316
        %v4381 = vpack.i.b16 %v4317, %v4317
        %v4382 = vpack.i.b16 %v4318, %v4318
        %v4383 = vpack.i.b16 %v4319, %v4319
        %v4384 = vpack.i.b16 %v4320, %v4320
        %v4385 = vpack.i.b16 %v4321, %v4321
        %v4386 = vpack.i.b16 %v4322, %v4322
        %v4387 = vpack.i.b16 %v4323, %v4323
        %v4388 = vpack.i.b16 %v4324, %v4324
        %v4389 = vpack.i.b16 %v4325, %v4325
        %v4390 = vpack.i.b16 %v4326, %v4326
        %v4391 = vpack.i.b16 %v4327, %v4327
        %v4392 = vpack.i.b16 %v4328, %v4328
        %v4393 = vpack.i.b16 %v4329, %v4329
        %v4394 = vpack.i.b16 %v4330, %v4330
        %v4395 = vpack.i.b16 %v4331, %v4331
        %v4396 = vpack.i.b16 %v4332, %v4332
        %v4397 = vpack.i.b16 %v4333, %v4333
        %v4398 = vpack.i.b16 %v4334, %v4334
        %v4399 = vpack.i.b16 %v4335, %v4335
        %v4400 = vpack.i.b16 %v4336, %v4336
        %v4401 = vpack.i.b16 %v4337, %v4337
        %v4402 = vpack.i.b16 %v4338, %v4338
        %v4403 = vpack.i.b16 %v4339, %v4339
        %v4404 = vpack.i.b16 %v4340, %v4340
        %v4405 = vpack.i.b16 %v4341, %v4341
        %v4406 = vpack.i.b16 %v4342, %v4342
        %v4407 = vpack.i.b16 %v4343, %v4343
        %v4408 = vpack.i.b16 %v4344, %v4344
        %v4409 = vpack.i.b16 %v4345, %v4345
        %v4474 = vld [vmem:[%s3795] sm:$0x1]
        %v4475 = vsel %vm3116, %v4346, %v4474
        %4476 = vst [vmem:[%s3795] sm:$0x1] %v4475
        %v4477 = vld [vmem:[%s3795 + $0x1] sm:$0x1]
        %v4478 = vsel %vm3116, %v4347, %v4477
        %4479 = vst [vmem:[%s3795 + $0x1] sm:$0x1] %v4478
        %v4480 = vld [vmem:[%s3795 + $0x2] sm:$0x1]
        %v4481 = vsel %vm3116, %v4348, %v4480
        %4482 = vst [vmem:[%s3795 + $0x2] sm:$0x1] %v4481
        %v4483 = vld [vmem:[%s3795 + $0x3] sm:$0x1]
        %v4484 = vsel %vm3116, %v4349, %v4483
        %4485 = vst [vmem:[%s3795 + $0x3] sm:$0x1] %v4484
        %v4486 = vld [vmem:[%s3795 + $0x4] sm:$0x1]
        %v4487 = vsel %vm3116, %v4350, %v4486
        %4488 = vst [vmem:[%s3795 + $0x4] sm:$0x1] %v4487
        %v4489 = vld [vmem:[%s3795 + $0x5] sm:$0x1]
        %v4490 = vsel %vm3116, %v4351, %v4489
        %4491 = vst [vmem:[%s3795 + $0x5] sm:$0x1] %v4490
        %v4492 = vld [vmem:[%s3795 + $0x6] sm:$0x1]
        %v4493 = vsel %vm3116, %v4352, %v4492
        %4494 = vst [vmem:[%s3795 + $0x6] sm:$0x1] %v4493
        %v4495 = vld [vmem:[%s3795 + $0x7] sm:$0x1]
        %v4496 = vsel %vm3116, %v4353, %v4495
        %4497 = vst [vmem:[%s3795 + $0x7] sm:$0x1] %v4496
        %v4498 = vld [vmem:[%s3795 + $0x10] sm:$0x1]
        %v4499 = vsel %vm3116, %v4354, %v4498
        %4500 = vst [vmem:[%s3795 + $0x10] sm:$0x1] %v4499
        %v4501 = vld [vmem:[%s3795 + $0x11] sm:$0x1]
        %v4502 = vsel %vm3116, %v4355, %v4501
        %4503 = vst [vmem:[%s3795 + $0x11] sm:$0x1] %v4502
        %v4504 = vld [vmem:[%s3795 + $0x12] sm:$0x1]
        %v4505 = vsel %vm3116, %v4356, %v4504
        %4506 = vst [vmem:[%s3795 + $0x12] sm:$0x1] %v4505
        %v4507 = vld [vmem:[%s3795 + $0x13] sm:$0x1]
        %v4508 = vsel %vm3116, %v4357, %v4507
        %4509 = vst [vmem:[%s3795 + $0x13] sm:$0x1] %v4508
        %v4510 = vld [vmem:[%s3795 + $0x14] sm:$0x1]
        %v4511 = vsel %vm3116, %v4358, %v4510
        %4512 = vst [vmem:[%s3795 + $0x14] sm:$0x1] %v4511
        %v4513 = vld [vmem:[%s3795 + $0x15] sm:$0x1]
        %v4514 = vsel %vm3116, %v4359, %v4513
        %4515 = vst [vmem:[%s3795 + $0x15] sm:$0x1] %v4514
        %v4516 = vld [vmem:[%s3795 + $0x16] sm:$0x1]
        %v4517 = vsel %vm3116, %v4360, %v4516
        %4518 = vst [vmem:[%s3795 + $0x16] sm:$0x1] %v4517
        %v4519 = vld [vmem:[%s3795 + $0x17] sm:$0x1]
        %v4520 = vsel %vm3116, %v4361, %v4519
        %4521 = vst [vmem:[%s3795 + $0x17] sm:$0x1] %v4520
        %v4522 = vld [vmem:[%s3795 + $0x20] sm:$0x1]
        %v4523 = vsel %vm3116, %v4362, %v4522
        %4524 = vst [vmem:[%s3795 + $0x20] sm:$0x1] %v4523
        %v4525 = vld [vmem:[%s3795 + $0x21] sm:$0x1]
        %v4526 = vsel %vm3116, %v4363, %v4525
        %4527 = vst [vmem:[%s3795 + $0x21] sm:$0x1] %v4526
        %v4528 = vld [vmem:[%s3795 + $0x22] sm:$0x1]
        %v4529 = vsel %vm3116, %v4364, %v4528
        %4530 = vst [vmem:[%s3795 + $0x22] sm:$0x1] %v4529
        %v4531 = vld [vmem:[%s3795 + $0x23] sm:$0x1]
        %v4532 = vsel %vm3116, %v4365, %v4531
        %4533 = vst [vmem:[%s3795 + $0x23] sm:$0x1] %v4532
        %v4534 = vld [vmem:[%s3795 + $0x24] sm:$0x1]
        %v4535 = vsel %vm3116, %v4366, %v4534
        %4536 = vst [vmem:[%s3795 + $0x24] sm:$0x1] %v4535
        %v4537 = vld [vmem:[%s3795 + $0x25] sm:$0x1]
        %v4538 = vsel %vm3116, %v4367, %v4537
        %4539 = vst [vmem:[%s3795 + $0x25] sm:$0x1] %v4538
        %v4540 = vld [vmem:[%s3795 + $0x26] sm:$0x1]
        %v4541 = vsel %vm3116, %v4368, %v4540
        %4542 = vst [vmem:[%s3795 + $0x26] sm:$0x1] %v4541
        %v4543 = vld [vmem:[%s3795 + $0x27] sm:$0x1]
        %v4544 = vsel %vm3116, %v4369, %v4543
        %4545 = vst [vmem:[%s3795 + $0x27] sm:$0x1] %v4544
        %v4546 = vld [vmem:[%s3795 + $0x30] sm:$0x1]
        %v4547 = vsel %vm3116, %v4370, %v4546
        %4548 = vst [vmem:[%s3795 + $0x30] sm:$0x1] %v4547
        %v4549 = vld [vmem:[%s3795 + $0x31] sm:$0x1]
        %v4550 = vsel %vm3116, %v4371, %v4549
        %4551 = vst [vmem:[%s3795 + $0x31] sm:$0x1] %v4550
        %v4552 = vld [vmem:[%s3795 + $0x32] sm:$0x1]
        %v4553 = vsel %vm3116, %v4372, %v4552
        %4554 = vst [vmem:[%s3795 + $0x32] sm:$0x1] %v4553
        %v4555 = vld [vmem:[%s3795 + $0x33] sm:$0x1]
        %v4556 = vsel %vm3116, %v4373, %v4555
        %4557 = vst [vmem:[%s3795 + $0x33] sm:$0x1] %v4556
        %v4558 = vld [vmem:[%s3795 + $0x34] sm:$0x1]
        %v4559 = vsel %vm3116, %v4374, %v4558
        %4560 = vst [vmem:[%s3795 + $0x34] sm:$0x1] %v4559
        %v4561 = vld [vmem:[%s3795 + $0x35] sm:$0x1]
        %v4562 = vsel %vm3116, %v4375, %v4561
        %4563 = vst [vmem:[%s3795 + $0x35] sm:$0x1] %v4562
        %v4564 = vld [vmem:[%s3795 + $0x36] sm:$0x1]
        %v4565 = vsel %vm3116, %v4376, %v4564
        %4566 = vst [vmem:[%s3795 + $0x36] sm:$0x1] %v4565
        %v4567 = vld [vmem:[%s3795 + $0x37] sm:$0x1]
        %v4568 = vsel %vm3116, %v4377, %v4567
        %4569 = vst [vmem:[%s3795 + $0x37] sm:$0x1] %v4568
        %v4570 = vld [vmem:[%s3795 + $0x40] sm:$0x1]
        %v4571 = vsel %vm3116, %v4378, %v4570
        %4572 = vst [vmem:[%s3795 + $0x40] sm:$0x1] %v4571
        %v4573 = vld [vmem:[%s3795 + $0x41] sm:$0x1]
        %v4574 = vsel %vm3116, %v4379, %v4573
        %4575 = vst [vmem:[%s3795 + $0x41] sm:$0x1] %v4574
        %v4576 = vld [vmem:[%s3795 + $0x42] sm:$0x1]
        %v4577 = vsel %vm3116, %v4380, %v4576
        %4578 = vst [vmem:[%s3795 + $0x42] sm:$0x1] %v4577
        %v4579 = vld [vmem:[%s3795 + $0x43] sm:$0x1]
        %v4580 = vsel %vm3116, %v4381, %v4579
        %4581 = vst [vmem:[%s3795 + $0x43] sm:$0x1] %v4580
        %v4582 = vld [vmem:[%s3795 + $0x44] sm:$0x1]
        %v4583 = vsel %vm3116, %v4382, %v4582
        %4584 = vst [vmem:[%s3795 + $0x44] sm:$0x1] %v4583
        %v4585 = vld [vmem:[%s3795 + $0x45] sm:$0x1]
        %v4586 = vsel %vm3116, %v4383, %v4585
        %4587 = vst [vmem:[%s3795 + $0x45] sm:$0x1] %v4586
        %v4588 = vld [vmem:[%s3795 + $0x46] sm:$0x1]
        %v4589 = vsel %vm3116, %v4384, %v4588
        %4590 = vst [vmem:[%s3795 + $0x46] sm:$0x1] %v4589
        %v4591 = vld [vmem:[%s3795 + $0x47] sm:$0x1]
        %v4592 = vsel %vm3116, %v4385, %v4591
        %4593 = vst [vmem:[%s3795 + $0x47] sm:$0x1] %v4592
        %v4594 = vld [vmem:[%s3795 + $0x50] sm:$0x1]
        %v4595 = vsel %vm3116, %v4386, %v4594
        %4596 = vst [vmem:[%s3795 + $0x50] sm:$0x1] %v4595
        %v4597 = vld [vmem:[%s3795 + $0x51] sm:$0x1]
        %v4598 = vsel %vm3116, %v4387, %v4597
        %4599 = vst [vmem:[%s3795 + $0x51] sm:$0x1] %v4598
        %v4600 = vld [vmem:[%s3795 + $0x52] sm:$0x1]
        %v4601 = vsel %vm3116, %v4388, %v4600
        %4602 = vst [vmem:[%s3795 + $0x52] sm:$0x1] %v4601
        %v4603 = vld [vmem:[%s3795 + $0x53] sm:$0x1]
        %v4604 = vsel %vm3116, %v4389, %v4603
        %4605 = vst [vmem:[%s3795 + $0x53] sm:$0x1] %v4604
        %v4606 = vld [vmem:[%s3795 + $0x54] sm:$0x1]
        %v4607 = vsel %vm3116, %v4390, %v4606
        %4608 = vst [vmem:[%s3795 + $0x54] sm:$0x1] %v4607
        %v4609 = vld [vmem:[%s3795 + $0x55] sm:$0x1]
        %v4610 = vsel %vm3116, %v4391, %v4609
        %4611 = vst [vmem:[%s3795 + $0x55] sm:$0x1] %v4610
        %v4612 = vld [vmem:[%s3795 + $0x56] sm:$0x1]
        %v4613 = vsel %vm3116, %v4392, %v4612
        %4614 = vst [vmem:[%s3795 + $0x56] sm:$0x1] %v4613
        %v4615 = vld [vmem:[%s3795 + $0x57] sm:$0x1]
        %v4616 = vsel %vm3116, %v4393, %v4615
        %4617 = vst [vmem:[%s3795 + $0x57] sm:$0x1] %v4616
        %v4618 = vld [vmem:[%s3795 + $0x60] sm:$0x1]
        %v4619 = vsel %vm3116, %v4394, %v4618
        %4620 = vst [vmem:[%s3795 + $0x60] sm:$0x1] %v4619
        %v4621 = vld [vmem:[%s3795 + $0x61] sm:$0x1]
        %v4622 = vsel %vm3116, %v4395, %v4621
        %4623 = vst [vmem:[%s3795 + $0x61] sm:$0x1] %v4622
        %v4624 = vld [vmem:[%s3795 + $0x62] sm:$0x1]
        %v4625 = vsel %vm3116, %v4396, %v4624
        %4626 = vst [vmem:[%s3795 + $0x62] sm:$0x1] %v4625
        %v4627 = vld [vmem:[%s3795 + $0x63] sm:$0x1]
        %v4628 = vsel %vm3116, %v4397, %v4627
        %4629 = vst [vmem:[%s3795 + $0x63] sm:$0x1] %v4628
        %v4630 = vld [vmem:[%s3795 + $0x64] sm:$0x1]
        %v4631 = vsel %vm3116, %v4398, %v4630
        %4632 = vst [vmem:[%s3795 + $0x64] sm:$0x1] %v4631
        %v4633 = vld [vmem:[%s3795 + $0x65] sm:$0x1]
        %v4634 = vsel %vm3116, %v4399, %v4633
        %4635 = vst [vmem:[%s3795 + $0x65] sm:$0x1] %v4634
        %v4636 = vld [vmem:[%s3795 + $0x66] sm:$0x1]
        %v4637 = vsel %vm3116, %v4400, %v4636
        %4638 = vst [vmem:[%s3795 + $0x66] sm:$0x1] %v4637
        %v4639 = vld [vmem:[%s3795 + $0x67] sm:$0x1]
        %v4640 = vsel %vm3116, %v4401, %v4639
        %4641 = vst [vmem:[%s3795 + $0x67] sm:$0x1] %v4640
        %v4642 = vld [vmem:[%s3795 + $0x70] sm:$0x1]
        %v4643 = vsel %vm3116, %v4402, %v4642
        %4644 = vst [vmem:[%s3795 + $0x70] sm:$0x1] %v4643
        %v4645 = vld [vmem:[%s3795 + $0x71] sm:$0x1]
        %v4646 = vsel %vm3116, %v4403, %v4645
        %4647 = vst [vmem:[%s3795 + $0x71] sm:$0x1] %v4646
        %v4648 = vld [vmem:[%s3795 + $0x72] sm:$0x1]
        %v4649 = vsel %vm3116, %v4404, %v4648
        %4650 = vst [vmem:[%s3795 + $0x72] sm:$0x1] %v4649
        %v4651 = vld [vmem:[%s3795 + $0x73] sm:$0x1]
        %v4652 = vsel %vm3116, %v4405, %v4651
        %4653 = vst [vmem:[%s3795 + $0x73] sm:$0x1] %v4652
        %v4654 = vld [vmem:[%s3795 + $0x74] sm:$0x1]
        %v4655 = vsel %vm3116, %v4406, %v4654
        %4656 = vst [vmem:[%s3795 + $0x74] sm:$0x1] %v4655
        %v4657 = vld [vmem:[%s3795 + $0x75] sm:$0x1]
        %v4658 = vsel %vm3116, %v4407, %v4657
        %4659 = vst [vmem:[%s3795 + $0x75] sm:$0x1] %v4658
        %v4660 = vld [vmem:[%s3795 + $0x76] sm:$0x1]
        %v4661 = vsel %vm3116, %v4408, %v4660
        %4662 = vst [vmem:[%s3795 + $0x76] sm:$0x1] %v4661
        %v4663 = vld [vmem:[%s3795 + $0x77] sm:$0x1]
        %v4664 = vsel %vm3116, %v4409, %v4663
        %4665 = vst [vmem:[%s3795 + $0x77] sm:$0x1] %v4664
        %s4666 = sand.u32 %s188, 1
        %s4667 = scalar_lea.sflag [#allocation3], %s4666
        %s4668 = sand.u32 %s188, 1
        %s4669 = smul.addr %s4668, 128
        %s4670 = scalar_lea.vmem [#allocation2], %s4669
        // Predicated region
        $region41: #{tpu_custom_call.1} parent=39 // pred_check
          %p4671 = pneg %p198
        $region42: #{tpu_custom_call.1} parent=39 // pred_check_branch
          %4673 = sbr.rel (%p4671) target = $region44
        $region43: #{tpu_custom_call.1} parent=39 // pred_region
          %s4674 = smul.u32 8, %s25
          %s4676 = ssub.s32 2048, 2048
          %4677 = vsyncadd %s4667, %s4676
          %s4678 = smul.addr %s4674, 16
          %s4679 = sadd.s32 %s26, %s4678
          %s4680 = smul.addr %s24, 128
          %s4681 = sadd.s32 %s4679, %s4680
          %s4682 = smul.addr %s4681, 16
          %s4683 = scalar_lea.hbm %s5, %s4682
          %s4684 = sshll.u32 %s4670, 4
          %s4685 = int_to_ptr.vmem [resolvable:$true] %s4684
          %4690 = dma.vmem_to_hbm [thread:$0]  %s4685, 2048, %s4683, %s4667, 16, 16, 1
        $region44: #{tpu_custom_call.1} parent=39 // pred_fallthru
          _
      $region40: #{tpu_custom_call.1} parent=5 // pred_fallthru
        _
      %p4691 = scmp.le.s32.totalorder 2, %s14
      // Predicated region
      $region45: #{tpu_custom_call.1} parent=5 // pred_check
        %p4692 = pneg %p4691
      $region46: #{tpu_custom_call.1} parent=5 // pred_check_branch
        %4694 = sbr.rel (%p4692) target = $region48
      $region47: #{tpu_custom_call.1} parent=5 // pred_region
        %s4695 = ssub.s32 %s14, 2
        // Predicated region
        $region49: #{tpu_custom_call.1} parent=47 // pred_check
          %p4696 = pneg %p204
        $region50: #{tpu_custom_call.1} parent=47 // pred_check_branch
          %4698 = sbr.rel (%p4696) target = $region52
        $region51: #{tpu_custom_call.1} parent=47 // pred_region
          %s4699 = sand.u32 %s189, 1
          %s4700 = scalar_lea.sflag [#allocation3], %s4699
          %s4701 = sand.u32 %s189, 1
          %s4702 = smul.addr %s4701, 128
          %s4703 = scalar_lea.vmem [#allocation2], %s4702
          %4704 = dma.done %s4700, 2048
        $region52: #{tpu_custom_call.1} parent=47 // pred_fallthru
          _
      $region48: #{tpu_custom_call.1} parent=5 // pred_fallthru
        _
    $region6: #{tpu_custom_call.1} parent=1 // loop_footer
      %s18 = sadd.s32 1, %s14
    $region7: #{tpu_custom_call.1} parent=1 // loop_footer_branch
      %13 = sbr.rel target = $region3
    $region8: #{tpu_custom_call.1} parent=1 // loop_exit
      _
    %4705 = vsyncpa [#allocation3], 1
    %s4706 = scalar_lea.sflag [#allocation3], 1
    %4707 = vsyncpa %s4706, 1

</llo_original>
